<compile_context>
chip_gen: v7x
topology: tpu7x:2x2x1
jax: 0.10.0
libtpu: 0.0.40
codegen_flags: <defaults>
</compile_context>

<pallas_src>
import jax
import jax.numpy as jnp
from jax import lax
from jax.experimental import pallas as pl
from jax.experimental.pallas import tpu as pltpu

HIDDEN = 64
INPUT = 256


def _decoder_kernel(x_ref, wih_ref, whh_ref, bih_ref, bhh_ref,
                    w1_ref, b1_ref, w2_ref, b2_ref, out_ref):
    B, T, D = x_ref.shape
    H = whh_ref.shape[0]
    TH = T * H

    # ---- hoisted input projection: one GEMM for all timesteps -------------
    x_flat = x_ref[...].reshape(B * T, D)                        # batch-major rows
    gi_all = jnp.dot(x_flat, wih_ref[...],
                     preferred_element_type=jnp.float32) + bih_ref[...]
    gi_all = gi_all.reshape(B, T, 3 * H)

    whh = whh_ref[...]
    b_hh = jnp.broadcast_to(bhh_ref[...], (B, 3 * H))            # hoisted broadcast

    # ---- sequential GRU recurrence (PyTorch gate order [r, z, n]) ---------
    # MLP layer 1 is accumulated inside the loop:
    #   hid = b1 + sum_t h_t @ W1[t*H:(t+1)*H, :]
    h = jnp.zeros((B, H), jnp.float32)
    hid = jnp.broadcast_to(b1_ref[...], (B, TH)).astype(jnp.float32)
    for t in range(T):                                           # fully unrolled, static idx
        gi = gi_all[:, t, :]                                     # (B, 3H), static slice
        gh = jnp.dot(h, whh, preferred_element_type=jnp.float32) + b_hh
        r = jax.nn.sigmoid(gi[:, :H] + gh[:, :H])
        z = jax.nn.sigmoid(gi[:, H:2 * H] + gh[:, H:2 * H])
        n = jnp.tanh(gi[:, 2 * H:] + r * gh[:, 2 * H:])
        h = (1.0 - z) * n + z * h
        # off-critical-path MXU work: layer-1 contribution of this timestep
        hid = hid + jnp.dot(h, w1_ref[t * H:(t + 1) * H, :],
                            preferred_element_type=jnp.float32)

    # ---- fused ReLU + second MLP GEMM --------------------------------------
    hid = jnp.maximum(hid, 0.0)                                  # ReLU
    out = jnp.dot(hid, w2_ref[...],
                  preferred_element_type=jnp.float32) + b2_ref[...]
    out_ref[...] = out.astype(out_ref.dtype)


def decoder_forward_pallas(h_in, w_ih_t, w_hh_t, b_ih, b_hh,
                           w1_t, b1, w2_t, b2, pred_steps, num_nodes):
    """h_in: (B, T, 256) float32, batch_first. Weights pre-transposed:
    w_ih_t (256, 3*64), w_hh_t (64, 3*64), w1_t (64*T, 64*T),
    w2_t (64*T, pred_steps*num_nodes*5); biases shaped (1, n).
    Returns (B, pred_steps, num_nodes, 5)."""
    B, T, _ = h_in.shape
    p_out = pred_steps * num_nodes * 5
    vmem = pl.BlockSpec(memory_space=pltpu.MemorySpace.VMEM)

    out = pl.pallas_call(
        _decoder_kernel,
        out_shape=jax.ShapeDtypeStruct((B, p_out), jnp.float32),
        in_specs=[vmem] * 9,
        out_specs=vmem,
    )(h_in, w_ih_t, w_hh_t, b_ih, b_hh, w1_t, b1, w2_t, b2)

    return out.reshape(B, pred_steps, num_nodes, 5)


def decoder_forward_ref(h_in, w_ih_t, w_hh_t, b_ih, b_hh,
                        w1_t, b1, w2_t, b2, pred_steps, num_nodes):
    """Pure-JAX reference (PyTorch Decoder semantics) for correctness check."""
    B, T, _ = h_in.shape
    H = w_hh_t.shape[0]
    x_tm = jnp.transpose(h_in, (1, 0, 2))                        # (T, B, D)

    def step(h_prev, x_t):
        gi = x_t @ w_ih_t + b_ih
        gh = h_prev @ w_hh_t + b_hh
        r = jax.nn.sigmoid(gi[:, :H] + gh[:, :H])
        z = jax.nn.sigmoid(gi[:, H:2 * H] + gh[:, H:2 * H])
        n = jnp.tanh(gi[:, 2 * H:] + r * gh[:, 2 * H:])
        h_new = (1.0 - z) * n + z * h_prev
        return h_new, h_new

    h0 = jnp.zeros((B, H), jnp.float32)
    _, hs = lax.scan(step, h0, x_tm)                             # (T, B, H)
    x_hat = jnp.transpose(hs, (1, 0, 2)).reshape(B, T * H)
    hid = jnp.maximum(x_hat @ w1_t + b1, 0.0)
    out = hid @ w2_t + b2
    return out.reshape(B, pred_steps, num_nodes, 5)


if __name__ == "__main__":
    # Small deterministic config consistent with the module:
    # GRU input=256, hidden=64; tau (=T) = 8, pred_steps = 4, num_nodes = 8.
    tau, pred_steps, num_nodes = 8, 4, 8
    B, T, D, H = 2, tau, INPUT, HIDDEN
    TH = H * tau
    p_out = pred_steps * num_nodes * 5

    key = jax.random.PRNGKey(0)
    ks = jax.random.split(key, 9)
    gru_scale = 1.0 / jnp.sqrt(jnp.float32(H))       # PyTorch GRU init range
    mlp_scale = 1.0 / jnp.sqrt(jnp.float32(TH))      # PyTorch Linear init range

    h_in = jax.random.normal(ks[0], (B, T, D), dtype=jnp.float32)
    # PyTorch stores weight_ih_l0 as (3H, D); we keep the transposed layout.
    w_ih_t = jax.random.uniform(ks[1], (D, 3 * H), jnp.float32, -gru_scale, gru_scale)
    w_hh_t = jax.random.uniform(ks[2], (H, 3 * H), jnp.float32, -gru_scale, gru_scale)
    b_ih = jax.random.uniform(ks[3], (1, 3 * H), jnp.float32, -gru_scale, gru_scale)
    b_hh = jax.random.uniform(ks[4], (1, 3 * H), jnp.float32, -gru_scale, gru_scale)
    w1_t = jax.random.uniform(ks[5], (TH, TH), jnp.float32, -mlp_scale, mlp_scale)
    b1 = jax.random.uniform(ks[6], (1, TH), jnp.float32, -mlp_scale, mlp_scale)
    w2_t = jax.random.uniform(ks[7], (TH, p_out), jnp.float32, -mlp_scale, mlp_scale)
    b2 = jax.random.uniform(ks[8], (1, p_out), jnp.float32, -mlp_scale, mlp_scale)

    out_pallas = decoder_forward_pallas(h_in, w_ih_t, w_hh_t, b_ih, b_hh,
                                        w1_t, b1, w2_t, b2, pred_steps, num_nodes)
    jax.block_until_ready(out_pallas)

    out_ref = decoder_forward_ref(h_in, w_ih_t, w_hh_t, b_ih, b_hh,
                                  w1_t, b1, w2_t, b2, pred_steps, num_nodes)
    jax.block_until_ready(out_ref)

    assert out_pallas.shape == (B, pred_steps, num_nodes, 5)
    assert jnp.allclose(out_pallas, out_ref, atol=1e-4, rtol=1e-4), (
        float(jnp.max(jnp.abs(out_pallas - out_ref))))

    print("KERNEL_OK")
</pallas_src>

<mosaic_0001>
module attributes {stable_mosaic.version = 11 : i64} {
  func.func @_decoder_kernel(%arg0: memref<2x8x256xf32, #tpu.memory_space<vmem>>, %arg1: memref<256x192xf32, #tpu.memory_space<vmem>>, %arg2: memref<64x192xf32, #tpu.memory_space<vmem>>, %arg3: memref<1x192xf32, #tpu.memory_space<vmem>>, %arg4: memref<1x192xf32, #tpu.memory_space<vmem>>, %arg5: memref<512x512xf32, #tpu.memory_space<vmem>>, %arg6: memref<1x512xf32, #tpu.memory_space<vmem>>, %arg7: memref<512x160xf32, #tpu.memory_space<vmem>>, %arg8: memref<1x160xf32, #tpu.memory_space<vmem>>, %arg9: memref<2x160xf32, #tpu.memory_space<vmem>>) attributes {dimension_semantics = [], scalar_prefetch = 0 : i64, scratch_operands = 0 : i64, tpu.core_type = #tpu.core_type<tc>} {
    %c0 = arith.constant 0 : index
    %c0_0 = arith.constant 0 : index
    %c0_1 = arith.constant 0 : index
    %0 = vector.load %arg0[%c0, %c0_0, %c0_1] : memref<2x8x256xf32, #tpu.memory_space<vmem>>, vector<2x8x256xf32>
    %1 = vector.shape_cast %0 : vector<2x8x256xf32> to vector<16x256xf32>
    %c0_2 = arith.constant 0 : index
    %c0_3 = arith.constant 0 : index
    %2 = vector.load %arg1[%c0_2, %c0_3] : memref<256x192xf32, #tpu.memory_space<vmem>>, vector<256x192xf32>
    %cst = arith.constant dense<0.000000e+00> : vector<16x192xf32>
    %3 = tpu.matmul %1, %2, %cst {dimension_numbers = #tpu.dot_dimension_numbers<[1], [0], [0], [1], [0, 0, 1, 1], [], []>} : vector<16x256xf32>, vector<256x192xf32>, vector<16x192xf32> -> vector<16x192xf32>
    %c0_4 = arith.constant 0 : index
    %c0_5 = arith.constant 0 : index
    %4 = vector.load %arg3[%c0_4, %c0_5] : memref<1x192xf32, #tpu.memory_space<vmem>>, vector<1x192xf32>
    %5 = vector.broadcast %4 : vector<1x192xf32> to vector<16x192xf32>
    %6 = arith.addf %3, %5 : vector<16x192xf32>
    %7 = vector.shape_cast %6 : vector<16x192xf32> to vector<2x8x192xf32>
    %c0_6 = arith.constant 0 : index
    %c0_7 = arith.constant 0 : index
    %8 = vector.load %arg2[%c0_6, %c0_7] : memref<64x192xf32, #tpu.memory_space<vmem>>, vector<64x192xf32>
    %c0_8 = arith.constant 0 : index
    %c0_9 = arith.constant 0 : index
    %9 = vector.load %arg4[%c0_8, %c0_9] : memref<1x192xf32, #tpu.memory_space<vmem>>, vector<1x192xf32>
    %10 = vector.shape_cast %9 : vector<1x192xf32> to vector<1x192xf32>
    %11 = vector.broadcast %10 : vector<1x192xf32> to vector<2x192xf32>
    %cst_10 = arith.constant 0.000000e+00 : f32
    %12 = vector.broadcast %cst_10 : f32 to vector<2x64xf32>
    %c0_11 = arith.constant 0 : index
    %c0_12 = arith.constant 0 : index
    %13 = vector.load %arg6[%c0_11, %c0_12] : memref<1x512xf32, #tpu.memory_space<vmem>>, vector<1x512xf32>
    %14 = vector.shape_cast %13 : vector<1x512xf32> to vector<1x512xf32>
    %15 = vector.broadcast %14 : vector<1x512xf32> to vector<2x512xf32>
    %16 = vector.extract_strided_slice %7 {offsets = [0, 0, 0], sizes = [2, 1, 192], strides = [1, 1, 1]} : vector<2x8x192xf32> to vector<2x1x192xf32>
    %17 = vector.shape_cast %16 : vector<2x1x192xf32> to vector<2x192xf32>
    %cst_13 = arith.constant dense<0.000000e+00> : vector<2x192xf32>
    %18 = tpu.matmul %12, %8, %cst_13 {dimension_numbers = #tpu.dot_dimension_numbers<[1], [0], [0], [1], [0, 0, 1, 1], [], []>} : vector<2x64xf32>, vector<64x192xf32>, vector<2x192xf32> -> vector<2x192xf32>
    %19 = arith.addf %18, %11 : vector<2x192xf32>
    %20 = vector.extract_strided_slice %17 {offsets = [0, 0], sizes = [2, 64], strides = [1, 1]} : vector<2x192xf32> to vector<2x64xf32>
    %21 = vector.extract_strided_slice %19 {offsets = [0, 0], sizes = [2, 64], strides = [1, 1]} : vector<2x192xf32> to vector<2x64xf32>
    %22 = arith.addf %20, %21 : vector<2x64xf32>
    %23 = arith.negf %22 : vector<2x64xf32>
    %24 = math.exp %23 : vector<2x64xf32>
    %cst_14 = arith.constant 1.000000e+00 : f32
    %25 = vector.broadcast %cst_14 : f32 to vector<2x64xf32>
    %26 = arith.addf %25, %24 : vector<2x64xf32>
    %27 = arith.divf %25, %26 : vector<2x64xf32>
    %28 = vector.extract_strided_slice %17 {offsets = [0, 64], sizes = [2, 64], strides = [1, 1]} : vector<2x192xf32> to vector<2x64xf32>
    %29 = vector.extract_strided_slice %19 {offsets = [0, 64], sizes = [2, 64], strides = [1, 1]} : vector<2x192xf32> to vector<2x64xf32>
    %30 = arith.addf %28, %29 : vector<2x64xf32>
    %31 = arith.negf %30 : vector<2x64xf32>
    %32 = math.exp %31 : vector<2x64xf32>
    %cst_15 = arith.constant 1.000000e+00 : f32
    %33 = vector.broadcast %cst_15 : f32 to vector<2x64xf32>
    %34 = arith.addf %33, %32 : vector<2x64xf32>
    %35 = arith.divf %33, %34 : vector<2x64xf32>
    %36 = vector.extract_strided_slice %17 {offsets = [0, 128], sizes = [2, 64], strides = [1, 1]} : vector<2x192xf32> to vector<2x64xf32>
    %37 = vector.extract_strided_slice %19 {offsets = [0, 128], sizes = [2, 64], strides = [1, 1]} : vector<2x192xf32> to vector<2x64xf32>
    %38 = arith.mulf %27, %37 : vector<2x64xf32>
    %39 = arith.addf %36, %38 : vector<2x64xf32>
    %40 = math.tanh %39 : vector<2x64xf32>
    %cst_16 = arith.constant 1.000000e+00 : f32
    %41 = vector.broadcast %cst_16 : f32 to vector<2x64xf32>
    %42 = arith.subf %41, %35 : vector<2x64xf32>
    %43 = arith.mulf %42, %40 : vector<2x64xf32>
    %44 = arith.mulf %35, %12 : vector<2x64xf32>
    %45 = arith.addf %43, %44 : vector<2x64xf32>
    %c0_17 = arith.constant 0 : index
    %c0_18 = arith.constant 0 : index
    %46 = vector.load %arg5[%c0_17, %c0_18] : memref<512x512xf32, #tpu.memory_space<vmem>>, vector<64x512xf32>
    %cst_19 = arith.constant dense<0.000000e+00> : vector<2x512xf32>
    %47 = tpu.matmul %45, %46, %cst_19 {dimension_numbers = #tpu.dot_dimension_numbers<[1], [0], [0], [1], [0, 0, 1, 1], [], []>} : vector<2x64xf32>, vector<64x512xf32>, vector<2x512xf32> -> vector<2x512xf32>
    %48 = arith.addf %15, %47 : vector<2x512xf32>
    %49 = vector.extract_strided_slice %7 {offsets = [0, 1, 0], sizes = [2, 1, 192], strides = [1, 1, 1]} : vector<2x8x192xf32> to vector<2x1x192xf32>
    %50 = vector.shape_cast %49 : vector<2x1x192xf32> to vector<2x192xf32>
    %cst_20 = arith.constant dense<0.000000e+00> : vector<2x192xf32>
    %51 = tpu.matmul %45, %8, %cst_20 {dimension_numbers = #tpu.dot_dimension_numbers<[1], [0], [0], [1], [0, 0, 1, 1], [], []>} : vector<2x64xf32>, vector<64x192xf32>, vector<2x192xf32> -> vector<2x192xf32>
    %52 = arith.addf %51, %11 : vector<2x192xf32>
    %53 = vector.extract_strided_slice %50 {offsets = [0, 0], sizes = [2, 64], strides = [1, 1]} : vector<2x192xf32> to vector<2x64xf32>
    %54 = vector.extract_strided_slice %52 {offsets = [0, 0], sizes = [2, 64], strides = [1, 1]} : vector<2x192xf32> to vector<2x64xf32>
    %55 = arith.addf %53, %54 : vector<2x64xf32>
    %56 = arith.negf %55 : vector<2x64xf32>
    %57 = math.exp %56 : vector<2x64xf32>
    %cst_21 = arith.constant 1.000000e+00 : f32
    %58 = vector.broadcast %cst_21 : f32 to vector<2x64xf32>
    %59 = arith.addf %58, %57 : vector<2x64xf32>
    %60 = arith.divf %58, %59 : vector<2x64xf32>
    %61 = vector.extract_strided_slice %50 {offsets = [0, 64], sizes = [2, 64], strides = [1, 1]} : vector<2x192xf32> to vector<2x64xf32>
    %62 = vector.extract_strided_slice %52 {offsets = [0, 64], sizes = [2, 64], strides = [1, 1]} : vector<2x192xf32> to vector<2x64xf32>
    %63 = arith.addf %61, %62 : vector<2x64xf32>
    %64 = arith.negf %63 : vector<2x64xf32>
    %65 = math.exp %64 : vector<2x64xf32>
    %cst_22 = arith.constant 1.000000e+00 : f32
    %66 = vector.broadcast %cst_22 : f32 to vector<2x64xf32>
    %67 = arith.addf %66, %65 : vector<2x64xf32>
    %68 = arith.divf %66, %67 : vector<2x64xf32>
    %69 = vector.extract_strided_slice %50 {offsets = [0, 128], sizes = [2, 64], strides = [1, 1]} : vector<2x192xf32> to vector<2x64xf32>
    %70 = vector.extract_strided_slice %52 {offsets = [0, 128], sizes = [2, 64], strides = [1, 1]} : vector<2x192xf32> to vector<2x64xf32>
    %71 = arith.mulf %60, %70 : vector<2x64xf32>
    %72 = arith.addf %69, %71 : vector<2x64xf32>
    %73 = math.tanh %72 : vector<2x64xf32>
    %cst_23 = arith.constant 1.000000e+00 : f32
    %74 = vector.broadcast %cst_23 : f32 to vector<2x64xf32>
    %75 = arith.subf %74, %68 : vector<2x64xf32>
    %76 = arith.mulf %75, %73 : vector<2x64xf32>
    %77 = arith.mulf %68, %45 : vector<2x64xf32>
    %78 = arith.addf %76, %77 : vector<2x64xf32>
    %c64 = arith.constant 64 : index
    %c0_24 = arith.constant 0 : index
    %79 = vector.load %arg5[%c64, %c0_24] : memref<512x512xf32, #tpu.memory_space<vmem>>, vector<64x512xf32>
    %cst_25 = arith.constant dense<0.000000e+00> : vector<2x512xf32>
    %80 = tpu.matmul %78, %79, %cst_25 {dimension_numbers = #tpu.dot_dimension_numbers<[1], [0], [0], [1], [0, 0, 1, 1], [], []>} : vector<2x64xf32>, vector<64x512xf32>, vector<2x512xf32> -> vector<2x512xf32>
    %81 = arith.addf %48, %80 : vector<2x512xf32>
    %82 = vector.extract_strided_slice %7 {offsets = [0, 2, 0], sizes = [2, 1, 192], strides = [1, 1, 1]} : vector<2x8x192xf32> to vector<2x1x192xf32>
    %83 = vector.shape_cast %82 : vector<2x1x192xf32> to vector<2x192xf32>
    %cst_26 = arith.constant dense<0.000000e+00> : vector<2x192xf32>
    %84 = tpu.matmul %78, %8, %cst_26 {dimension_numbers = #tpu.dot_dimension_numbers<[1], [0], [0], [1], [0, 0, 1, 1], [], []>} : vector<2x64xf32>, vector<64x192xf32>, vector<2x192xf32> -> vector<2x192xf32>
    %85 = arith.addf %84, %11 : vector<2x192xf32>
    %86 = vector.extract_strided_slice %83 {offsets = [0, 0], sizes = [2, 64], strides = [1, 1]} : vector<2x192xf32> to vector<2x64xf32>
    %87 = vector.extract_strided_slice %85 {offsets = [0, 0], sizes = [2, 64], strides = [1, 1]} : vector<2x192xf32> to vector<2x64xf32>
    %88 = arith.addf %86, %87 : vector<2x64xf32>
    %89 = arith.negf %88 : vector<2x64xf32>
    %90 = math.exp %89 : vector<2x64xf32>
    %cst_27 = arith.constant 1.000000e+00 : f32
    %91 = vector.broadcast %cst_27 : f32 to vector<2x64xf32>
    %92 = arith.addf %91, %90 : vector<2x64xf32>
    %93 = arith.divf %91, %92 : vector<2x64xf32>
    %94 = vector.extract_strided_slice %83 {offsets = [0, 64], sizes = [2, 64], strides = [1, 1]} : vector<2x192xf32> to vector<2x64xf32>
    %95 = vector.extract_strided_slice %85 {offsets = [0, 64], sizes = [2, 64], strides = [1, 1]} : vector<2x192xf32> to vector<2x64xf32>
    %96 = arith.addf %94, %95 : vector<2x64xf32>
    %97 = arith.negf %96 : vector<2x64xf32>
    %98 = math.exp %97 : vector<2x64xf32>
    %cst_28 = arith.constant 1.000000e+00 : f32
    %99 = vector.broadcast %cst_28 : f32 to vector<2x64xf32>
    %100 = arith.addf %99, %98 : vector<2x64xf32>
    %101 = arith.divf %99, %100 : vector<2x64xf32>
    %102 = vector.extract_strided_slice %83 {offsets = [0, 128], sizes = [2, 64], strides = [1, 1]} : vector<2x192xf32> to vector<2x64xf32>
    %103 = vector.extract_strided_slice %85 {offsets = [0, 128], sizes = [2, 64], strides = [1, 1]} : vector<2x192xf32> to vector<2x64xf32>
    %104 = arith.mulf %93, %103 : vector<2x64xf32>
    %105 = arith.addf %102, %104 : vector<2x64xf32>
    %106 = math.tanh %105 : vector<2x64xf32>
    %cst_29 = arith.constant 1.000000e+00 : f32
    %107 = vector.broadcast %cst_29 : f32 to vector<2x64xf32>
    %108 = arith.subf %107, %101 : vector<2x64xf32>
    %109 = arith.mulf %108, %106 : vector<2x64xf32>
    %110 = arith.mulf %101, %78 : vector<2x64xf32>
    %111 = arith.addf %109, %110 : vector<2x64xf32>
    %c128 = arith.constant 128 : index
    %c0_30 = arith.constant 0 : index
    %112 = vector.load %arg5[%c128, %c0_30] : memref<512x512xf32, #tpu.memory_space<vmem>>, vector<64x512xf32>
    %cst_31 = arith.constant dense<0.000000e+00> : vector<2x512xf32>
    %113 = tpu.matmul %111, %112, %cst_31 {dimension_numbers = #tpu.dot_dimension_numbers<[1], [0], [0], [1], [0, 0, 1, 1], [], []>} : vector<2x64xf32>, vector<64x512xf32>, vector<2x512xf32> -> vector<2x512xf32>
    %114 = arith.addf %81, %113 : vector<2x512xf32>
    %115 = vector.extract_strided_slice %7 {offsets = [0, 3, 0], sizes = [2, 1, 192], strides = [1, 1, 1]} : vector<2x8x192xf32> to vector<2x1x192xf32>
    %116 = vector.shape_cast %115 : vector<2x1x192xf32> to vector<2x192xf32>
    %cst_32 = arith.constant dense<0.000000e+00> : vector<2x192xf32>
    %117 = tpu.matmul %111, %8, %cst_32 {dimension_numbers = #tpu.dot_dimension_numbers<[1], [0], [0], [1], [0, 0, 1, 1], [], []>} : vector<2x64xf32>, vector<64x192xf32>, vector<2x192xf32> -> vector<2x192xf32>
    %118 = arith.addf %117, %11 : vector<2x192xf32>
    %119 = vector.extract_strided_slice %116 {offsets = [0, 0], sizes = [2, 64], strides = [1, 1]} : vector<2x192xf32> to vector<2x64xf32>
    %120 = vector.extract_strided_slice %118 {offsets = [0, 0], sizes = [2, 64], strides = [1, 1]} : vector<2x192xf32> to vector<2x64xf32>
    %121 = arith.addf %119, %120 : vector<2x64xf32>
    %122 = arith.negf %121 : vector<2x64xf32>
    %123 = math.exp %122 : vector<2x64xf32>
    %cst_33 = arith.constant 1.000000e+00 : f32
    %124 = vector.broadcast %cst_33 : f32 to vector<2x64xf32>
    %125 = arith.addf %124, %123 : vector<2x64xf32>
    %126 = arith.divf %124, %125 : vector<2x64xf32>
    %127 = vector.extract_strided_slice %116 {offsets = [0, 64], sizes = [2, 64], strides = [1, 1]} : vector<2x192xf32> to vector<2x64xf32>
    %128 = vector.extract_strided_slice %118 {offsets = [0, 64], sizes = [2, 64], strides = [1, 1]} : vector<2x192xf32> to vector<2x64xf32>
    %129 = arith.addf %127, %128 : vector<2x64xf32>
    %130 = arith.negf %129 : vector<2x64xf32>
    %131 = math.exp %130 : vector<2x64xf32>
    %cst_34 = arith.constant 1.000000e+00 : f32
    %132 = vector.broadcast %cst_34 : f32 to vector<2x64xf32>
    %133 = arith.addf %132, %131 : vector<2x64xf32>
    %134 = arith.divf %132, %133 : vector<2x64xf32>
    %135 = vector.extract_strided_slice %116 {offsets = [0, 128], sizes = [2, 64], strides = [1, 1]} : vector<2x192xf32> to vector<2x64xf32>
    %136 = vector.extract_strided_slice %118 {offsets = [0, 128], sizes = [2, 64], strides = [1, 1]} : vector<2x192xf32> to vector<2x64xf32>
    %137 = arith.mulf %126, %136 : vector<2x64xf32>
    %138 = arith.addf %135, %137 : vector<2x64xf32>
    %139 = math.tanh %138 : vector<2x64xf32>
    %cst_35 = arith.constant 1.000000e+00 : f32
    %140 = vector.broadcast %cst_35 : f32 to vector<2x64xf32>
    %141 = arith.subf %140, %134 : vector<2x64xf32>
    %142 = arith.mulf %141, %139 : vector<2x64xf32>
    %143 = arith.mulf %134, %111 : vector<2x64xf32>
    %144 = arith.addf %142, %143 : vector<2x64xf32>
    %c192 = arith.constant 192 : index
    %c0_36 = arith.constant 0 : index
    %145 = vector.load %arg5[%c192, %c0_36] : memref<512x512xf32, #tpu.memory_space<vmem>>, vector<64x512xf32>
    %cst_37 = arith.constant dense<0.000000e+00> : vector<2x512xf32>
    %146 = tpu.matmul %144, %145, %cst_37 {dimension_numbers = #tpu.dot_dimension_numbers<[1], [0], [0], [1], [0, 0, 1, 1], [], []>} : vector<2x64xf32>, vector<64x512xf32>, vector<2x512xf32> -> vector<2x512xf32>
    %147 = arith.addf %114, %146 : vector<2x512xf32>
    %148 = vector.extract_strided_slice %7 {offsets = [0, 4, 0], sizes = [2, 1, 192], strides = [1, 1, 1]} : vector<2x8x192xf32> to vector<2x1x192xf32>
    %149 = vector.shape_cast %148 : vector<2x1x192xf32> to vector<2x192xf32>
    %cst_38 = arith.constant dense<0.000000e+00> : vector<2x192xf32>
    %150 = tpu.matmul %144, %8, %cst_38 {dimension_numbers = #tpu.dot_dimension_numbers<[1], [0], [0], [1], [0, 0, 1, 1], [], []>} : vector<2x64xf32>, vector<64x192xf32>, vector<2x192xf32> -> vector<2x192xf32>
    %151 = arith.addf %150, %11 : vector<2x192xf32>
    %152 = vector.extract_strided_slice %149 {offsets = [0, 0], sizes = [2, 64], strides = [1, 1]} : vector<2x192xf32> to vector<2x64xf32>
    %153 = vector.extract_strided_slice %151 {offsets = [0, 0], sizes = [2, 64], strides = [1, 1]} : vector<2x192xf32> to vector<2x64xf32>
    %154 = arith.addf %152, %153 : vector<2x64xf32>
    %155 = arith.negf %154 : vector<2x64xf32>
    %156 = math.exp %155 : vector<2x64xf32>
    %cst_39 = arith.constant 1.000000e+00 : f32
    %157 = vector.broadcast %cst_39 : f32 to vector<2x64xf32>
    %158 = arith.addf %157, %156 : vector<2x64xf32>
    %159 = arith.divf %157, %158 : vector<2x64xf32>
    %160 = vector.extract_strided_slice %149 {offsets = [0, 64], sizes = [2, 64], strides = [1, 1]} : vector<2x192xf32> to vector<2x64xf32>
    %161 = vector.extract_strided_slice %151 {offsets = [0, 64], sizes = [2, 64], strides = [1, 1]} : vector<2x192xf32> to vector<2x64xf32>
    %162 = arith.addf %160, %161 : vector<2x64xf32>
    %163 = arith.negf %162 : vector<2x64xf32>
    %164 = math.exp %163 : vector<2x64xf32>
    %cst_40 = arith.constant 1.000000e+00 : f32
    %165 = vector.broadcast %cst_40 : f32 to vector<2x64xf32>
    %166 = arith.addf %165, %164 : vector<2x64xf32>
    %167 = arith.divf %165, %166 : vector<2x64xf32>
    %168 = vector.extract_strided_slice %149 {offsets = [0, 128], sizes = [2, 64], strides = [1, 1]} : vector<2x192xf32> to vector<2x64xf32>
    %169 = vector.extract_strided_slice %151 {offsets = [0, 128], sizes = [2, 64], strides = [1, 1]} : vector<2x192xf32> to vector<2x64xf32>
    %170 = arith.mulf %159, %169 : vector<2x64xf32>
    %171 = arith.addf %168, %170 : vector<2x64xf32>
    %172 = math.tanh %171 : vector<2x64xf32>
    %cst_41 = arith.constant 1.000000e+00 : f32
    %173 = vector.broadcast %cst_41 : f32 to vector<2x64xf32>
    %174 = arith.subf %173, %167 : vector<2x64xf32>
    %175 = arith.mulf %174, %172 : vector<2x64xf32>
    %176 = arith.mulf %167, %144 : vector<2x64xf32>
    %177 = arith.addf %175, %176 : vector<2x64xf32>
    %c256 = arith.constant 256 : index
    %c0_42 = arith.constant 0 : index
    %178 = vector.load %arg5[%c256, %c0_42] : memref<512x512xf32, #tpu.memory_space<vmem>>, vector<64x512xf32>
    %cst_43 = arith.constant dense<0.000000e+00> : vector<2x512xf32>
    %179 = tpu.matmul %177, %178, %cst_43 {dimension_numbers = #tpu.dot_dimension_numbers<[1], [0], [0], [1], [0, 0, 1, 1], [], []>} : vector<2x64xf32>, vector<64x512xf32>, vector<2x512xf32> -> vector<2x512xf32>
    %180 = arith.addf %147, %179 : vector<2x512xf32>
    %181 = vector.extract_strided_slice %7 {offsets = [0, 5, 0], sizes = [2, 1, 192], strides = [1, 1, 1]} : vector<2x8x192xf32> to vector<2x1x192xf32>
    %182 = vector.shape_cast %181 : vector<2x1x192xf32> to vector<2x192xf32>
    %cst_44 = arith.constant dense<0.000000e+00> : vector<2x192xf32>
    %183 = tpu.matmul %177, %8, %cst_44 {dimension_numbers = #tpu.dot_dimension_numbers<[1], [0], [0], [1], [0, 0, 1, 1], [], []>} : vector<2x64xf32>, vector<64x192xf32>, vector<2x192xf32> -> vector<2x192xf32>
    %184 = arith.addf %183, %11 : vector<2x192xf32>
    %185 = vector.extract_strided_slice %182 {offsets = [0, 0], sizes = [2, 64], strides = [1, 1]} : vector<2x192xf32> to vector<2x64xf32>
    %186 = vector.extract_strided_slice %184 {offsets = [0, 0], sizes = [2, 64], strides = [1, 1]} : vector<2x192xf32> to vector<2x64xf32>
    %187 = arith.addf %185, %186 : vector<2x64xf32>
    %188 = arith.negf %187 : vector<2x64xf32>
    %189 = math.exp %188 : vector<2x64xf32>
    %cst_45 = arith.constant 1.000000e+00 : f32
    %190 = vector.broadcast %cst_45 : f32 to vector<2x64xf32>
    %191 = arith.addf %190, %189 : vector<2x64xf32>
    %192 = arith.divf %190, %191 : vector<2x64xf32>
    %193 = vector.extract_strided_slice %182 {offsets = [0, 64], sizes = [2, 64], strides = [1, 1]} : vector<2x192xf32> to vector<2x64xf32>
    %194 = vector.extract_strided_slice %184 {offsets = [0, 64], sizes = [2, 64], strides = [1, 1]} : vector<2x192xf32> to vector<2x64xf32>
    %195 = arith.addf %193, %194 : vector<2x64xf32>
    %196 = arith.negf %195 : vector<2x64xf32>
    %197 = math.exp %196 : vector<2x64xf32>
    %cst_46 = arith.constant 1.000000e+00 : f32
    %198 = vector.broadcast %cst_46 : f32 to vector<2x64xf32>
    %199 = arith.addf %198, %197 : vector<2x64xf32>
    %200 = arith.divf %198, %199 : vector<2x64xf32>
    %201 = vector.extract_strided_slice %182 {offsets = [0, 128], sizes = [2, 64], strides = [1, 1]} : vector<2x192xf32> to vector<2x64xf32>
    %202 = vector.extract_strided_slice %184 {offsets = [0, 128], sizes = [2, 64], strides = [1, 1]} : vector<2x192xf32> to vector<2x64xf32>
    %203 = arith.mulf %192, %202 : vector<2x64xf32>
    %204 = arith.addf %201, %203 : vector<2x64xf32>
    %205 = math.tanh %204 : vector<2x64xf32>
    %cst_47 = arith.constant 1.000000e+00 : f32
    %206 = vector.broadcast %cst_47 : f32 to vector<2x64xf32>
    %207 = arith.subf %206, %200 : vector<2x64xf32>
    %208 = arith.mulf %207, %205 : vector<2x64xf32>
    %209 = arith.mulf %200, %177 : vector<2x64xf32>
    %210 = arith.addf %208, %209 : vector<2x64xf32>
    %c320 = arith.constant 320 : index
    %c0_48 = arith.constant 0 : index
    %211 = vector.load %arg5[%c320, %c0_48] : memref<512x512xf32, #tpu.memory_space<vmem>>, vector<64x512xf32>
    %cst_49 = arith.constant dense<0.000000e+00> : vector<2x512xf32>
    %212 = tpu.matmul %210, %211, %cst_49 {dimension_numbers = #tpu.dot_dimension_numbers<[1], [0], [0], [1], [0, 0, 1, 1], [], []>} : vector<2x64xf32>, vector<64x512xf32>, vector<2x512xf32> -> vector<2x512xf32>
    %213 = arith.addf %180, %212 : vector<2x512xf32>
    %214 = vector.extract_strided_slice %7 {offsets = [0, 6, 0], sizes = [2, 1, 192], strides = [1, 1, 1]} : vector<2x8x192xf32> to vector<2x1x192xf32>
    %215 = vector.shape_cast %214 : vector<2x1x192xf32> to vector<2x192xf32>
    %cst_50 = arith.constant dense<0.000000e+00> : vector<2x192xf32>
    %216 = tpu.matmul %210, %8, %cst_50 {dimension_numbers = #tpu.dot_dimension_numbers<[1], [0], [0], [1], [0, 0, 1, 1], [], []>} : vector<2x64xf32>, vector<64x192xf32>, vector<2x192xf32> -> vector<2x192xf32>
    %217 = arith.addf %216, %11 : vector<2x192xf32>
    %218 = vector.extract_strided_slice %215 {offsets = [0, 0], sizes = [2, 64], strides = [1, 1]} : vector<2x192xf32> to vector<2x64xf32>
    %219 = vector.extract_strided_slice %217 {offsets = [0, 0], sizes = [2, 64], strides = [1, 1]} : vector<2x192xf32> to vector<2x64xf32>
    %220 = arith.addf %218, %219 : vector<2x64xf32>
    %221 = arith.negf %220 : vector<2x64xf32>
    %222 = math.exp %221 : vector<2x64xf32>
    %cst_51 = arith.constant 1.000000e+00 : f32
    %223 = vector.broadcast %cst_51 : f32 to vector<2x64xf32>
    %224 = arith.addf %223, %222 : vector<2x64xf32>
    %225 = arith.divf %223, %224 : vector<2x64xf32>
    %226 = vector.extract_strided_slice %215 {offsets = [0, 64], sizes = [2, 64], strides = [1, 1]} : vector<2x192xf32> to vector<2x64xf32>
    %227 = vector.extract_strided_slice %217 {offsets = [0, 64], sizes = [2, 64], strides = [1, 1]} : vector<2x192xf32> to vector<2x64xf32>
    %228 = arith.addf %226, %227 : vector<2x64xf32>
    %229 = arith.negf %228 : vector<2x64xf32>
    %230 = math.exp %229 : vector<2x64xf32>
    %cst_52 = arith.constant 1.000000e+00 : f32
    %231 = vector.broadcast %cst_52 : f32 to vector<2x64xf32>
    %232 = arith.addf %231, %230 : vector<2x64xf32>
    %233 = arith.divf %231, %232 : vector<2x64xf32>
    %234 = vector.extract_strided_slice %215 {offsets = [0, 128], sizes = [2, 64], strides = [1, 1]} : vector<2x192xf32> to vector<2x64xf32>
    %235 = vector.extract_strided_slice %217 {offsets = [0, 128], sizes = [2, 64], strides = [1, 1]} : vector<2x192xf32> to vector<2x64xf32>
    %236 = arith.mulf %225, %235 : vector<2x64xf32>
    %237 = arith.addf %234, %236 : vector<2x64xf32>
    %238 = math.tanh %237 : vector<2x64xf32>
    %cst_53 = arith.constant 1.000000e+00 : f32
    %239 = vector.broadcast %cst_53 : f32 to vector<2x64xf32>
    %240 = arith.subf %239, %233 : vector<2x64xf32>
    %241 = arith.mulf %240, %238 : vector<2x64xf32>
    %242 = arith.mulf %233, %210 : vector<2x64xf32>
    %243 = arith.addf %241, %242 : vector<2x64xf32>
    %c384 = arith.constant 384 : index
    %c0_54 = arith.constant 0 : index
    %244 = vector.load %arg5[%c384, %c0_54] : memref<512x512xf32, #tpu.memory_space<vmem>>, vector<64x512xf32>
    %cst_55 = arith.constant dense<0.000000e+00> : vector<2x512xf32>
    %245 = tpu.matmul %243, %244, %cst_55 {dimension_numbers = #tpu.dot_dimension_numbers<[1], [0], [0], [1], [0, 0, 1, 1], [], []>} : vector<2x64xf32>, vector<64x512xf32>, vector<2x512xf32> -> vector<2x512xf32>
    %246 = arith.addf %213, %245 : vector<2x512xf32>
    %247 = vector.extract_strided_slice %7 {offsets = [0, 7, 0], sizes = [2, 1, 192], strides = [1, 1, 1]} : vector<2x8x192xf32> to vector<2x1x192xf32>
    %248 = vector.shape_cast %247 : vector<2x1x192xf32> to vector<2x192xf32>
    %cst_56 = arith.constant dense<0.000000e+00> : vector<2x192xf32>
    %249 = tpu.matmul %243, %8, %cst_56 {dimension_numbers = #tpu.dot_dimension_numbers<[1], [0], [0], [1], [0, 0, 1, 1], [], []>} : vector<2x64xf32>, vector<64x192xf32>, vector<2x192xf32> -> vector<2x192xf32>
    %250 = arith.addf %249, %11 : vector<2x192xf32>
    %251 = vector.extract_strided_slice %248 {offsets = [0, 0], sizes = [2, 64], strides = [1, 1]} : vector<2x192xf32> to vector<2x64xf32>
    %252 = vector.extract_strided_slice %250 {offsets = [0, 0], sizes = [2, 64], strides = [1, 1]} : vector<2x192xf32> to vector<2x64xf32>
    %253 = arith.addf %251, %252 : vector<2x64xf32>
    %254 = arith.negf %253 : vector<2x64xf32>
    %255 = math.exp %254 : vector<2x64xf32>
    %cst_57 = arith.constant 1.000000e+00 : f32
    %256 = vector.broadcast %cst_57 : f32 to vector<2x64xf32>
    %257 = arith.addf %256, %255 : vector<2x64xf32>
    %258 = arith.divf %256, %257 : vector<2x64xf32>
    %259 = vector.extract_strided_slice %248 {offsets = [0, 64], sizes = [2, 64], strides = [1, 1]} : vector<2x192xf32> to vector<2x64xf32>
    %260 = vector.extract_strided_slice %250 {offsets = [0, 64], sizes = [2, 64], strides = [1, 1]} : vector<2x192xf32> to vector<2x64xf32>
    %261 = arith.addf %259, %260 : vector<2x64xf32>
    %262 = arith.negf %261 : vector<2x64xf32>
    %263 = math.exp %262 : vector<2x64xf32>
    %cst_58 = arith.constant 1.000000e+00 : f32
    %264 = vector.broadcast %cst_58 : f32 to vector<2x64xf32>
    %265 = arith.addf %264, %263 : vector<2x64xf32>
    %266 = arith.divf %264, %265 : vector<2x64xf32>
    %267 = vector.extract_strided_slice %248 {offsets = [0, 128], sizes = [2, 64], strides = [1, 1]} : vector<2x192xf32> to vector<2x64xf32>
    %268 = vector.extract_strided_slice %250 {offsets = [0, 128], sizes = [2, 64], strides = [1, 1]} : vector<2x192xf32> to vector<2x64xf32>
    %269 = arith.mulf %258, %268 : vector<2x64xf32>
    %270 = arith.addf %267, %269 : vector<2x64xf32>
    %271 = math.tanh %270 : vector<2x64xf32>
    %cst_59 = arith.constant 1.000000e+00 : f32
    %272 = vector.broadcast %cst_59 : f32 to vector<2x64xf32>
    %273 = arith.subf %272, %266 : vector<2x64xf32>
    %274 = arith.mulf %273, %271 : vector<2x64xf32>
    %275 = arith.mulf %266, %243 : vector<2x64xf32>
    %276 = arith.addf %274, %275 : vector<2x64xf32>
    %c448 = arith.constant 448 : index
    %c0_60 = arith.constant 0 : index
    %277 = vector.load %arg5[%c448, %c0_60] : memref<512x512xf32, #tpu.memory_space<vmem>>, vector<64x512xf32>
    %cst_61 = arith.constant dense<0.000000e+00> : vector<2x512xf32>
    %278 = tpu.matmul %276, %277, %cst_61 {dimension_numbers = #tpu.dot_dimension_numbers<[1], [0], [0], [1], [0, 0, 1, 1], [], []>} : vector<2x64xf32>, vector<64x512xf32>, vector<2x512xf32> -> vector<2x512xf32>
    %279 = arith.addf %246, %278 : vector<2x512xf32>
    %cst_62 = arith.constant 0.000000e+00 : f32
    %280 = vector.broadcast %cst_62 : f32 to vector<2x512xf32>
    %281 = arith.maximumf %279, %280 : vector<2x512xf32>
    %c0_63 = arith.constant 0 : index
    %c0_64 = arith.constant 0 : index
    %282 = vector.load %arg7[%c0_63, %c0_64] : memref<512x160xf32, #tpu.memory_space<vmem>>, vector<512x160xf32>
    %cst_65 = arith.constant dense<0.000000e+00> : vector<2x160xf32>
    %283 = tpu.matmul %281, %282, %cst_65 {dimension_numbers = #tpu.dot_dimension_numbers<[1], [0], [0], [1], [0, 0, 1, 1], [], []>} : vector<2x512xf32>, vector<512x160xf32>, vector<2x160xf32> -> vector<2x160xf32>
    %c0_66 = arith.constant 0 : index
    %c0_67 = arith.constant 0 : index
    %284 = vector.load %arg8[%c0_66, %c0_67] : memref<1x160xf32, #tpu.memory_space<vmem>>, vector<1x160xf32>
    %285 = vector.broadcast %284 : vector<1x160xf32> to vector<2x160xf32>
    %286 = arith.addf %283, %285 : vector<2x160xf32>
    %c0_68 = arith.constant 0 : index
    %c0_69 = arith.constant 0 : index
    %287 = vector.load %arg9[%c0_68, %c0_69] : memref<2x160xf32, #tpu.memory_space<vmem>>, vector<2x160xf32>
    tpu.vector_store %arg9[%c0_68, %c0_69], %286 {strides = array<i32>} : memref<2x160xf32, #tpu.memory_space<vmem>>, vector<2x160xf32>,
    return
  }
}

</mosaic_0001>

<llo_original>
// kernel: tpu_custom_call.1
$region0: #{tpu_custom_call.1}
  #allocation0 [shape = 'u32[]', space=smem, size = 0x4, offset = 0x4, fixed_abs, tag = 'smem constant byte address 0x4 - core index']
  #allocation1 [shape = 'u32[144,128]{1,0:T(1,128)}', space=vmem, size = 0x12000, scoped, tag = 'internal scratch']
  %s0 = inlined_call_operand.vmem [shape: f32[2,8,256], index: 0, kind: input, shape index: {}]
  %s1 = inlined_call_operand.vmem [shape: f32[256,192], index: 1, kind: input, shape index: {}]
  %s2 = inlined_call_operand.vmem [shape: f32[64,192], index: 2, kind: input, shape index: {}]
  %s3 = inlined_call_operand.vmem [shape: f32[1,192], index: 3, kind: input, shape index: {}]
  %s4 = inlined_call_operand.vmem [shape: f32[1,192], index: 4, kind: input, shape index: {}]
  %s5 = inlined_call_operand.vmem [shape: f32[512,512], index: 5, kind: input, shape index: {}]
  %s6 = inlined_call_operand.vmem [shape: f32[1,512], index: 6, kind: input, shape index: {}]
  %s7 = inlined_call_operand.vmem [shape: f32[512,160], index: 7, kind: input, shape index: {}]
  %s8 = inlined_call_operand.vmem [shape: f32[1,160], index: 8, kind: input, shape index: {}]
  %s9 = inlined_call_operand.hbm [shape: f32[2,160], index: 9, kind: output, shape index: {}]
  %s10 = sld [smem:[#allocation0]]
  $region46: #{tpu_custom_call.1} parent=0
    _
  %s12 = ssub.s32 1, %s10
  %s13 = scalar_select 0, %s12, %s10
  $region1: #{tpu_custom_call.1} parent=0
    #allocation2 [shape = 'u8[2048]{0}', space=vmem, size = 0x800, scoped, tag = 'output window, operand 0, single buffered']
    #allocation3 [shape = 's32[1]{0}', space=sflag, size = 0x4, scoped, tag = 'scoped memory for tpu_custom_call.1']
    %14 = vsyncpa [#allocation3], 0
    // Predicated region
    $region2: #{tpu_custom_call.1} parent=1 // pred_check
      _
    $region3: #{tpu_custom_call.1} parent=1 // pred_check_branch
      %16 = sbr.rel (0) target = $region5
    $region4: #{tpu_custom_call.1} parent=1 // pred_region
      _
    $region5: #{tpu_custom_call.1} parent=1 // pred_fallthru
      _
    // Predicated region
    $region6: #{tpu_custom_call.1} parent=1 // pred_check
      _
    $region7: #{tpu_custom_call.1} parent=1 // pred_check_branch
      %18 = sbr.rel (0) target = $region9
    $region8: #{tpu_custom_call.1} parent=1 // pred_region
      _
    $region9: #{tpu_custom_call.1} parent=1 // pred_fallthru
      _
    // Predicated region
    $region10: #{tpu_custom_call.1} parent=1 // pred_check
      _
    $region11: #{tpu_custom_call.1} parent=1 // pred_check_branch
      %20 = sbr.rel (0) target = $region13
    $region12: #{tpu_custom_call.1} parent=1 // pred_region
      _
    $region13: #{tpu_custom_call.1} parent=1 // pred_fallthru
      _
    // Predicated region
    $region14: #{tpu_custom_call.1} parent=1 // pred_check
      _
    $region15: #{tpu_custom_call.1} parent=1 // pred_check_branch
      %22 = sbr.rel (0) target = $region17
    $region16: #{tpu_custom_call.1} parent=1 // pred_region
      _
    $region17: #{tpu_custom_call.1} parent=1 // pred_fallthru
      _
    // Predicated region
    $region18: #{tpu_custom_call.1} parent=1 // pred_check
      _
    $region19: #{tpu_custom_call.1} parent=1 // pred_check_branch
      %24 = sbr.rel (0) target = $region21
    $region20: #{tpu_custom_call.1} parent=1 // pred_region
      _
    $region21: #{tpu_custom_call.1} parent=1 // pred_fallthru
      _
    // Predicated region
    $region22: #{tpu_custom_call.1} parent=1 // pred_check
      _
    $region23: #{tpu_custom_call.1} parent=1 // pred_check_branch
      %26 = sbr.rel (0) target = $region25
    $region24: #{tpu_custom_call.1} parent=1 // pred_region
      _
    $region25: #{tpu_custom_call.1} parent=1 // pred_fallthru
      _
    // Predicated region
    $region26: #{tpu_custom_call.1} parent=1 // pred_check
      _
    $region27: #{tpu_custom_call.1} parent=1 // pred_check_branch
      %28 = sbr.rel (0) target = $region29
    $region28: #{tpu_custom_call.1} parent=1 // pred_region
      _
    $region29: #{tpu_custom_call.1} parent=1 // pred_fallthru
      _
    // Predicated region
    $region30: #{tpu_custom_call.1} parent=1 // pred_check
      _
    $region31: #{tpu_custom_call.1} parent=1 // pred_check_branch
      %30 = sbr.rel (0) target = $region33
    $region32: #{tpu_custom_call.1} parent=1 // pred_region
      _
    $region33: #{tpu_custom_call.1} parent=1 // pred_fallthru
      _
    // Predicated region
    $region34: #{tpu_custom_call.1} parent=1 // pred_check
      _
    $region35: #{tpu_custom_call.1} parent=1 // pred_check_branch
      %32 = sbr.rel (0) target = $region37
    $region36: #{tpu_custom_call.1} parent=1 // pred_region
      _
    $region37: #{tpu_custom_call.1} parent=1 // pred_fallthru
      _
    %v33 = vld [vmem:[%s0] sm:$0xff]
    %v34 = vld [vmem:[%s0 + $0x8] sm:$0xff]
    %v35 = vld [vmem:[%s0 + $0x10] sm:$0xff]
    %v36 = vld [vmem:[%s0 + $0x18] sm:$0xff]
    %v37 = vld [vmem:[%s1] sm:$0xff]
    %v38 = vld [vmem:[%s1 + $0x8] sm:$0xff]
    %v39 = vld [vmem:[%s1 + $0x10] sm:$0xff]
    %v40 = vld [vmem:[%s1 + $0x18] sm:$0xff]
    %v41 = vld [vmem:[%s1 + $0x20] sm:$0xff]
    %v42 = vld [vmem:[%s1 + $0x28] sm:$0xff]
    %v43 = vld [vmem:[%s1 + $0x30] sm:$0xff]
    %v44 = vld [vmem:[%s1 + $0x38] sm:$0xff]
    %v45 = vld [vmem:[%s1 + $0x40] sm:$0xff]
    %v46 = vld [vmem:[%s1 + $0x48] sm:$0xff]
    %v47 = vld [vmem:[%s1 + $0x50] sm:$0xff]
    %v48 = vld [vmem:[%s1 + $0x58] sm:$0xff]
    %v49 = vld [vmem:[%s1 + $0x60] sm:$0xff]
    %v50 = vld [vmem:[%s1 + $0x68] sm:$0xff]
    %v51 = vld [vmem:[%s1 + $0x70] sm:$0xff]
    %v52 = vld [vmem:[%s1 + $0x78] sm:$0xff]
    %v53 = vld [vmem:[%s1 + $0x80] sm:$0xff]
    %v54 = vld [vmem:[%s1 + $0x88] sm:$0xff]
    %v55 = vld [vmem:[%s1 + $0x90] sm:$0xff]
    %v56 = vld [vmem:[%s1 + $0x98] sm:$0xff]
    %v57 = vld [vmem:[%s1 + $0xa0] sm:$0xff]
    %v58 = vld [vmem:[%s1 + $0xa8] sm:$0xff]
    %v59 = vld [vmem:[%s1 + $0xb0] sm:$0xff]
    %v60 = vld [vmem:[%s1 + $0xb8] sm:$0xff]
    %v61 = vld [vmem:[%s1 + $0xc0] sm:$0xff]
    %v62 = vld [vmem:[%s1 + $0xc8] sm:$0xff]
    %v63 = vld [vmem:[%s1 + $0xd0] sm:$0xff]
    %v64 = vld [vmem:[%s1 + $0xd8] sm:$0xff]
    %v65 = vld [vmem:[%s1 + $0xe0] sm:$0xff]
    %v66 = vld [vmem:[%s1 + $0xe8] sm:$0xff]
    %v67 = vld [vmem:[%s1 + $0xf0] sm:$0xff]
    %v68 = vld [vmem:[%s1 + $0xf8] sm:$0xff]
    %v69 = vld [vmem:[%s1 + $0x100] sm:$0xff]
    %v70 = vld [vmem:[%s1 + $0x108] sm:$0xff]
    %v71 = vld [vmem:[%s1 + $0x110] sm:$0xff]
    %v72 = vld [vmem:[%s1 + $0x118] sm:$0xff]
    %v73 = vld [vmem:[%s1 + $0x120] sm:$0xff]
    %v74 = vld [vmem:[%s1 + $0x128] sm:$0xff]
    %v75 = vld [vmem:[%s1 + $0x130] sm:$0xff]
    %v76 = vld [vmem:[%s1 + $0x138] sm:$0xff]
    %v77 = vld [vmem:[%s1 + $0x140] sm:$0xff]
    %v78 = vld [vmem:[%s1 + $0x148] sm:$0xff]
    %v79 = vld [vmem:[%s1 + $0x150] sm:$0xff]
    %v80 = vld [vmem:[%s1 + $0x158] sm:$0xff]
    %v81 = vld [vmem:[%s1 + $0x160] sm:$0xff]
    %v82 = vld [vmem:[%s1 + $0x168] sm:$0xff]
    %v83 = vld [vmem:[%s1 + $0x170] sm:$0xff]
    %v84 = vld [vmem:[%s1 + $0x178] sm:$0xff]
    %v85 = vld [vmem:[%s1 + $0x180] sm:$0xff]
    %v86 = vld [vmem:[%s1 + $0x188] sm:$0xff]
    %v87 = vld [vmem:[%s1 + $0x190] sm:$0xff]
    %v88 = vld [vmem:[%s1 + $0x198] sm:$0xff]
    %v89 = vld [vmem:[%s1 + $0x1a0] sm:$0xff]
    %v90 = vld [vmem:[%s1 + $0x1a8] sm:$0xff]
    %v91 = vld [vmem:[%s1 + $0x1b0] sm:$0xff]
    %v92 = vld [vmem:[%s1 + $0x1b8] sm:$0xff]
    %v93 = vld [vmem:[%s1 + $0x1c0] sm:$0xff]
    %v94 = vld [vmem:[%s1 + $0x1c8] sm:$0xff]
    %v95 = vld [vmem:[%s1 + $0x1d0] sm:$0xff]
    %v96 = vld [vmem:[%s1 + $0x1d8] sm:$0xff]
    %v97 = vld [vmem:[%s1 + $0x1e0] sm:$0xff]
    %v98 = vld [vmem:[%s1 + $0x1e8] sm:$0xff]
    %v99 = vld [vmem:[%s1 + $0x1f0] sm:$0xff]
    %v100 = vld [vmem:[%s1 + $0x1f8] sm:$0xff]
    %v101 = vld [vmem:[%s3] sm:$0x3]
    %v103 = vlaneseq
    %v104 = vshrl.u32 %v103, 7
    %v105 = vsub.s32 0, %v104
    %v106 = vrot.slane %v101, %v105
    %v107 = vlaneseq
    %v108 = vshrl.u32 %v107, 7
    %v109 = vsub.s32 1, %v108
    %v110 = vrot.slane %v101, %v109
    %113 = vmatprep.subr.mxu0 %v38
    %114 = vmatpush1.msra.mxu0 %v37
    %115 = vmatprep.subr.mxu0 %v40
    %116 = vmatpush1.msra.mxu0 %v39
    %117 = vmatprep.subr.mxu0 %v42
    %118 = vmatpush1.msra.mxu0 %v41
    %119 = vmatprep.subr.mxu0 %v44
    %120 = vmatpush1.msra.mxu0 %v43
    %121 = vmatprep.subr.mxu0 %v46
    %122 = vmatpush1.msra.mxu0 %v45
    %123 = vmatprep.subr.mxu0 %v48
    %124 = vmatpush1.msra.mxu0 %v47
    %125 = vmatprep.subr.mxu0 %v50
    %126 = vmatpush1.msra.mxu0 %v49
    %127 = vmatprep.subr.mxu0 %v52
    %128 = vmatpush1.msra.mxu0 %v51
    %129 = vmatprep.subr.mxu0 %v54
    %130 = vmatpush1.msra.mxu0 %v53
    %131 = vmatprep.subr.mxu0 %v56
    %132 = vmatpush1.msra.mxu0 %v55
    %133 = vmatprep.subr.mxu0 %v58
    %134 = vmatpush1.msra.mxu0 %v57
    %135 = vmatprep.subr.mxu0 %v60
    %136 = vmatpush1.msra.mxu0 %v59
    %137 = vmatprep.subr.mxu0 %v62
    %138 = vmatpush1.msra.mxu0 %v61
    %139 = vmatprep.subr.mxu0 %v64
    %140 = vmatpush1.msra.mxu0 %v63
    %141 = vmatprep.subr.mxu0 %v66
    %142 = vmatpush1.msra.mxu0 %v65
    %143 = vmatprep.subr.mxu0 %v68
    %144 = vmatpush1.msra.mxu0 %v67
    %145 = vmatprep.subr.mxu0 %v70
    %146 = vmatpush1.msra.mxu0 %v69
    %147 = vmatprep.subr.mxu0 %v72
    %148 = vmatpush1.msra.mxu0 %v71
    %149 = vmatprep.subr.mxu0 %v74
    %150 = vmatpush1.msra.mxu0 %v73
    %151 = vmatprep.subr.mxu0 %v76
    %152 = vmatpush1.msra.mxu0 %v75
    %153 = vmatprep.subr.mxu0 %v78
    %154 = vmatpush1.msra.mxu0 %v77
    %155 = vmatprep.subr.mxu0 %v80
    %156 = vmatpush1.msra.mxu0 %v79
    %157 = vmatprep.subr.mxu0 %v82
    %158 = vmatpush1.msra.mxu0 %v81
    %159 = vmatprep.subr.mxu0 %v84
    %160 = vmatpush1.msra.mxu0 %v83
    %161 = vmatprep.subr.mxu0 %v86
    %162 = vmatpush1.msra.mxu0 %v85
    %163 = vmatprep.subr.mxu0 %v88
    %164 = vmatpush1.msra.mxu0 %v87
    %165 = vmatprep.subr.mxu0 %v90
    %166 = vmatpush1.msra.mxu0 %v89
    %167 = vmatprep.subr.mxu0 %v92
    %168 = vmatpush1.msra.mxu0 %v91
    %169 = vmatprep.subr.mxu0 %v94
    %170 = vmatpush1.msra.mxu0 %v93
    %171 = vmatprep.subr.mxu0 %v96
    %172 = vmatpush1.msra.mxu0 %v95
    %173 = vmatprep.subr.mxu0 %v98
    %174 = vmatpush1.msra.mxu0 %v97
    %175 = vmatprep.subr.mxu0 %v100
    %176 = vmatpush1.msra.mxu0 %v99
    %177 = vmatprep.mubr.f32.mxu0 %v34
    %178 = vmatmul.mubr.f32.gmra.mrb[0].mxu0 %v33
    %v179 = vpop.f32.mrb[0].mxu0
    %v180 = vadd.f32 %v106, %v179
    %v181 = vpop.f32.mrb[0].mxu0
    %v182 = vadd.f32 %v110, %v181
    %183 = vmatprep.mubr.f32.mxu0 %v36
    %184 = vmatmul.mubr.f32.gmra.mrb[0].mxu0 %v35
    %v185 = vpop.f32.mrb[0].mxu0
    %v186 = vadd.f32 %v106, %v185
    %v187 = vpop.f32.mrb[0].mxu0
    %v188 = vadd.f32 %v110, %v187
    %189 = vdwg.mxu0
    %v190 = vld [vmem:[%s2] sm:$0xff]
    %v191 = vld [vmem:[%s2 + $0x8] sm:$0xff]
    %v192 = vld [vmem:[%s2 + $0x10] sm:$0xff]
    %v193 = vld [vmem:[%s2 + $0x18] sm:$0xff]
    %v194 = vld [vmem:[%s2 + $0x20] sm:$0xff]
    %v195 = vld [vmem:[%s2 + $0x28] sm:$0xff]
    %v196 = vld [vmem:[%s2 + $0x30] sm:$0xff]
    %v197 = vld [vmem:[%s2 + $0x38] sm:$0xff]
    %v198 = vld [vmem:[%s2 + $0x40] sm:$0xff]
    %v199 = vld [vmem:[%s2 + $0x48] sm:$0xff]
    %v200 = vld [vmem:[%s2 + $0x50] sm:$0xff]
    %v201 = vld [vmem:[%s2 + $0x58] sm:$0xff]
    %v202 = vld [vmem:[%s2 + $0x60] sm:$0xff]
    %v203 = vld [vmem:[%s2 + $0x68] sm:$0xff]
    %v204 = vld [vmem:[%s2 + $0x70] sm:$0xff]
    %v205 = vld [vmem:[%s2 + $0x78] sm:$0xff]
    %v206 = vld [vmem:[%s4] sm:$0x3]
    %v208 = vlaneseq
    %v209 = vshrl.u32 %v208, 7
    %v210 = vsub.s32 0, %v209
    %v211 = vrot.slane %v206, %v210
    %v212 = vlaneseq
    %v213 = vshrl.u32 %v212, 7
    %v214 = vsub.s32 1, %v213
    %v215 = vrot.slane %v206, %v214
    %v218 = vld [vmem:[%s6] sm:$0xf]
    %v220 = vlaneseq
    %v221 = vshrl.u32 %v220, 7
    %v222 = vsub.s32 0, %v221
    %v223 = vrot.slane %v218, %v222
    %v224 = vlaneseq
    %v225 = vshrl.u32 %v224, 7
    %v226 = vsub.s32 1, %v225
    %v227 = vrot.slane %v218, %v226
    %v228 = vlaneseq
    %v229 = vshrl.u32 %v228, 7
    %v230 = vsub.s32 2, %v229
    %v231 = vrot.slane %v218, %v230
    %v232 = vlaneseq
    %v233 = vshrl.u32 %v232, 7
    %v234 = vsub.s32 3, %v233
    %v235 = vrot.slane %v218, %v234
    %vm240 = vcmask 523264
    %v242 = vsel %vm240, 0.0, 0
    %244 = vmatprep.subr.mxu0 %v191
    %245 = vmatpush1.msra.mxu0 %v190
    %246 = vmatprep.subr.mxu0 %v193
    %247 = vmatpush1.msra.mxu0 %v192
    %248 = vmatprep.subr.mxu0 %v195
    %249 = vmatpush1.msra.mxu0 %v194
    %250 = vmatprep.subr.mxu0 %v197
    %251 = vmatpush1.msra.mxu0 %v196
    %252 = vmatprep.subr.mxu0 %v199
    %253 = vmatpush1.msra.mxu0 %v198
    %254 = vmatprep.subr.mxu0 %v201
    %255 = vmatpush1.msra.mxu0 %v200
    %256 = vmatprep.subr.mxu0 %v203
    %257 = vmatpush1.msra.mxu0 %v202
    %258 = vmatprep.subr.mxu0 %v205
    %259 = vmatpush1.msra.mxu0 %v204
    %260 = vmatprep.subr.mxu0 0.0
    %261 = vmatpush1.msra.mxu0 0.0
    %262 = vmatprep.subr.mxu0 0.0
    %263 = vmatpush1.msra.mxu0 0.0
    %264 = vmatprep.subr.mxu0 0.0
    %265 = vmatpush1.msra.mxu0 0.0
    %266 = vmatprep.subr.mxu0 0.0
    %267 = vmatpush1.msra.mxu0 0.0
    %268 = vmatprep.subr.mxu0 0.0
    %269 = vmatpush1.msra.mxu0 0.0
    %270 = vmatprep.subr.mxu0 0.0
    %271 = vmatpush1.msra.mxu0 0.0
    %272 = vmatprep.subr.mxu0 0.0
    %273 = vmatpush1.msra.mxu0 0.0
    %274 = vmatprep.subr.mxu0 0.0
    %275 = vmatpush1.msra.mxu0 0.0
    %276 = vmatprep.subr.mxu0 0.0
    %277 = vmatpush1.msra.mxu0 0.0
    %278 = vmatprep.subr.mxu0 0.0
    %279 = vmatpush1.msra.mxu0 0.0
    %280 = vmatprep.subr.mxu0 0.0
    %281 = vmatpush1.msra.mxu0 0.0
    %282 = vmatprep.subr.mxu0 0.0
    %283 = vmatpush1.msra.mxu0 0.0
    %284 = vmatprep.subr.mxu0 0.0
    %285 = vmatpush1.msra.mxu0 0.0
    %286 = vmatprep.subr.mxu0 0.0
    %287 = vmatpush1.msra.mxu0 0.0
    %288 = vmatprep.subr.mxu0 0.0
    %289 = vmatpush1.msra.mxu0 0.0
    %290 = vmatprep.subr.mxu0 0.0
    %291 = vmatpush1.msra.mxu0 0.0
    %292 = vmatprep.subr.mxu0 0.0
    %293 = vmatpush1.msra.mxu0 0.0
    %294 = vmatprep.subr.mxu0 0.0
    %295 = vmatpush1.msra.mxu0 0.0
    %296 = vmatprep.subr.mxu0 0.0
    %297 = vmatpush1.msra.mxu0 0.0
    %298 = vmatprep.subr.mxu0 0.0
    %299 = vmatpush1.msra.mxu0 0.0
    %300 = vmatprep.subr.mxu0 0.0
    %301 = vmatpush1.msra.mxu0 0.0
    %302 = vmatprep.subr.mxu0 0.0
    %303 = vmatpush1.msra.mxu0 0.0
    %304 = vmatprep.subr.mxu0 0.0
    %305 = vmatpush1.msra.mxu0 0.0
    %306 = vmatprep.subr.mxu0 0.0
    %307 = vmatpush1.msra.mxu0 0.0
    %308 = vmatprep.mubr.f32.mxu0 0.0
    %309 = vmatmul.mubr.f32.gmra.mrb[0].mxu0 %v242
    %v310 = vpop.f32.mrb[0].mxu0
    %v311 = vadd.f32 %v211, %v310
    %v312 = vpop.f32.mrb[0].mxu0
    %v313 = vadd.f32 %v215, %v312
    %314 = vdwg.mxu0
    %v316 = vrot.slane %v311, 1
    %v319 = vadd.f32 %v180, %v311
    %v320 = vadd.f32 %v186, %v316
    %v321 = vxor.u32 %v319, 2147483648
    %v322 = vxor.u32 %v320, 2147483648
    %v323 = vmul.f32 %v321, 1.442695
    %v324 = vpow.pop %v323
    %v325 = vmul.f32 %v322, 1.442695
    %v326 = vpow.pop %v325
    %v327 = vadd.f32 %v324, 1.0
    %v328 = vadd.f32 %v326, 1.0
    %v329 = vrcp.pop %v327
    %v330 = vmul.f32 1.0, %v329
    %v331 = vrcp.pop %v328
    %v332 = vmul.f32 1.0, %v331
    %v334 = vrot.slane %v313, 1
    %v337 = vmul.f32 %v330, %v313
    %v338 = vmul.f32 %v332, %v334
    %v339 = vadd.f32 %v182, %v337
    %v340 = vadd.f32 %v188, %v338
    %v341 = vtanh.pop %v339
    %v342 = vtanh.pop %v340
    %v343 = vsub.f32 1.0, %v330
    %v344 = vsub.f32 1.0, %v332
    %347 = vrot.lane.b32.xlu0 %v341, 64
    %v348 = vpop.permute.xlu0 %347
    %349 = vrot.lane.b32.xlu0 %v342, 64
    %v350 = vpop.permute.xlu0 %349
    %v353 = vmul.f32 %v343, %v348
    %v354 = vmul.f32 %v344, %v350
    %v355 = vmul.f32 %v330, 0.0
    %v356 = vmul.f32 %v332, 0.0
    %v357 = vadd.f32 %v353, %v355
    %v358 = vadd.f32 %v354, %v356
    %v359 = vld [vmem:[%s5] sm:$0xff]
    %v360 = vld [vmem:[%s5 + $0x8] sm:$0xff]
    %v361 = vld [vmem:[%s5 + $0x10] sm:$0xff]
    %v362 = vld [vmem:[%s5 + $0x18] sm:$0xff]
    %v363 = vld [vmem:[%s5 + $0x20] sm:$0xff]
    %v364 = vld [vmem:[%s5 + $0x28] sm:$0xff]
    %v365 = vld [vmem:[%s5 + $0x30] sm:$0xff]
    %v366 = vld [vmem:[%s5 + $0x38] sm:$0xff]
    %v367 = vld [vmem:[%s5 + $0x40] sm:$0xff]
    %v368 = vld [vmem:[%s5 + $0x48] sm:$0xff]
    %v369 = vld [vmem:[%s5 + $0x50] sm:$0xff]
    %v370 = vld [vmem:[%s5 + $0x58] sm:$0xff]
    %v371 = vld [vmem:[%s5 + $0x60] sm:$0xff]
    %v372 = vld [vmem:[%s5 + $0x68] sm:$0xff]
    %v373 = vld [vmem:[%s5 + $0x70] sm:$0xff]
    %v374 = vld [vmem:[%s5 + $0x78] sm:$0xff]
    %v375 = vld [vmem:[%s5 + $0x80] sm:$0xff]
    %v376 = vld [vmem:[%s5 + $0x88] sm:$0xff]
    %v377 = vld [vmem:[%s5 + $0x90] sm:$0xff]
    %v378 = vld [vmem:[%s5 + $0x98] sm:$0xff]
    %v379 = vld [vmem:[%s5 + $0xa0] sm:$0xff]
    %v380 = vld [vmem:[%s5 + $0xa8] sm:$0xff]
    %v381 = vld [vmem:[%s5 + $0xb0] sm:$0xff]
    %v382 = vld [vmem:[%s5 + $0xb8] sm:$0xff]
    %v383 = vld [vmem:[%s5 + $0xc0] sm:$0xff]
    %v384 = vld [vmem:[%s5 + $0xc8] sm:$0xff]
    %v385 = vld [vmem:[%s5 + $0xd0] sm:$0xff]
    %v386 = vld [vmem:[%s5 + $0xd8] sm:$0xff]
    %v387 = vld [vmem:[%s5 + $0xe0] sm:$0xff]
    %v388 = vld [vmem:[%s5 + $0xe8] sm:$0xff]
    %v389 = vld [vmem:[%s5 + $0xf0] sm:$0xff]
    %v390 = vld [vmem:[%s5 + $0xf8] sm:$0xff]
    %v393 = vrot.slane %v358, 7
    %vm394 = vcmask 1041409
    %v395 = vsel %vm394, %v393, %v357
    %396 = vrot.lane.b32.xlu0 %v395, 64
    %v397 = vpop.permute.xlu0 %396
    %v398 = vsel %vm240, %v397, 0
    %400 = vmatprep.subr.mxu0 %v360
    %401 = vmatpush1.msra.mxu0 %v359
    %402 = vmatprep.subr.mxu0 %v364
    %403 = vmatpush1.msra.mxu0 %v363
    %404 = vmatprep.subr.mxu0 %v368
    %405 = vmatpush1.msra.mxu0 %v367
    %406 = vmatprep.subr.mxu0 %v372
    %407 = vmatpush1.msra.mxu0 %v371
    %408 = vmatprep.subr.mxu0 %v376
    %409 = vmatpush1.msra.mxu0 %v375
    %410 = vmatprep.subr.mxu0 %v380
    %411 = vmatpush1.msra.mxu0 %v379
    %412 = vmatprep.subr.mxu0 %v384
    %413 = vmatpush1.msra.mxu0 %v383
    %414 = vmatprep.subr.mxu0 %v388
    %415 = vmatpush1.msra.mxu0 %v387
    %416 = vmatprep.subr.mxu0 0.0
    %417 = vmatpush1.msra.mxu0 0.0
    %418 = vmatprep.subr.mxu0 0.0
    %419 = vmatpush1.msra.mxu0 0.0
    %420 = vmatprep.subr.mxu0 0.0
    %421 = vmatpush1.msra.mxu0 0.0
    %422 = vmatprep.subr.mxu0 0.0
    %423 = vmatpush1.msra.mxu0 0.0
    %424 = vmatprep.subr.mxu0 0.0
    %425 = vmatpush1.msra.mxu0 0.0
    %426 = vmatprep.subr.mxu0 0.0
    %427 = vmatpush1.msra.mxu0 0.0
    %428 = vmatprep.subr.mxu0 0.0
    %429 = vmatpush1.msra.mxu0 0.0
    %430 = vmatprep.subr.mxu0 0.0
    %431 = vmatpush1.msra.mxu0 0.0
    %432 = vmatprep.subr.mxu0 0.0
    %433 = vmatpush1.msra.mxu0 0.0
    %434 = vmatprep.subr.mxu0 0.0
    %435 = vmatpush1.msra.mxu0 0.0
    %436 = vmatprep.subr.mxu0 0.0
    %437 = vmatpush1.msra.mxu0 0.0
    %438 = vmatprep.subr.mxu0 0.0
    %439 = vmatpush1.msra.mxu0 0.0
    %440 = vmatprep.subr.mxu0 0.0
    %441 = vmatpush1.msra.mxu0 0.0
    %442 = vmatprep.subr.mxu0 0.0
    %443 = vmatpush1.msra.mxu0 0.0
    %444 = vmatprep.subr.mxu0 0.0
    %445 = vmatpush1.msra.mxu0 0.0
    %446 = vmatprep.subr.mxu0 0.0
    %447 = vmatpush1.msra.mxu0 0.0
    %448 = vmatprep.subr.mxu0 0.0
    %449 = vmatpush1.msra.mxu0 0.0
    %450 = vmatprep.subr.mxu0 0.0
    %451 = vmatpush1.msra.mxu0 0.0
    %452 = vmatprep.subr.mxu0 0.0
    %453 = vmatpush1.msra.mxu0 0.0
    %454 = vmatprep.subr.mxu0 0.0
    %455 = vmatpush1.msra.mxu0 0.0
    %456 = vmatprep.subr.mxu0 0.0
    %457 = vmatpush1.msra.mxu0 0.0
    %458 = vmatprep.subr.mxu0 0.0
    %459 = vmatpush1.msra.mxu0 0.0
    %460 = vmatprep.subr.mxu0 0.0
    %461 = vmatpush1.msra.mxu0 0.0
    %462 = vmatprep.subr.mxu0 0.0
    %463 = vmatpush1.msra.mxu0 0.0
    %464 = vmatprep.mubr.f32.mxu0 0.0
    %465 = vmatmul.mubr.f32.gmra.mrb[0].mxu0 %v398
    %v466 = vpop.f32.mrb[0].mxu0
    %v467 = vadd.f32 0.0, %v466
    %v468 = vpop.f32.mrb[0].mxu0
    %v469 = vadd.f32 0.0, %v468
    %470 = vdwg.mxu0
    %471 = vmatprep.subr.mxu0 %v362
    %472 = vmatpush1.msra.mxu0 %v361
    %473 = vmatprep.subr.mxu0 %v366
    %474 = vmatpush1.msra.mxu0 %v365
    %475 = vmatprep.subr.mxu0 %v370
    %476 = vmatpush1.msra.mxu0 %v369
    %477 = vmatprep.subr.mxu0 %v374
    %478 = vmatpush1.msra.mxu0 %v373
    %479 = vmatprep.subr.mxu0 %v378
    %480 = vmatpush1.msra.mxu0 %v377
    %481 = vmatprep.subr.mxu0 %v382
    %482 = vmatpush1.msra.mxu0 %v381
    %483 = vmatprep.subr.mxu0 %v386
    %484 = vmatpush1.msra.mxu0 %v385
    %485 = vmatprep.subr.mxu0 %v390
    %486 = vmatpush1.msra.mxu0 %v389
    %487 = vmatprep.subr.mxu0 0.0
    %488 = vmatpush1.msra.mxu0 0.0
    %489 = vmatprep.subr.mxu0 0.0
    %490 = vmatpush1.msra.mxu0 0.0
    %491 = vmatprep.subr.mxu0 0.0
    %492 = vmatpush1.msra.mxu0 0.0
    %493 = vmatprep.subr.mxu0 0.0
    %494 = vmatpush1.msra.mxu0 0.0
    %495 = vmatprep.subr.mxu0 0.0
    %496 = vmatpush1.msra.mxu0 0.0
    %497 = vmatprep.subr.mxu0 0.0
    %498 = vmatpush1.msra.mxu0 0.0
    %499 = vmatprep.subr.mxu0 0.0
    %500 = vmatpush1.msra.mxu0 0.0
    %501 = vmatprep.subr.mxu0 0.0
    %502 = vmatpush1.msra.mxu0 0.0
    %503 = vmatprep.subr.mxu0 0.0
    %504 = vmatpush1.msra.mxu0 0.0
    %505 = vmatprep.subr.mxu0 0.0
    %506 = vmatpush1.msra.mxu0 0.0
    %507 = vmatprep.subr.mxu0 0.0
    %508 = vmatpush1.msra.mxu0 0.0
    %509 = vmatprep.subr.mxu0 0.0
    %510 = vmatpush1.msra.mxu0 0.0
    %511 = vmatprep.subr.mxu0 0.0
    %512 = vmatpush1.msra.mxu0 0.0
    %513 = vmatprep.subr.mxu0 0.0
    %514 = vmatpush1.msra.mxu0 0.0
    %515 = vmatprep.subr.mxu0 0.0
    %516 = vmatpush1.msra.mxu0 0.0
    %517 = vmatprep.subr.mxu0 0.0
    %518 = vmatpush1.msra.mxu0 0.0
    %519 = vmatprep.subr.mxu0 0.0
    %520 = vmatpush1.msra.mxu0 0.0
    %521 = vmatprep.subr.mxu0 0.0
    %522 = vmatpush1.msra.mxu0 0.0
    %523 = vmatprep.subr.mxu0 0.0
    %524 = vmatpush1.msra.mxu0 0.0
    %525 = vmatprep.subr.mxu0 0.0
    %526 = vmatpush1.msra.mxu0 0.0
    %527 = vmatprep.subr.mxu0 0.0
    %528 = vmatpush1.msra.mxu0 0.0
    %529 = vmatprep.subr.mxu0 0.0
    %530 = vmatpush1.msra.mxu0 0.0
    %531 = vmatprep.subr.mxu0 0.0
    %532 = vmatpush1.msra.mxu0 0.0
    %533 = vmatprep.subr.mxu0 0.0
    %534 = vmatpush1.msra.mxu0 0.0
    %535 = vmatprep.mubr.f32.mxu0 0.0
    %536 = vmatmul.mubr.f32.gmra.mrb[0].mxu0 %v398
    %v537 = vpop.f32.mrb[0].mxu0
    %v538 = vadd.f32 0.0, %v537
    %v539 = vpop.f32.mrb[0].mxu0
    %v540 = vadd.f32 0.0, %v539
    %541 = vdwg.mxu0
    %v542 = vadd.f32 %v223, %v467
    %v543 = vadd.f32 %v227, %v469
    %v544 = vadd.f32 %v231, %v538
    %v545 = vadd.f32 %v235, %v540
    %546 = vmatprep.subr.mxu0 %v191
    %547 = vmatpush1.msra.mxu0 %v190
    %548 = vmatprep.subr.mxu0 %v193
    %549 = vmatpush1.msra.mxu0 %v192
    %550 = vmatprep.subr.mxu0 %v195
    %551 = vmatpush1.msra.mxu0 %v194
    %552 = vmatprep.subr.mxu0 %v197
    %553 = vmatpush1.msra.mxu0 %v196
    %554 = vmatprep.subr.mxu0 %v199
    %555 = vmatpush1.msra.mxu0 %v198
    %556 = vmatprep.subr.mxu0 %v201
    %557 = vmatpush1.msra.mxu0 %v200
    %558 = vmatprep.subr.mxu0 %v203
    %559 = vmatpush1.msra.mxu0 %v202
    %560 = vmatprep.subr.mxu0 %v205
    %561 = vmatpush1.msra.mxu0 %v204
    %562 = vmatprep.subr.mxu0 0.0
    %563 = vmatpush1.msra.mxu0 0.0
    %564 = vmatprep.subr.mxu0 0.0
    %565 = vmatpush1.msra.mxu0 0.0
    %566 = vmatprep.subr.mxu0 0.0
    %567 = vmatpush1.msra.mxu0 0.0
    %568 = vmatprep.subr.mxu0 0.0
    %569 = vmatpush1.msra.mxu0 0.0
    %570 = vmatprep.subr.mxu0 0.0
    %571 = vmatpush1.msra.mxu0 0.0
    %572 = vmatprep.subr.mxu0 0.0
    %573 = vmatpush1.msra.mxu0 0.0
    %574 = vmatprep.subr.mxu0 0.0
    %575 = vmatpush1.msra.mxu0 0.0
    %576 = vmatprep.subr.mxu0 0.0
    %577 = vmatpush1.msra.mxu0 0.0
    %578 = vmatprep.subr.mxu0 0.0
    %579 = vmatpush1.msra.mxu0 0.0
    %580 = vmatprep.subr.mxu0 0.0
    %581 = vmatpush1.msra.mxu0 0.0
    %582 = vmatprep.subr.mxu0 0.0
    %583 = vmatpush1.msra.mxu0 0.0
    %584 = vmatprep.subr.mxu0 0.0
    %585 = vmatpush1.msra.mxu0 0.0
    %586 = vmatprep.subr.mxu0 0.0
    %587 = vmatpush1.msra.mxu0 0.0
    %588 = vmatprep.subr.mxu0 0.0
    %589 = vmatpush1.msra.mxu0 0.0
    %590 = vmatprep.subr.mxu0 0.0
    %591 = vmatpush1.msra.mxu0 0.0
    %592 = vmatprep.subr.mxu0 0.0
    %593 = vmatpush1.msra.mxu0 0.0
    %594 = vmatprep.subr.mxu0 0.0
    %595 = vmatpush1.msra.mxu0 0.0
    %596 = vmatprep.subr.mxu0 0.0
    %597 = vmatpush1.msra.mxu0 0.0
    %598 = vmatprep.subr.mxu0 0.0
    %599 = vmatpush1.msra.mxu0 0.0
    %600 = vmatprep.subr.mxu0 0.0
    %601 = vmatpush1.msra.mxu0 0.0
    %602 = vmatprep.subr.mxu0 0.0
    %603 = vmatpush1.msra.mxu0 0.0
    %604 = vmatprep.subr.mxu0 0.0
    %605 = vmatpush1.msra.mxu0 0.0
    %606 = vmatprep.subr.mxu0 0.0
    %607 = vmatpush1.msra.mxu0 0.0
    %608 = vmatprep.subr.mxu0 0.0
    %609 = vmatpush1.msra.mxu0 0.0
    %610 = vmatprep.mubr.f32.mxu0 0.0
    %611 = vmatmul.mubr.f32.gmra.mrb[0].mxu0 %v398
    %v612 = vpop.f32.mrb[0].mxu0
    %v613 = vadd.f32 %v211, %v612
    %v614 = vpop.f32.mrb[0].mxu0
    %v615 = vadd.f32 %v215, %v614
    %616 = vdwg.mxu0
    %v618 = vrot.slane %v613, 7
    %v621 = vadd.f32 %v180, %v618
    %v622 = vadd.f32 %v186, %v613
    %v623 = vxor.u32 %v621, 2147483648
    %v624 = vxor.u32 %v622, 2147483648
    %v625 = vmul.f32 %v623, 1.442695
    %v626 = vpow.pop %v625
    %v627 = vmul.f32 %v624, 1.442695
    %v628 = vpow.pop %v627
    %v629 = vadd.f32 %v626, 1.0
    %v630 = vadd.f32 %v628, 1.0
    %v631 = vrcp.pop %v629
    %v632 = vmul.f32 1.0, %v631
    %v633 = vrcp.pop %v630
    %v634 = vmul.f32 1.0, %v633
    %v636 = vrot.slane %v615, 7
    %v639 = vmul.f32 %v632, %v636
    %v640 = vmul.f32 %v634, %v615
    %v641 = vadd.f32 %v182, %v639
    %v642 = vadd.f32 %v188, %v640
    %v643 = vtanh.pop %v641
    %v644 = vtanh.pop %v642
    %v645 = vsub.f32 1.0, %v632
    %v646 = vsub.f32 1.0, %v634
    %649 = vrot.lane.b32.xlu0 %v643, 64
    %v650 = vpop.permute.xlu0 %649
    %651 = vrot.lane.b32.xlu0 %v644, 64
    %v652 = vpop.permute.xlu0 %651
    %v655 = vmul.f32 %v645, %v650
    %v656 = vmul.f32 %v646, %v652
    %v657 = vrot.slane %v357, 7
    %v660 = vmul.f32 %v632, %v657
    %v661 = vmul.f32 %v634, %v393
    %v662 = vadd.f32 %v655, %v660
    %v663 = vadd.f32 %v656, %v661
    %v664 = vld [vmem:[%s5 + $0x100] sm:$0xff]
    %v665 = vld [vmem:[%s5 + $0x108] sm:$0xff]
    %v666 = vld [vmem:[%s5 + $0x110] sm:$0xff]
    %v667 = vld [vmem:[%s5 + $0x118] sm:$0xff]
    %v668 = vld [vmem:[%s5 + $0x120] sm:$0xff]
    %v669 = vld [vmem:[%s5 + $0x128] sm:$0xff]
    %v670 = vld [vmem:[%s5 + $0x130] sm:$0xff]
    %v671 = vld [vmem:[%s5 + $0x138] sm:$0xff]
    %v672 = vld [vmem:[%s5 + $0x140] sm:$0xff]
    %v673 = vld [vmem:[%s5 + $0x148] sm:$0xff]
    %v674 = vld [vmem:[%s5 + $0x150] sm:$0xff]
    %v675 = vld [vmem:[%s5 + $0x158] sm:$0xff]
    %v676 = vld [vmem:[%s5 + $0x160] sm:$0xff]
    %v677 = vld [vmem:[%s5 + $0x168] sm:$0xff]
    %v678 = vld [vmem:[%s5 + $0x170] sm:$0xff]
    %v679 = vld [vmem:[%s5 + $0x178] sm:$0xff]
    %v680 = vld [vmem:[%s5 + $0x180] sm:$0xff]
    %v681 = vld [vmem:[%s5 + $0x188] sm:$0xff]
    %v682 = vld [vmem:[%s5 + $0x190] sm:$0xff]
    %v683 = vld [vmem:[%s5 + $0x198] sm:$0xff]
    %v684 = vld [vmem:[%s5 + $0x1a0] sm:$0xff]
    %v685 = vld [vmem:[%s5 + $0x1a8] sm:$0xff]
    %v686 = vld [vmem:[%s5 + $0x1b0] sm:$0xff]
    %v687 = vld [vmem:[%s5 + $0x1b8] sm:$0xff]
    %v688 = vld [vmem:[%s5 + $0x1c0] sm:$0xff]
    %v689 = vld [vmem:[%s5 + $0x1c8] sm:$0xff]
    %v690 = vld [vmem:[%s5 + $0x1d0] sm:$0xff]
    %v691 = vld [vmem:[%s5 + $0x1d8] sm:$0xff]
    %v692 = vld [vmem:[%s5 + $0x1e0] sm:$0xff]
    %v693 = vld [vmem:[%s5 + $0x1e8] sm:$0xff]
    %v694 = vld [vmem:[%s5 + $0x1f0] sm:$0xff]
    %v695 = vld [vmem:[%s5 + $0x1f8] sm:$0xff]
    %v698 = vrot.slane %v662, 1
    %v699 = vsel %vm394, %v663, %v698
    %700 = vrot.lane.b32.xlu0 %v699, 64
    %v701 = vpop.permute.xlu0 %700
    %v702 = vsel %vm240, %v701, 0
    %704 = vmatprep.subr.mxu0 %v665
    %705 = vmatpush1.msra.mxu0 %v664
    %706 = vmatprep.subr.mxu0 %v669
    %707 = vmatpush1.msra.mxu0 %v668
    %708 = vmatprep.subr.mxu0 %v673
    %709 = vmatpush1.msra.mxu0 %v672
    %710 = vmatprep.subr.mxu0 %v677
    %711 = vmatpush1.msra.mxu0 %v676
    %712 = vmatprep.subr.mxu0 %v681
    %713 = vmatpush1.msra.mxu0 %v680
    %714 = vmatprep.subr.mxu0 %v685
    %715 = vmatpush1.msra.mxu0 %v684
    %716 = vmatprep.subr.mxu0 %v689
    %717 = vmatpush1.msra.mxu0 %v688
    %718 = vmatprep.subr.mxu0 %v693
    %719 = vmatpush1.msra.mxu0 %v692
    %720 = vmatprep.subr.mxu0 0.0
    %721 = vmatpush1.msra.mxu0 0.0
    %722 = vmatprep.subr.mxu0 0.0
    %723 = vmatpush1.msra.mxu0 0.0
    %724 = vmatprep.subr.mxu0 0.0
    %725 = vmatpush1.msra.mxu0 0.0
    %726 = vmatprep.subr.mxu0 0.0
    %727 = vmatpush1.msra.mxu0 0.0
    %728 = vmatprep.subr.mxu0 0.0
    %729 = vmatpush1.msra.mxu0 0.0
    %730 = vmatprep.subr.mxu0 0.0
    %731 = vmatpush1.msra.mxu0 0.0
    %732 = vmatprep.subr.mxu0 0.0
    %733 = vmatpush1.msra.mxu0 0.0
    %734 = vmatprep.subr.mxu0 0.0
    %735 = vmatpush1.msra.mxu0 0.0
    %736 = vmatprep.subr.mxu0 0.0
    %737 = vmatpush1.msra.mxu0 0.0
    %738 = vmatprep.subr.mxu0 0.0
    %739 = vmatpush1.msra.mxu0 0.0
    %740 = vmatprep.subr.mxu0 0.0
    %741 = vmatpush1.msra.mxu0 0.0
    %742 = vmatprep.subr.mxu0 0.0
    %743 = vmatpush1.msra.mxu0 0.0
    %744 = vmatprep.subr.mxu0 0.0
    %745 = vmatpush1.msra.mxu0 0.0
    %746 = vmatprep.subr.mxu0 0.0
    %747 = vmatpush1.msra.mxu0 0.0
    %748 = vmatprep.subr.mxu0 0.0
    %749 = vmatpush1.msra.mxu0 0.0
    %750 = vmatprep.subr.mxu0 0.0
    %751 = vmatpush1.msra.mxu0 0.0
    %752 = vmatprep.subr.mxu0 0.0
    %753 = vmatpush1.msra.mxu0 0.0
    %754 = vmatprep.subr.mxu0 0.0
    %755 = vmatpush1.msra.mxu0 0.0
    %756 = vmatprep.subr.mxu0 0.0
    %757 = vmatpush1.msra.mxu0 0.0
    %758 = vmatprep.subr.mxu0 0.0
    %759 = vmatpush1.msra.mxu0 0.0
    %760 = vmatprep.subr.mxu0 0.0
    %761 = vmatpush1.msra.mxu0 0.0
    %762 = vmatprep.subr.mxu0 0.0
    %763 = vmatpush1.msra.mxu0 0.0
    %764 = vmatprep.subr.mxu0 0.0
    %765 = vmatpush1.msra.mxu0 0.0
    %766 = vmatprep.subr.mxu0 0.0
    %767 = vmatpush1.msra.mxu0 0.0
    %768 = vmatprep.mubr.f32.mxu0 0.0
    %769 = vmatmul.mubr.f32.gmra.mrb[0].mxu0 %v702
    %v770 = vpop.f32.mrb[0].mxu0
    %v771 = vadd.f32 0.0, %v770
    %v772 = vpop.f32.mrb[0].mxu0
    %v773 = vadd.f32 0.0, %v772
    %774 = vdwg.mxu0
    %775 = vmatprep.subr.mxu0 %v667
    %776 = vmatpush1.msra.mxu0 %v666
    %777 = vmatprep.subr.mxu0 %v671
    %778 = vmatpush1.msra.mxu0 %v670
    %779 = vmatprep.subr.mxu0 %v675
    %780 = vmatpush1.msra.mxu0 %v674
    %781 = vmatprep.subr.mxu0 %v679
    %782 = vmatpush1.msra.mxu0 %v678
    %783 = vmatprep.subr.mxu0 %v683
    %784 = vmatpush1.msra.mxu0 %v682
    %785 = vmatprep.subr.mxu0 %v687
    %786 = vmatpush1.msra.mxu0 %v686
    %787 = vmatprep.subr.mxu0 %v691
    %788 = vmatpush1.msra.mxu0 %v690
    %789 = vmatprep.subr.mxu0 %v695
    %790 = vmatpush1.msra.mxu0 %v694
    %791 = vmatprep.subr.mxu0 0.0
    %792 = vmatpush1.msra.mxu0 0.0
    %793 = vmatprep.subr.mxu0 0.0
    %794 = vmatpush1.msra.mxu0 0.0
    %795 = vmatprep.subr.mxu0 0.0
    %796 = vmatpush1.msra.mxu0 0.0
    %797 = vmatprep.subr.mxu0 0.0
    %798 = vmatpush1.msra.mxu0 0.0
    %799 = vmatprep.subr.mxu0 0.0
    %800 = vmatpush1.msra.mxu0 0.0
    %801 = vmatprep.subr.mxu0 0.0
    %802 = vmatpush1.msra.mxu0 0.0
    %803 = vmatprep.subr.mxu0 0.0
    %804 = vmatpush1.msra.mxu0 0.0
    %805 = vmatprep.subr.mxu0 0.0
    %806 = vmatpush1.msra.mxu0 0.0
    %807 = vmatprep.subr.mxu0 0.0
    %808 = vmatpush1.msra.mxu0 0.0
    %809 = vmatprep.subr.mxu0 0.0
    %810 = vmatpush1.msra.mxu0 0.0
    %811 = vmatprep.subr.mxu0 0.0
    %812 = vmatpush1.msra.mxu0 0.0
    %813 = vmatprep.subr.mxu0 0.0
    %814 = vmatpush1.msra.mxu0 0.0
    %815 = vmatprep.subr.mxu0 0.0
    %816 = vmatpush1.msra.mxu0 0.0
    %817 = vmatprep.subr.mxu0 0.0
    %818 = vmatpush1.msra.mxu0 0.0
    %819 = vmatprep.subr.mxu0 0.0
    %820 = vmatpush1.msra.mxu0 0.0
    %821 = vmatprep.subr.mxu0 0.0
    %822 = vmatpush1.msra.mxu0 0.0
    %823 = vmatprep.subr.mxu0 0.0
    %824 = vmatpush1.msra.mxu0 0.0
    %825 = vmatprep.subr.mxu0 0.0
    %826 = vmatpush1.msra.mxu0 0.0
    %827 = vmatprep.subr.mxu0 0.0
    %828 = vmatpush1.msra.mxu0 0.0
    %829 = vmatprep.subr.mxu0 0.0
    %830 = vmatpush1.msra.mxu0 0.0
    %831 = vmatprep.subr.mxu0 0.0
    %832 = vmatpush1.msra.mxu0 0.0
    %833 = vmatprep.subr.mxu0 0.0
    %834 = vmatpush1.msra.mxu0 0.0
    %835 = vmatprep.subr.mxu0 0.0
    %836 = vmatpush1.msra.mxu0 0.0
    %837 = vmatprep.subr.mxu0 0.0
    %838 = vmatpush1.msra.mxu0 0.0
    %839 = vmatprep.mubr.f32.mxu0 0.0
    %840 = vmatmul.mubr.f32.gmra.mrb[0].mxu0 %v702
    %v841 = vpop.f32.mrb[0].mxu0
    %v842 = vadd.f32 0.0, %v841
    %v843 = vpop.f32.mrb[0].mxu0
    %v844 = vadd.f32 0.0, %v843
    %845 = vdwg.mxu0
    %v846 = vadd.f32 %v542, %v771
    %v847 = vadd.f32 %v543, %v773
    %v848 = vadd.f32 %v544, %v842
    %v849 = vadd.f32 %v545, %v844
    %850 = vmatprep.subr.mxu0 %v191
    %851 = vmatpush1.msra.mxu0 %v190
    %852 = vmatprep.subr.mxu0 %v193
    %853 = vmatpush1.msra.mxu0 %v192
    %854 = vmatprep.subr.mxu0 %v195
    %855 = vmatpush1.msra.mxu0 %v194
    %856 = vmatprep.subr.mxu0 %v197
    %857 = vmatpush1.msra.mxu0 %v196
    %858 = vmatprep.subr.mxu0 %v199
    %859 = vmatpush1.msra.mxu0 %v198
    %860 = vmatprep.subr.mxu0 %v201
    %861 = vmatpush1.msra.mxu0 %v200
    %862 = vmatprep.subr.mxu0 %v203
    %863 = vmatpush1.msra.mxu0 %v202
    %864 = vmatprep.subr.mxu0 %v205
    %865 = vmatpush1.msra.mxu0 %v204
    %866 = vmatprep.subr.mxu0 0.0
    %867 = vmatpush1.msra.mxu0 0.0
    %868 = vmatprep.subr.mxu0 0.0
    %869 = vmatpush1.msra.mxu0 0.0
    %870 = vmatprep.subr.mxu0 0.0
    %871 = vmatpush1.msra.mxu0 0.0
    %872 = vmatprep.subr.mxu0 0.0
    %873 = vmatpush1.msra.mxu0 0.0
    %874 = vmatprep.subr.mxu0 0.0
    %875 = vmatpush1.msra.mxu0 0.0
    %876 = vmatprep.subr.mxu0 0.0
    %877 = vmatpush1.msra.mxu0 0.0
    %878 = vmatprep.subr.mxu0 0.0
    %879 = vmatpush1.msra.mxu0 0.0
    %880 = vmatprep.subr.mxu0 0.0
    %881 = vmatpush1.msra.mxu0 0.0
    %882 = vmatprep.subr.mxu0 0.0
    %883 = vmatpush1.msra.mxu0 0.0
    %884 = vmatprep.subr.mxu0 0.0
    %885 = vmatpush1.msra.mxu0 0.0
    %886 = vmatprep.subr.mxu0 0.0
    %887 = vmatpush1.msra.mxu0 0.0
    %888 = vmatprep.subr.mxu0 0.0
    %889 = vmatpush1.msra.mxu0 0.0
    %890 = vmatprep.subr.mxu0 0.0
    %891 = vmatpush1.msra.mxu0 0.0
    %892 = vmatprep.subr.mxu0 0.0
    %893 = vmatpush1.msra.mxu0 0.0
    %894 = vmatprep.subr.mxu0 0.0
    %895 = vmatpush1.msra.mxu0 0.0
    %896 = vmatprep.subr.mxu0 0.0
    %897 = vmatpush1.msra.mxu0 0.0
    %898 = vmatprep.subr.mxu0 0.0
    %899 = vmatpush1.msra.mxu0 0.0
    %900 = vmatprep.subr.mxu0 0.0
    %901 = vmatpush1.msra.mxu0 0.0
    %902 = vmatprep.subr.mxu0 0.0
    %903 = vmatpush1.msra.mxu0 0.0
    %904 = vmatprep.subr.mxu0 0.0
    %905 = vmatpush1.msra.mxu0 0.0
    %906 = vmatprep.subr.mxu0 0.0
    %907 = vmatpush1.msra.mxu0 0.0
    %908 = vmatprep.subr.mxu0 0.0
    %909 = vmatpush1.msra.mxu0 0.0
    %910 = vmatprep.subr.mxu0 0.0
    %911 = vmatpush1.msra.mxu0 0.0
    %912 = vmatprep.subr.mxu0 0.0
    %913 = vmatpush1.msra.mxu0 0.0
    %914 = vmatprep.mubr.f32.mxu0 0.0
    %915 = vmatmul.mubr.f32.gmra.mrb[0].mxu0 %v702
    %v916 = vpop.f32.mrb[0].mxu0
    %v917 = vadd.f32 %v211, %v916
    %v918 = vpop.f32.mrb[0].mxu0
    %v919 = vadd.f32 %v215, %v918
    %920 = vdwg.mxu0
    %v922 = vrot.slane %v917, 6
    %v923 = vrot.slane %v917, 7
    %v926 = vadd.f32 %v180, %v922
    %v927 = vadd.f32 %v186, %v923
    %v928 = vxor.u32 %v926, 2147483648
    %v929 = vxor.u32 %v927, 2147483648
    %v930 = vmul.f32 %v928, 1.442695
    %v931 = vpow.pop %v930
    %v932 = vmul.f32 %v929, 1.442695
    %v933 = vpow.pop %v932
    %v934 = vadd.f32 %v931, 1.0
    %v935 = vadd.f32 %v933, 1.0
    %v936 = vrcp.pop %v934
    %v937 = vmul.f32 1.0, %v936
    %v938 = vrcp.pop %v935
    %v939 = vmul.f32 1.0, %v938
    %v941 = vrot.slane %v919, 6
    %v942 = vrot.slane %v919, 7
    %v945 = vmul.f32 %v937, %v941
    %v946 = vmul.f32 %v939, %v942
    %v947 = vadd.f32 %v182, %v945
    %v948 = vadd.f32 %v188, %v946
    %v949 = vtanh.pop %v947
    %v950 = vtanh.pop %v948
    %v951 = vsub.f32 1.0, %v937
    %v952 = vsub.f32 1.0, %v939
    %955 = vrot.lane.b32.xlu0 %v949, 64
    %v956 = vpop.permute.xlu0 %955
    %957 = vrot.lane.b32.xlu0 %v950, 64
    %v958 = vpop.permute.xlu0 %957
    %v961 = vmul.f32 %v951, %v956
    %v962 = vmul.f32 %v952, %v958
    %v963 = vrot.slane %v662, 7
    %v964 = vrot.slane %v663, 7
    %v967 = vmul.f32 %v937, %v963
    %v968 = vmul.f32 %v939, %v964
    %v969 = vadd.f32 %v961, %v967
    %v970 = vadd.f32 %v962, %v968
    %v971 = vld [vmem:[%s5 + $0x200] sm:$0xff]
    %v972 = vld [vmem:[%s5 + $0x208] sm:$0xff]
    %v973 = vld [vmem:[%s5 + $0x210] sm:$0xff]
    %v974 = vld [vmem:[%s5 + $0x218] sm:$0xff]
    %v975 = vld [vmem:[%s5 + $0x220] sm:$0xff]
    %v976 = vld [vmem:[%s5 + $0x228] sm:$0xff]
    %v977 = vld [vmem:[%s5 + $0x230] sm:$0xff]
    %v978 = vld [vmem:[%s5 + $0x238] sm:$0xff]
    %v979 = vld [vmem:[%s5 + $0x240] sm:$0xff]
    %v980 = vld [vmem:[%s5 + $0x248] sm:$0xff]
    %v981 = vld [vmem:[%s5 + $0x250] sm:$0xff]
    %v982 = vld [vmem:[%s5 + $0x258] sm:$0xff]
    %v983 = vld [vmem:[%s5 + $0x260] sm:$0xff]
    %v984 = vld [vmem:[%s5 + $0x268] sm:$0xff]
    %v985 = vld [vmem:[%s5 + $0x270] sm:$0xff]
    %v986 = vld [vmem:[%s5 + $0x278] sm:$0xff]
    %v987 = vld [vmem:[%s5 + $0x280] sm:$0xff]
    %v988 = vld [vmem:[%s5 + $0x288] sm:$0xff]
    %v989 = vld [vmem:[%s5 + $0x290] sm:$0xff]
    %v990 = vld [vmem:[%s5 + $0x298] sm:$0xff]
    %v991 = vld [vmem:[%s5 + $0x2a0] sm:$0xff]
    %v992 = vld [vmem:[%s5 + $0x2a8] sm:$0xff]
    %v993 = vld [vmem:[%s5 + $0x2b0] sm:$0xff]
    %v994 = vld [vmem:[%s5 + $0x2b8] sm:$0xff]
    %v995 = vld [vmem:[%s5 + $0x2c0] sm:$0xff]
    %v996 = vld [vmem:[%s5 + $0x2c8] sm:$0xff]
    %v997 = vld [vmem:[%s5 + $0x2d0] sm:$0xff]
    %v998 = vld [vmem:[%s5 + $0x2d8] sm:$0xff]
    %v999 = vld [vmem:[%s5 + $0x2e0] sm:$0xff]
    %v1000 = vld [vmem:[%s5 + $0x2e8] sm:$0xff]
    %v1001 = vld [vmem:[%s5 + $0x2f0] sm:$0xff]
    %v1002 = vld [vmem:[%s5 + $0x2f8] sm:$0xff]
    %v1005 = vrot.slane %v969, 2
    %v1006 = vrot.slane %v970, 1
    %v1007 = vsel %vm394, %v1006, %v1005
    %1008 = vrot.lane.b32.xlu0 %v1007, 64
    %v1009 = vpop.permute.xlu0 %1008
    %v1010 = vsel %vm240, %v1009, 0
    %1012 = vmatprep.subr.mxu0 %v972
    %1013 = vmatpush1.msra.mxu0 %v971
    %1014 = vmatprep.subr.mxu0 %v976
    %1015 = vmatpush1.msra.mxu0 %v975
    %1016 = vmatprep.subr.mxu0 %v980
    %1017 = vmatpush1.msra.mxu0 %v979
    %1018 = vmatprep.subr.mxu0 %v984
    %1019 = vmatpush1.msra.mxu0 %v983
    %1020 = vmatprep.subr.mxu0 %v988
    %1021 = vmatpush1.msra.mxu0 %v987
    %1022 = vmatprep.subr.mxu0 %v992
    %1023 = vmatpush1.msra.mxu0 %v991
    %1024 = vmatprep.subr.mxu0 %v996
    %1025 = vmatpush1.msra.mxu0 %v995
    %1026 = vmatprep.subr.mxu0 %v1000
    %1027 = vmatpush1.msra.mxu0 %v999
    %1028 = vmatprep.subr.mxu0 0.0
    %1029 = vmatpush1.msra.mxu0 0.0
    %1030 = vmatprep.subr.mxu0 0.0
    %1031 = vmatpush1.msra.mxu0 0.0
    %1032 = vmatprep.subr.mxu0 0.0
    %1033 = vmatpush1.msra.mxu0 0.0
    %1034 = vmatprep.subr.mxu0 0.0
    %1035 = vmatpush1.msra.mxu0 0.0
    %1036 = vmatprep.subr.mxu0 0.0
    %1037 = vmatpush1.msra.mxu0 0.0
    %1038 = vmatprep.subr.mxu0 0.0
    %1039 = vmatpush1.msra.mxu0 0.0
    %1040 = vmatprep.subr.mxu0 0.0
    %1041 = vmatpush1.msra.mxu0 0.0
    %1042 = vmatprep.subr.mxu0 0.0
    %1043 = vmatpush1.msra.mxu0 0.0
    %1044 = vmatprep.subr.mxu0 0.0
    %1045 = vmatpush1.msra.mxu0 0.0
    %1046 = vmatprep.subr.mxu0 0.0
    %1047 = vmatpush1.msra.mxu0 0.0
    %1048 = vmatprep.subr.mxu0 0.0
    %1049 = vmatpush1.msra.mxu0 0.0
    %1050 = vmatprep.subr.mxu0 0.0
    %1051 = vmatpush1.msra.mxu0 0.0
    %1052 = vmatprep.subr.mxu0 0.0
    %1053 = vmatpush1.msra.mxu0 0.0
    %1054 = vmatprep.subr.mxu0 0.0
    %1055 = vmatpush1.msra.mxu0 0.0
    %1056 = vmatprep.subr.mxu0 0.0
    %1057 = vmatpush1.msra.mxu0 0.0
    %1058 = vmatprep.subr.mxu0 0.0
    %1059 = vmatpush1.msra.mxu0 0.0
    %1060 = vmatprep.subr.mxu0 0.0
    %1061 = vmatpush1.msra.mxu0 0.0
    %1062 = vmatprep.subr.mxu0 0.0
    %1063 = vmatpush1.msra.mxu0 0.0
    %1064 = vmatprep.subr.mxu0 0.0
    %1065 = vmatpush1.msra.mxu0 0.0
    %1066 = vmatprep.subr.mxu0 0.0
    %1067 = vmatpush1.msra.mxu0 0.0
    %1068 = vmatprep.subr.mxu0 0.0
    %1069 = vmatpush1.msra.mxu0 0.0
    %1070 = vmatprep.subr.mxu0 0.0
    %1071 = vmatpush1.msra.mxu0 0.0
    %1072 = vmatprep.subr.mxu0 0.0
    %1073 = vmatpush1.msra.mxu0 0.0
    %1074 = vmatprep.subr.mxu0 0.0
    %1075 = vmatpush1.msra.mxu0 0.0
    %1076 = vmatprep.mubr.f32.mxu0 0.0
    %1077 = vmatmul.mubr.f32.gmra.mrb[0].mxu0 %v1010
    %v1078 = vpop.f32.mrb[0].mxu0
    %v1079 = vadd.f32 0.0, %v1078
    %v1080 = vpop.f32.mrb[0].mxu0
    %v1081 = vadd.f32 0.0, %v1080
    %1082 = vdwg.mxu0
    %1083 = vmatprep.subr.mxu0 %v974
    %1084 = vmatpush1.msra.mxu0 %v973
    %1085 = vmatprep.subr.mxu0 %v978
    %1086 = vmatpush1.msra.mxu0 %v977
    %1087 = vmatprep.subr.mxu0 %v982
    %1088 = vmatpush1.msra.mxu0 %v981
    %1089 = vmatprep.subr.mxu0 %v986
    %1090 = vmatpush1.msra.mxu0 %v985
    %1091 = vmatprep.subr.mxu0 %v990
    %1092 = vmatpush1.msra.mxu0 %v989
    %1093 = vmatprep.subr.mxu0 %v994
    %1094 = vmatpush1.msra.mxu0 %v993
    %1095 = vmatprep.subr.mxu0 %v998
    %1096 = vmatpush1.msra.mxu0 %v997
    %1097 = vmatprep.subr.mxu0 %v1002
    %1098 = vmatpush1.msra.mxu0 %v1001
    %1099 = vmatprep.subr.mxu0 0.0
    %1100 = vmatpush1.msra.mxu0 0.0
    %1101 = vmatprep.subr.mxu0 0.0
    %1102 = vmatpush1.msra.mxu0 0.0
    %1103 = vmatprep.subr.mxu0 0.0
    %1104 = vmatpush1.msra.mxu0 0.0
    %1105 = vmatprep.subr.mxu0 0.0
    %1106 = vmatpush1.msra.mxu0 0.0
    %1107 = vmatprep.subr.mxu0 0.0
    %1108 = vmatpush1.msra.mxu0 0.0
    %1109 = vmatprep.subr.mxu0 0.0
    %1110 = vmatpush1.msra.mxu0 0.0
    %1111 = vmatprep.subr.mxu0 0.0
    %1112 = vmatpush1.msra.mxu0 0.0
    %1113 = vmatprep.subr.mxu0 0.0
    %1114 = vmatpush1.msra.mxu0 0.0
    %1115 = vmatprep.subr.mxu0 0.0
    %1116 = vmatpush1.msra.mxu0 0.0
    %1117 = vmatprep.subr.mxu0 0.0
    %1118 = vmatpush1.msra.mxu0 0.0
    %1119 = vmatprep.subr.mxu0 0.0
    %1120 = vmatpush1.msra.mxu0 0.0
    %1121 = vmatprep.subr.mxu0 0.0
    %1122 = vmatpush1.msra.mxu0 0.0
    %1123 = vmatprep.subr.mxu0 0.0
    %1124 = vmatpush1.msra.mxu0 0.0
    %1125 = vmatprep.subr.mxu0 0.0
    %1126 = vmatpush1.msra.mxu0 0.0
    %1127 = vmatprep.subr.mxu0 0.0
    %1128 = vmatpush1.msra.mxu0 0.0
    %1129 = vmatprep.subr.mxu0 0.0
    %1130 = vmatpush1.msra.mxu0 0.0
    %1131 = vmatprep.subr.mxu0 0.0
    %1132 = vmatpush1.msra.mxu0 0.0
    %1133 = vmatprep.subr.mxu0 0.0
    %1134 = vmatpush1.msra.mxu0 0.0
    %1135 = vmatprep.subr.mxu0 0.0
    %1136 = vmatpush1.msra.mxu0 0.0
    %1137 = vmatprep.subr.mxu0 0.0
    %1138 = vmatpush1.msra.mxu0 0.0
    %1139 = vmatprep.subr.mxu0 0.0
    %1140 = vmatpush1.msra.mxu0 0.0
    %1141 = vmatprep.subr.mxu0 0.0
    %1142 = vmatpush1.msra.mxu0 0.0
    %1143 = vmatprep.subr.mxu0 0.0
    %1144 = vmatpush1.msra.mxu0 0.0
    %1145 = vmatprep.subr.mxu0 0.0
    %1146 = vmatpush1.msra.mxu0 0.0
    %1147 = vmatprep.mubr.f32.mxu0 0.0
    %1148 = vmatmul.mubr.f32.gmra.mrb[0].mxu0 %v1010
    %v1149 = vpop.f32.mrb[0].mxu0
    %v1150 = vadd.f32 0.0, %v1149
    %v1151 = vpop.f32.mrb[0].mxu0
    %v1152 = vadd.f32 0.0, %v1151
    %1153 = vdwg.mxu0
    %v1154 = vadd.f32 %v846, %v1079
    %v1155 = vadd.f32 %v847, %v1081
    %v1156 = vadd.f32 %v848, %v1150
    %v1157 = vadd.f32 %v849, %v1152
    %1158 = vmatprep.subr.mxu0 %v191
    %1159 = vmatpush1.msra.mxu0 %v190
    %1160 = vmatprep.subr.mxu0 %v193
    %1161 = vmatpush1.msra.mxu0 %v192
    %1162 = vmatprep.subr.mxu0 %v195
    %1163 = vmatpush1.msra.mxu0 %v194
    %1164 = vmatprep.subr.mxu0 %v197
    %1165 = vmatpush1.msra.mxu0 %v196
    %1166 = vmatprep.subr.mxu0 %v199
    %1167 = vmatpush1.msra.mxu0 %v198
    %1168 = vmatprep.subr.mxu0 %v201
    %1169 = vmatpush1.msra.mxu0 %v200
    %1170 = vmatprep.subr.mxu0 %v203
    %1171 = vmatpush1.msra.mxu0 %v202
    %1172 = vmatprep.subr.mxu0 %v205
    %1173 = vmatpush1.msra.mxu0 %v204
    %1174 = vmatprep.subr.mxu0 0.0
    %1175 = vmatpush1.msra.mxu0 0.0
    %1176 = vmatprep.subr.mxu0 0.0
    %1177 = vmatpush1.msra.mxu0 0.0
    %1178 = vmatprep.subr.mxu0 0.0
    %1179 = vmatpush1.msra.mxu0 0.0
    %1180 = vmatprep.subr.mxu0 0.0
    %1181 = vmatpush1.msra.mxu0 0.0
    %1182 = vmatprep.subr.mxu0 0.0
    %1183 = vmatpush1.msra.mxu0 0.0
    %1184 = vmatprep.subr.mxu0 0.0
    %1185 = vmatpush1.msra.mxu0 0.0
    %1186 = vmatprep.subr.mxu0 0.0
    %1187 = vmatpush1.msra.mxu0 0.0
    %1188 = vmatprep.subr.mxu0 0.0
    %1189 = vmatpush1.msra.mxu0 0.0
    %1190 = vmatprep.subr.mxu0 0.0
    %1191 = vmatpush1.msra.mxu0 0.0
    %1192 = vmatprep.subr.mxu0 0.0
    %1193 = vmatpush1.msra.mxu0 0.0
    %1194 = vmatprep.subr.mxu0 0.0
    %1195 = vmatpush1.msra.mxu0 0.0
    %1196 = vmatprep.subr.mxu0 0.0
    %1197 = vmatpush1.msra.mxu0 0.0
    %1198 = vmatprep.subr.mxu0 0.0
    %1199 = vmatpush1.msra.mxu0 0.0
    %1200 = vmatprep.subr.mxu0 0.0
    %1201 = vmatpush1.msra.mxu0 0.0
    %1202 = vmatprep.subr.mxu0 0.0
    %1203 = vmatpush1.msra.mxu0 0.0
    %1204 = vmatprep.subr.mxu0 0.0
    %1205 = vmatpush1.msra.mxu0 0.0
    %1206 = vmatprep.subr.mxu0 0.0
    %1207 = vmatpush1.msra.mxu0 0.0
    %1208 = vmatprep.subr.mxu0 0.0
    %1209 = vmatpush1.msra.mxu0 0.0
    %1210 = vmatprep.subr.mxu0 0.0
    %1211 = vmatpush1.msra.mxu0 0.0
    %1212 = vmatprep.subr.mxu0 0.0
    %1213 = vmatpush1.msra.mxu0 0.0
    %1214 = vmatprep.subr.mxu0 0.0
    %1215 = vmatpush1.msra.mxu0 0.0
    %1216 = vmatprep.subr.mxu0 0.0
    %1217 = vmatpush1.msra.mxu0 0.0
    %1218 = vmatprep.subr.mxu0 0.0
    %1219 = vmatpush1.msra.mxu0 0.0
    %1220 = vmatprep.subr.mxu0 0.0
    %1221 = vmatpush1.msra.mxu0 0.0
    %1222 = vmatprep.mubr.f32.mxu0 0.0
    %1223 = vmatmul.mubr.f32.gmra.mrb[0].mxu0 %v1010
    %v1224 = vpop.f32.mrb[0].mxu0
    %v1225 = vadd.f32 %v211, %v1224
    %v1226 = vpop.f32.mrb[0].mxu0
    %v1227 = vadd.f32 %v215, %v1226
    %1228 = vdwg.mxu0
    %v1230 = vrot.slane %v1225, 5
    %v1231 = vrot.slane %v1225, 6
    %v1234 = vadd.f32 %v180, %v1230
    %v1235 = vadd.f32 %v186, %v1231
    %v1236 = vxor.u32 %v1234, 2147483648
    %v1237 = vxor.u32 %v1235, 2147483648
    %v1238 = vmul.f32 %v1236, 1.442695
    %v1239 = vpow.pop %v1238
    %v1240 = vmul.f32 %v1237, 1.442695
    %v1241 = vpow.pop %v1240
    %v1242 = vadd.f32 %v1239, 1.0
    %v1243 = vadd.f32 %v1241, 1.0
    %v1244 = vrcp.pop %v1242
    %v1245 = vmul.f32 1.0, %v1244
    %v1246 = vrcp.pop %v1243
    %v1247 = vmul.f32 1.0, %v1246
    %v1249 = vrot.slane %v1227, 5
    %v1250 = vrot.slane %v1227, 6
    %v1253 = vmul.f32 %v1245, %v1249
    %v1254 = vmul.f32 %v1247, %v1250
    %v1255 = vadd.f32 %v182, %v1253
    %v1256 = vadd.f32 %v188, %v1254
    %v1257 = vtanh.pop %v1255
    %v1258 = vtanh.pop %v1256
    %v1259 = vsub.f32 1.0, %v1245
    %v1260 = vsub.f32 1.0, %v1247
    %1263 = vrot.lane.b32.xlu0 %v1257, 64
    %v1264 = vpop.permute.xlu0 %1263
    %1265 = vrot.lane.b32.xlu0 %v1258, 64
    %v1266 = vpop.permute.xlu0 %1265
    %v1269 = vmul.f32 %v1259, %v1264
    %v1270 = vmul.f32 %v1260, %v1266
    %v1271 = vrot.slane %v969, 7
    %v1272 = vrot.slane %v970, 7
    %v1275 = vmul.f32 %v1245, %v1271
    %v1276 = vmul.f32 %v1247, %v1272
    %v1277 = vadd.f32 %v1269, %v1275
    %v1278 = vadd.f32 %v1270, %v1276
    %v1279 = vld [vmem:[%s5 + $0x300] sm:$0xff]
    %v1280 = vld [vmem:[%s5 + $0x308] sm:$0xff]
    %v1281 = vld [vmem:[%s5 + $0x310] sm:$0xff]
    %v1282 = vld [vmem:[%s5 + $0x318] sm:$0xff]
    %v1283 = vld [vmem:[%s5 + $0x320] sm:$0xff]
    %v1284 = vld [vmem:[%s5 + $0x328] sm:$0xff]
    %v1285 = vld [vmem:[%s5 + $0x330] sm:$0xff]
    %v1286 = vld [vmem:[%s5 + $0x338] sm:$0xff]
    %v1287 = vld [vmem:[%s5 + $0x340] sm:$0xff]
    %v1288 = vld [vmem:[%s5 + $0x348] sm:$0xff]
    %v1289 = vld [vmem:[%s5 + $0x350] sm:$0xff]
    %v1290 = vld [vmem:[%s5 + $0x358] sm:$0xff]
    %v1291 = vld [vmem:[%s5 + $0x360] sm:$0xff]
    %v1292 = vld [vmem:[%s5 + $0x368] sm:$0xff]
    %v1293 = vld [vmem:[%s5 + $0x370] sm:$0xff]
    %v1294 = vld [vmem:[%s5 + $0x378] sm:$0xff]
    %v1295 = vld [vmem:[%s5 + $0x380] sm:$0xff]
    %v1296 = vld [vmem:[%s5 + $0x388] sm:$0xff]
    %v1297 = vld [vmem:[%s5 + $0x390] sm:$0xff]
    %v1298 = vld [vmem:[%s5 + $0x398] sm:$0xff]
    %v1299 = vld [vmem:[%s5 + $0x3a0] sm:$0xff]
    %v1300 = vld [vmem:[%s5 + $0x3a8] sm:$0xff]
    %v1301 = vld [vmem:[%s5 + $0x3b0] sm:$0xff]
    %v1302 = vld [vmem:[%s5 + $0x3b8] sm:$0xff]
    %v1303 = vld [vmem:[%s5 + $0x3c0] sm:$0xff]
    %v1304 = vld [vmem:[%s5 + $0x3c8] sm:$0xff]
    %v1305 = vld [vmem:[%s5 + $0x3d0] sm:$0xff]
    %v1306 = vld [vmem:[%s5 + $0x3d8] sm:$0xff]
    %v1307 = vld [vmem:[%s5 + $0x3e0] sm:$0xff]
    %v1308 = vld [vmem:[%s5 + $0x3e8] sm:$0xff]
    %v1309 = vld [vmem:[%s5 + $0x3f0] sm:$0xff]
    %v1310 = vld [vmem:[%s5 + $0x3f8] sm:$0xff]
    %v1313 = vrot.slane %v1277, 3
    %v1314 = vrot.slane %v1278, 2
    %v1315 = vsel %vm394, %v1314, %v1313
    %1316 = vrot.lane.b32.xlu0 %v1315, 64
    %v1317 = vpop.permute.xlu0 %1316
    %v1318 = vsel %vm240, %v1317, 0
    %1320 = vmatprep.subr.mxu0 %v1280
    %1321 = vmatpush1.msra.mxu0 %v1279
    %1322 = vmatprep.subr.mxu0 %v1284
    %1323 = vmatpush1.msra.mxu0 %v1283
    %1324 = vmatprep.subr.mxu0 %v1288
    %1325 = vmatpush1.msra.mxu0 %v1287
    %1326 = vmatprep.subr.mxu0 %v1292
    %1327 = vmatpush1.msra.mxu0 %v1291
    %1328 = vmatprep.subr.mxu0 %v1296
    %1329 = vmatpush1.msra.mxu0 %v1295
    %1330 = vmatprep.subr.mxu0 %v1300
    %1331 = vmatpush1.msra.mxu0 %v1299
    %1332 = vmatprep.subr.mxu0 %v1304
    %1333 = vmatpush1.msra.mxu0 %v1303
    %1334 = vmatprep.subr.mxu0 %v1308
    %1335 = vmatpush1.msra.mxu0 %v1307
    %1336 = vmatprep.subr.mxu0 0.0
    %1337 = vmatpush1.msra.mxu0 0.0
    %1338 = vmatprep.subr.mxu0 0.0
    %1339 = vmatpush1.msra.mxu0 0.0
    %1340 = vmatprep.subr.mxu0 0.0
    %1341 = vmatpush1.msra.mxu0 0.0
    %1342 = vmatprep.subr.mxu0 0.0
    %1343 = vmatpush1.msra.mxu0 0.0
    %1344 = vmatprep.subr.mxu0 0.0
    %1345 = vmatpush1.msra.mxu0 0.0
    %1346 = vmatprep.subr.mxu0 0.0
    %1347 = vmatpush1.msra.mxu0 0.0
    %1348 = vmatprep.subr.mxu0 0.0
    %1349 = vmatpush1.msra.mxu0 0.0
    %1350 = vmatprep.subr.mxu0 0.0
    %1351 = vmatpush1.msra.mxu0 0.0
    %1352 = vmatprep.subr.mxu0 0.0
    %1353 = vmatpush1.msra.mxu0 0.0
    %1354 = vmatprep.subr.mxu0 0.0
    %1355 = vmatpush1.msra.mxu0 0.0
    %1356 = vmatprep.subr.mxu0 0.0
    %1357 = vmatpush1.msra.mxu0 0.0
    %1358 = vmatprep.subr.mxu0 0.0
    %1359 = vmatpush1.msra.mxu0 0.0
    %1360 = vmatprep.subr.mxu0 0.0
    %1361 = vmatpush1.msra.mxu0 0.0
    %1362 = vmatprep.subr.mxu0 0.0
    %1363 = vmatpush1.msra.mxu0 0.0
    %1364 = vmatprep.subr.mxu0 0.0
    %1365 = vmatpush1.msra.mxu0 0.0
    %1366 = vmatprep.subr.mxu0 0.0
    %1367 = vmatpush1.msra.mxu0 0.0
    %1368 = vmatprep.subr.mxu0 0.0
    %1369 = vmatpush1.msra.mxu0 0.0
    %1370 = vmatprep.subr.mxu0 0.0
    %1371 = vmatpush1.msra.mxu0 0.0
    %1372 = vmatprep.subr.mxu0 0.0
    %1373 = vmatpush1.msra.mxu0 0.0
    %1374 = vmatprep.subr.mxu0 0.0
    %1375 = vmatpush1.msra.mxu0 0.0
    %1376 = vmatprep.subr.mxu0 0.0
    %1377 = vmatpush1.msra.mxu0 0.0
    %1378 = vmatprep.subr.mxu0 0.0
    %1379 = vmatpush1.msra.mxu0 0.0
    %1380 = vmatprep.subr.mxu0 0.0
    %1381 = vmatpush1.msra.mxu0 0.0
    %1382 = vmatprep.subr.mxu0 0.0
    %1383 = vmatpush1.msra.mxu0 0.0
    %1384 = vmatprep.mubr.f32.mxu0 0.0
    %1385 = vmatmul.mubr.f32.gmra.mrb[0].mxu0 %v1318
    %v1386 = vpop.f32.mrb[0].mxu0
    %v1387 = vadd.f32 0.0, %v1386
    %v1388 = vpop.f32.mrb[0].mxu0
    %v1389 = vadd.f32 0.0, %v1388
    %1390 = vdwg.mxu0
    %1391 = vmatprep.subr.mxu0 %v1282
    %1392 = vmatpush1.msra.mxu0 %v1281
    %1393 = vmatprep.subr.mxu0 %v1286
    %1394 = vmatpush1.msra.mxu0 %v1285
    %1395 = vmatprep.subr.mxu0 %v1290
    %1396 = vmatpush1.msra.mxu0 %v1289
    %1397 = vmatprep.subr.mxu0 %v1294
    %1398 = vmatpush1.msra.mxu0 %v1293
    %1399 = vmatprep.subr.mxu0 %v1298
    %1400 = vmatpush1.msra.mxu0 %v1297
    %1401 = vmatprep.subr.mxu0 %v1302
    %1402 = vmatpush1.msra.mxu0 %v1301
    %1403 = vmatprep.subr.mxu0 %v1306
    %1404 = vmatpush1.msra.mxu0 %v1305
    %1405 = vmatprep.subr.mxu0 %v1310
    %1406 = vmatpush1.msra.mxu0 %v1309
    %1407 = vmatprep.subr.mxu0 0.0
    %1408 = vmatpush1.msra.mxu0 0.0
    %1409 = vmatprep.subr.mxu0 0.0
    %1410 = vmatpush1.msra.mxu0 0.0
    %1411 = vmatprep.subr.mxu0 0.0
    %1412 = vmatpush1.msra.mxu0 0.0
    %1413 = vmatprep.subr.mxu0 0.0
    %1414 = vmatpush1.msra.mxu0 0.0
    %1415 = vmatprep.subr.mxu0 0.0
    %1416 = vmatpush1.msra.mxu0 0.0
    %1417 = vmatprep.subr.mxu0 0.0
    %1418 = vmatpush1.msra.mxu0 0.0
    %1419 = vmatprep.subr.mxu0 0.0
    %1420 = vmatpush1.msra.mxu0 0.0
    %1421 = vmatprep.subr.mxu0 0.0
    %1422 = vmatpush1.msra.mxu0 0.0
    %1423 = vmatprep.subr.mxu0 0.0
    %1424 = vmatpush1.msra.mxu0 0.0
    %1425 = vmatprep.subr.mxu0 0.0
    %1426 = vmatpush1.msra.mxu0 0.0
    %1427 = vmatprep.subr.mxu0 0.0
    %1428 = vmatpush1.msra.mxu0 0.0
    %1429 = vmatprep.subr.mxu0 0.0
    %1430 = vmatpush1.msra.mxu0 0.0
    %1431 = vmatprep.subr.mxu0 0.0
    %1432 = vmatpush1.msra.mxu0 0.0
    %1433 = vmatprep.subr.mxu0 0.0
    %1434 = vmatpush1.msra.mxu0 0.0
    %1435 = vmatprep.subr.mxu0 0.0
    %1436 = vmatpush1.msra.mxu0 0.0
    %1437 = vmatprep.subr.mxu0 0.0
    %1438 = vmatpush1.msra.mxu0 0.0
    %1439 = vmatprep.subr.mxu0 0.0
    %1440 = vmatpush1.msra.mxu0 0.0
    %1441 = vmatprep.subr.mxu0 0.0
    %1442 = vmatpush1.msra.mxu0 0.0
    %1443 = vmatprep.subr.mxu0 0.0
    %1444 = vmatpush1.msra.mxu0 0.0
    %1445 = vmatprep.subr.mxu0 0.0
    %1446 = vmatpush1.msra.mxu0 0.0
    %1447 = vmatprep.subr.mxu0 0.0
    %1448 = vmatpush1.msra.mxu0 0.0
    %1449 = vmatprep.subr.mxu0 0.0
    %1450 = vmatpush1.msra.mxu0 0.0
    %1451 = vmatprep.subr.mxu0 0.0
    %1452 = vmatpush1.msra.mxu0 0.0
    %1453 = vmatprep.subr.mxu0 0.0
    %1454 = vmatpush1.msra.mxu0 0.0
    %1455 = vmatprep.mubr.f32.mxu0 0.0
    %1456 = vmatmul.mubr.f32.gmra.mrb[0].mxu0 %v1318
    %v1457 = vpop.f32.mrb[0].mxu0
    %v1458 = vadd.f32 0.0, %v1457
    %v1459 = vpop.f32.mrb[0].mxu0
    %v1460 = vadd.f32 0.0, %v1459
    %1461 = vdwg.mxu0
    %v1462 = vadd.f32 %v1154, %v1387
    %v1463 = vadd.f32 %v1155, %v1389
    %v1464 = vadd.f32 %v1156, %v1458
    %v1465 = vadd.f32 %v1157, %v1460
    %1466 = vmatprep.subr.mxu0 %v191
    %1467 = vmatpush1.msra.mxu0 %v190
    %1468 = vmatprep.subr.mxu0 %v193
    %1469 = vmatpush1.msra.mxu0 %v192
    %1470 = vmatprep.subr.mxu0 %v195
    %1471 = vmatpush1.msra.mxu0 %v194
    %1472 = vmatprep.subr.mxu0 %v197
    %1473 = vmatpush1.msra.mxu0 %v196
    %1474 = vmatprep.subr.mxu0 %v199
    %1475 = vmatpush1.msra.mxu0 %v198
    %1476 = vmatprep.subr.mxu0 %v201
    %1477 = vmatpush1.msra.mxu0 %v200
    %1478 = vmatprep.subr.mxu0 %v203
    %1479 = vmatpush1.msra.mxu0 %v202
    %1480 = vmatprep.subr.mxu0 %v205
    %1481 = vmatpush1.msra.mxu0 %v204
    %1482 = vmatprep.subr.mxu0 0.0
    %1483 = vmatpush1.msra.mxu0 0.0
    %1484 = vmatprep.subr.mxu0 0.0
    %1485 = vmatpush1.msra.mxu0 0.0
    %1486 = vmatprep.subr.mxu0 0.0
    %1487 = vmatpush1.msra.mxu0 0.0
    %1488 = vmatprep.subr.mxu0 0.0
    %1489 = vmatpush1.msra.mxu0 0.0
    %1490 = vmatprep.subr.mxu0 0.0
    %1491 = vmatpush1.msra.mxu0 0.0
    %1492 = vmatprep.subr.mxu0 0.0
    %1493 = vmatpush1.msra.mxu0 0.0
    %1494 = vmatprep.subr.mxu0 0.0
    %1495 = vmatpush1.msra.mxu0 0.0
    %1496 = vmatprep.subr.mxu0 0.0
    %1497 = vmatpush1.msra.mxu0 0.0
    %1498 = vmatprep.subr.mxu0 0.0
    %1499 = vmatpush1.msra.mxu0 0.0
    %1500 = vmatprep.subr.mxu0 0.0
    %1501 = vmatpush1.msra.mxu0 0.0
    %1502 = vmatprep.subr.mxu0 0.0
    %1503 = vmatpush1.msra.mxu0 0.0
    %1504 = vmatprep.subr.mxu0 0.0
    %1505 = vmatpush1.msra.mxu0 0.0
    %1506 = vmatprep.subr.mxu0 0.0
    %1507 = vmatpush1.msra.mxu0 0.0
    %1508 = vmatprep.subr.mxu0 0.0
    %1509 = vmatpush1.msra.mxu0 0.0
    %1510 = vmatprep.subr.mxu0 0.0
    %1511 = vmatpush1.msra.mxu0 0.0
    %1512 = vmatprep.subr.mxu0 0.0
    %1513 = vmatpush1.msra.mxu0 0.0
    %1514 = vmatprep.subr.mxu0 0.0
    %1515 = vmatpush1.msra.mxu0 0.0
    %1516 = vmatprep.subr.mxu0 0.0
    %1517 = vmatpush1.msra.mxu0 0.0
    %1518 = vmatprep.subr.mxu0 0.0
    %1519 = vmatpush1.msra.mxu0 0.0
    %1520 = vmatprep.subr.mxu0 0.0
    %1521 = vmatpush1.msra.mxu0 0.0
    %1522 = vmatprep.subr.mxu0 0.0
    %1523 = vmatpush1.msra.mxu0 0.0
    %1524 = vmatprep.subr.mxu0 0.0
    %1525 = vmatpush1.msra.mxu0 0.0
    %1526 = vmatprep.subr.mxu0 0.0
    %1527 = vmatpush1.msra.mxu0 0.0
    %1528 = vmatprep.subr.mxu0 0.0
    %1529 = vmatpush1.msra.mxu0 0.0
    %1530 = vmatprep.mubr.f32.mxu0 0.0
    %1531 = vmatmul.mubr.f32.gmra.mrb[0].mxu0 %v1318
    %v1532 = vpop.f32.mrb[0].mxu0
    %v1533 = vadd.f32 %v211, %v1532
    %v1534 = vpop.f32.mrb[0].mxu0
    %v1535 = vadd.f32 %v215, %v1534
    %1536 = vdwg.mxu0
    %v1538 = vrot.slane %v1533, 4
    %v1539 = vrot.slane %v1533, 5
    %v1542 = vadd.f32 %v180, %v1538
    %v1543 = vadd.f32 %v186, %v1539
    %v1544 = vxor.u32 %v1542, 2147483648
    %v1545 = vxor.u32 %v1543, 2147483648
    %v1546 = vmul.f32 %v1544, 1.442695
    %v1547 = vpow.pop %v1546
    %v1548 = vmul.f32 %v1545, 1.442695
    %v1549 = vpow.pop %v1548
    %v1550 = vadd.f32 %v1547, 1.0
    %v1551 = vadd.f32 %v1549, 1.0
    %v1552 = vrcp.pop %v1550
    %v1553 = vmul.f32 1.0, %v1552
    %v1554 = vrcp.pop %v1551
    %v1555 = vmul.f32 1.0, %v1554
    %v1557 = vrot.slane %v1535, 4
    %v1558 = vrot.slane %v1535, 5
    %v1561 = vmul.f32 %v1553, %v1557
    %v1562 = vmul.f32 %v1555, %v1558
    %v1563 = vadd.f32 %v182, %v1561
    %v1564 = vadd.f32 %v188, %v1562
    %v1565 = vtanh.pop %v1563
    %v1566 = vtanh.pop %v1564
    %v1567 = vsub.f32 1.0, %v1553
    %v1568 = vsub.f32 1.0, %v1555
    %1571 = vrot.lane.b32.xlu0 %v1565, 64
    %v1572 = vpop.permute.xlu0 %1571
    %1573 = vrot.lane.b32.xlu0 %v1566, 64
    %v1574 = vpop.permute.xlu0 %1573
    %v1577 = vmul.f32 %v1567, %v1572
    %v1578 = vmul.f32 %v1568, %v1574
    %v1579 = vrot.slane %v1277, 7
    %v1580 = vrot.slane %v1278, 7
    %v1583 = vmul.f32 %v1553, %v1579
    %v1584 = vmul.f32 %v1555, %v1580
    %v1585 = vadd.f32 %v1577, %v1583
    %v1586 = vadd.f32 %v1578, %v1584
    %v1587 = vld [vmem:[%s5 + $0x400] sm:$0xff]
    %v1588 = vld [vmem:[%s5 + $0x408] sm:$0xff]
    %v1589 = vld [vmem:[%s5 + $0x410] sm:$0xff]
    %v1590 = vld [vmem:[%s5 + $0x418] sm:$0xff]
    %v1591 = vld [vmem:[%s5 + $0x420] sm:$0xff]
    %v1592 = vld [vmem:[%s5 + $0x428] sm:$0xff]
    %v1593 = vld [vmem:[%s5 + $0x430] sm:$0xff]
    %v1594 = vld [vmem:[%s5 + $0x438] sm:$0xff]
    %v1595 = vld [vmem:[%s5 + $0x440] sm:$0xff]
    %v1596 = vld [vmem:[%s5 + $0x448] sm:$0xff]
    %v1597 = vld [vmem:[%s5 + $0x450] sm:$0xff]
    %v1598 = vld [vmem:[%s5 + $0x458] sm:$0xff]
    %v1599 = vld [vmem:[%s5 + $0x460] sm:$0xff]
    %v1600 = vld [vmem:[%s5 + $0x468] sm:$0xff]
    %v1601 = vld [vmem:[%s5 + $0x470] sm:$0xff]
    %v1602 = vld [vmem:[%s5 + $0x478] sm:$0xff]
    %v1603 = vld [vmem:[%s5 + $0x480] sm:$0xff]
    %v1604 = vld [vmem:[%s5 + $0x488] sm:$0xff]
    %v1605 = vld [vmem:[%s5 + $0x490] sm:$0xff]
    %v1606 = vld [vmem:[%s5 + $0x498] sm:$0xff]
    %v1607 = vld [vmem:[%s5 + $0x4a0] sm:$0xff]
    %v1608 = vld [vmem:[%s5 + $0x4a8] sm:$0xff]
    %v1609 = vld [vmem:[%s5 + $0x4b0] sm:$0xff]
    %v1610 = vld [vmem:[%s5 + $0x4b8] sm:$0xff]
    %v1611 = vld [vmem:[%s5 + $0x4c0] sm:$0xff]
    %v1612 = vld [vmem:[%s5 + $0x4c8] sm:$0xff]
    %v1613 = vld [vmem:[%s5 + $0x4d0] sm:$0xff]
    %v1614 = vld [vmem:[%s5 + $0x4d8] sm:$0xff]
    %v1615 = vld [vmem:[%s5 + $0x4e0] sm:$0xff]
    %v1616 = vld [vmem:[%s5 + $0x4e8] sm:$0xff]
    %v1617 = vld [vmem:[%s5 + $0x4f0] sm:$0xff]
    %v1618 = vld [vmem:[%s5 + $0x4f8] sm:$0xff]
    %v1621 = vrot.slane %v1585, 4
    %v1622 = vrot.slane %v1586, 3
    %v1623 = vsel %vm394, %v1622, %v1621
    %1624 = vrot.lane.b32.xlu0 %v1623, 64
    %v1625 = vpop.permute.xlu0 %1624
    %v1626 = vsel %vm240, %v1625, 0
    %1628 = vmatprep.subr.mxu0 %v1588
    %1629 = vmatpush1.msra.mxu0 %v1587
    %1630 = vmatprep.subr.mxu0 %v1592
    %1631 = vmatpush1.msra.mxu0 %v1591
    %1632 = vmatprep.subr.mxu0 %v1596
    %1633 = vmatpush1.msra.mxu0 %v1595
    %1634 = vmatprep.subr.mxu0 %v1600
    %1635 = vmatpush1.msra.mxu0 %v1599
    %1636 = vmatprep.subr.mxu0 %v1604
    %1637 = vmatpush1.msra.mxu0 %v1603
    %1638 = vmatprep.subr.mxu0 %v1608
    %1639 = vmatpush1.msra.mxu0 %v1607
    %1640 = vmatprep.subr.mxu0 %v1612
    %1641 = vmatpush1.msra.mxu0 %v1611
    %1642 = vmatprep.subr.mxu0 %v1616
    %1643 = vmatpush1.msra.mxu0 %v1615
    %1644 = vmatprep.subr.mxu0 0.0
    %1645 = vmatpush1.msra.mxu0 0.0
    %1646 = vmatprep.subr.mxu0 0.0
    %1647 = vmatpush1.msra.mxu0 0.0
    %1648 = vmatprep.subr.mxu0 0.0
    %1649 = vmatpush1.msra.mxu0 0.0
    %1650 = vmatprep.subr.mxu0 0.0
    %1651 = vmatpush1.msra.mxu0 0.0
    %1652 = vmatprep.subr.mxu0 0.0
    %1653 = vmatpush1.msra.mxu0 0.0
    %1654 = vmatprep.subr.mxu0 0.0
    %1655 = vmatpush1.msra.mxu0 0.0
    %1656 = vmatprep.subr.mxu0 0.0
    %1657 = vmatpush1.msra.mxu0 0.0
    %1658 = vmatprep.subr.mxu0 0.0
    %1659 = vmatpush1.msra.mxu0 0.0
    %1660 = vmatprep.subr.mxu0 0.0
    %1661 = vmatpush1.msra.mxu0 0.0
    %1662 = vmatprep.subr.mxu0 0.0
    %1663 = vmatpush1.msra.mxu0 0.0
    %1664 = vmatprep.subr.mxu0 0.0
    %1665 = vmatpush1.msra.mxu0 0.0
    %1666 = vmatprep.subr.mxu0 0.0
    %1667 = vmatpush1.msra.mxu0 0.0
    %1668 = vmatprep.subr.mxu0 0.0
    %1669 = vmatpush1.msra.mxu0 0.0
    %1670 = vmatprep.subr.mxu0 0.0
    %1671 = vmatpush1.msra.mxu0 0.0
    %1672 = vmatprep.subr.mxu0 0.0
    %1673 = vmatpush1.msra.mxu0 0.0
    %1674 = vmatprep.subr.mxu0 0.0
    %1675 = vmatpush1.msra.mxu0 0.0
    %1676 = vmatprep.subr.mxu0 0.0
    %1677 = vmatpush1.msra.mxu0 0.0
    %1678 = vmatprep.subr.mxu0 0.0
    %1679 = vmatpush1.msra.mxu0 0.0
    %1680 = vmatprep.subr.mxu0 0.0
    %1681 = vmatpush1.msra.mxu0 0.0
    %1682 = vmatprep.subr.mxu0 0.0
    %1683 = vmatpush1.msra.mxu0 0.0
    %1684 = vmatprep.subr.mxu0 0.0
    %1685 = vmatpush1.msra.mxu0 0.0
    %1686 = vmatprep.subr.mxu0 0.0
    %1687 = vmatpush1.msra.mxu0 0.0
    %1688 = vmatprep.subr.mxu0 0.0
    %1689 = vmatpush1.msra.mxu0 0.0
    %1690 = vmatprep.subr.mxu0 0.0
    %1691 = vmatpush1.msra.mxu0 0.0
    %1692 = vmatprep.mubr.f32.mxu0 0.0
    %1693 = vmatmul.mubr.f32.gmra.mrb[0].mxu0 %v1626
    %v1694 = vpop.f32.mrb[0].mxu0
    %v1695 = vadd.f32 0.0, %v1694
    %v1696 = vpop.f32.mrb[0].mxu0
    %v1697 = vadd.f32 0.0, %v1696
    %1698 = vdwg.mxu0
    %1699 = vmatprep.subr.mxu0 %v1590
    %1700 = vmatpush1.msra.mxu0 %v1589
    %1701 = vmatprep.subr.mxu0 %v1594
    %1702 = vmatpush1.msra.mxu0 %v1593
    %1703 = vmatprep.subr.mxu0 %v1598
    %1704 = vmatpush1.msra.mxu0 %v1597
    %1705 = vmatprep.subr.mxu0 %v1602
    %1706 = vmatpush1.msra.mxu0 %v1601
    %1707 = vmatprep.subr.mxu0 %v1606
    %1708 = vmatpush1.msra.mxu0 %v1605
    %1709 = vmatprep.subr.mxu0 %v1610
    %1710 = vmatpush1.msra.mxu0 %v1609
    %1711 = vmatprep.subr.mxu0 %v1614
    %1712 = vmatpush1.msra.mxu0 %v1613
    %1713 = vmatprep.subr.mxu0 %v1618
    %1714 = vmatpush1.msra.mxu0 %v1617
    %1715 = vmatprep.subr.mxu0 0.0
    %1716 = vmatpush1.msra.mxu0 0.0
    %1717 = vmatprep.subr.mxu0 0.0
    %1718 = vmatpush1.msra.mxu0 0.0
    %1719 = vmatprep.subr.mxu0 0.0
    %1720 = vmatpush1.msra.mxu0 0.0
    %1721 = vmatprep.subr.mxu0 0.0
    %1722 = vmatpush1.msra.mxu0 0.0
    %1723 = vmatprep.subr.mxu0 0.0
    %1724 = vmatpush1.msra.mxu0 0.0
    %1725 = vmatprep.subr.mxu0 0.0
    %1726 = vmatpush1.msra.mxu0 0.0
    %1727 = vmatprep.subr.mxu0 0.0
    %1728 = vmatpush1.msra.mxu0 0.0
    %1729 = vmatprep.subr.mxu0 0.0
    %1730 = vmatpush1.msra.mxu0 0.0
    %1731 = vmatprep.subr.mxu0 0.0
    %1732 = vmatpush1.msra.mxu0 0.0
    %1733 = vmatprep.subr.mxu0 0.0
    %1734 = vmatpush1.msra.mxu0 0.0
    %1735 = vmatprep.subr.mxu0 0.0
    %1736 = vmatpush1.msra.mxu0 0.0
    %1737 = vmatprep.subr.mxu0 0.0
    %1738 = vmatpush1.msra.mxu0 0.0
    %1739 = vmatprep.subr.mxu0 0.0
    %1740 = vmatpush1.msra.mxu0 0.0
    %1741 = vmatprep.subr.mxu0 0.0
    %1742 = vmatpush1.msra.mxu0 0.0
    %1743 = vmatprep.subr.mxu0 0.0
    %1744 = vmatpush1.msra.mxu0 0.0
    %1745 = vmatprep.subr.mxu0 0.0
    %1746 = vmatpush1.msra.mxu0 0.0
    %1747 = vmatprep.subr.mxu0 0.0
    %1748 = vmatpush1.msra.mxu0 0.0
    %1749 = vmatprep.subr.mxu0 0.0
    %1750 = vmatpush1.msra.mxu0 0.0
    %1751 = vmatprep.subr.mxu0 0.0
    %1752 = vmatpush1.msra.mxu0 0.0
    %1753 = vmatprep.subr.mxu0 0.0
    %1754 = vmatpush1.msra.mxu0 0.0
    %1755 = vmatprep.subr.mxu0 0.0
    %1756 = vmatpush1.msra.mxu0 0.0
    %1757 = vmatprep.subr.mxu0 0.0
    %1758 = vmatpush1.msra.mxu0 0.0
    %1759 = vmatprep.subr.mxu0 0.0
    %1760 = vmatpush1.msra.mxu0 0.0
    %1761 = vmatprep.subr.mxu0 0.0
    %1762 = vmatpush1.msra.mxu0 0.0
    %1763 = vmatprep.mubr.f32.mxu0 0.0
    %1764 = vmatmul.mubr.f32.gmra.mrb[0].mxu0 %v1626
    %v1765 = vpop.f32.mrb[0].mxu0
    %v1766 = vadd.f32 0.0, %v1765
    %v1767 = vpop.f32.mrb[0].mxu0
    %v1768 = vadd.f32 0.0, %v1767
    %1769 = vdwg.mxu0
    %v1770 = vadd.f32 %v1462, %v1695
    %v1771 = vadd.f32 %v1463, %v1697
    %v1772 = vadd.f32 %v1464, %v1766
    %v1773 = vadd.f32 %v1465, %v1768
    %1774 = vmatprep.subr.mxu0 %v191
    %1775 = vmatpush1.msra.mxu0 %v190
    %1776 = vmatprep.subr.mxu0 %v193
    %1777 = vmatpush1.msra.mxu0 %v192
    %1778 = vmatprep.subr.mxu0 %v195
    %1779 = vmatpush1.msra.mxu0 %v194
    %1780 = vmatprep.subr.mxu0 %v197
    %1781 = vmatpush1.msra.mxu0 %v196
    %1782 = vmatprep.subr.mxu0 %v199
    %1783 = vmatpush1.msra.mxu0 %v198
    %1784 = vmatprep.subr.mxu0 %v201
    %1785 = vmatpush1.msra.mxu0 %v200
    %1786 = vmatprep.subr.mxu0 %v203
    %1787 = vmatpush1.msra.mxu0 %v202
    %1788 = vmatprep.subr.mxu0 %v205
    %1789 = vmatpush1.msra.mxu0 %v204
    %1790 = vmatprep.subr.mxu0 0.0
    %1791 = vmatpush1.msra.mxu0 0.0
    %1792 = vmatprep.subr.mxu0 0.0
    %1793 = vmatpush1.msra.mxu0 0.0
    %1794 = vmatprep.subr.mxu0 0.0
    %1795 = vmatpush1.msra.mxu0 0.0
    %1796 = vmatprep.subr.mxu0 0.0
    %1797 = vmatpush1.msra.mxu0 0.0
    %1798 = vmatprep.subr.mxu0 0.0
    %1799 = vmatpush1.msra.mxu0 0.0
    %1800 = vmatprep.subr.mxu0 0.0
    %1801 = vmatpush1.msra.mxu0 0.0
    %1802 = vmatprep.subr.mxu0 0.0
    %1803 = vmatpush1.msra.mxu0 0.0
    %1804 = vmatprep.subr.mxu0 0.0
    %1805 = vmatpush1.msra.mxu0 0.0
    %1806 = vmatprep.subr.mxu0 0.0
    %1807 = vmatpush1.msra.mxu0 0.0
    %1808 = vmatprep.subr.mxu0 0.0
    %1809 = vmatpush1.msra.mxu0 0.0
    %1810 = vmatprep.subr.mxu0 0.0
    %1811 = vmatpush1.msra.mxu0 0.0
    %1812 = vmatprep.subr.mxu0 0.0
    %1813 = vmatpush1.msra.mxu0 0.0
    %1814 = vmatprep.subr.mxu0 0.0
    %1815 = vmatpush1.msra.mxu0 0.0
    %1816 = vmatprep.subr.mxu0 0.0
    %1817 = vmatpush1.msra.mxu0 0.0
    %1818 = vmatprep.subr.mxu0 0.0
    %1819 = vmatpush1.msra.mxu0 0.0
    %1820 = vmatprep.subr.mxu0 0.0
    %1821 = vmatpush1.msra.mxu0 0.0
    %1822 = vmatprep.subr.mxu0 0.0
    %1823 = vmatpush1.msra.mxu0 0.0
    %1824 = vmatprep.subr.mxu0 0.0
    %1825 = vmatpush1.msra.mxu0 0.0
    %1826 = vmatprep.subr.mxu0 0.0
    %1827 = vmatpush1.msra.mxu0 0.0
    %1828 = vmatprep.subr.mxu0 0.0
    %1829 = vmatpush1.msra.mxu0 0.0
    %1830 = vmatprep.subr.mxu0 0.0
    %1831 = vmatpush1.msra.mxu0 0.0
    %1832 = vmatprep.subr.mxu0 0.0
    %1833 = vmatpush1.msra.mxu0 0.0
    %1834 = vmatprep.subr.mxu0 0.0
    %1835 = vmatpush1.msra.mxu0 0.0
    %1836 = vmatprep.subr.mxu0 0.0
    %1837 = vmatpush1.msra.mxu0 0.0
    %1838 = vmatprep.mubr.f32.mxu0 0.0
    %1839 = vmatmul.mubr.f32.gmra.mrb[0].mxu0 %v1626
    %v1840 = vpop.f32.mrb[0].mxu0
    %v1841 = vadd.f32 %v211, %v1840
    %v1842 = vpop.f32.mrb[0].mxu0
    %v1843 = vadd.f32 %v215, %v1842
    %1844 = vdwg.mxu0
    %v1846 = vrot.slane %v1841, 3
    %v1847 = vrot.slane %v1841, 4
    %v1850 = vadd.f32 %v180, %v1846
    %v1851 = vadd.f32 %v186, %v1847
    %v1852 = vxor.u32 %v1850, 2147483648
    %v1853 = vxor.u32 %v1851, 2147483648
    %v1854 = vmul.f32 %v1852, 1.442695
    %v1855 = vpow.pop %v1854
    %v1856 = vmul.f32 %v1853, 1.442695
    %v1857 = vpow.pop %v1856
    %v1858 = vadd.f32 %v1855, 1.0
    %v1859 = vadd.f32 %v1857, 1.0
    %v1860 = vrcp.pop %v1858
    %v1861 = vmul.f32 1.0, %v1860
    %v1862 = vrcp.pop %v1859
    %v1863 = vmul.f32 1.0, %v1862
    %v1865 = vrot.slane %v1843, 3
    %v1866 = vrot.slane %v1843, 4
    %v1869 = vmul.f32 %v1861, %v1865
    %v1870 = vmul.f32 %v1863, %v1866
    %v1871 = vadd.f32 %v182, %v1869
    %v1872 = vadd.f32 %v188, %v1870
    %v1873 = vtanh.pop %v1871
    %v1874 = vtanh.pop %v1872
    %v1875 = vsub.f32 1.0, %v1861
    %v1876 = vsub.f32 1.0, %v1863
    %1879 = vrot.lane.b32.xlu0 %v1873, 64
    %v1880 = vpop.permute.xlu0 %1879
    %1881 = vrot.lane.b32.xlu0 %v1874, 64
    %v1882 = vpop.permute.xlu0 %1881
    %v1885 = vmul.f32 %v1875, %v1880
    %v1886 = vmul.f32 %v1876, %v1882
    %v1887 = vrot.slane %v1585, 7
    %v1888 = vrot.slane %v1586, 7
    %v1891 = vmul.f32 %v1861, %v1887
    %v1892 = vmul.f32 %v1863, %v1888
    %v1893 = vadd.f32 %v1885, %v1891
    %v1894 = vadd.f32 %v1886, %v1892
    %v1895 = vld [vmem:[%s5 + $0x500] sm:$0xff]
    %v1896 = vld [vmem:[%s5 + $0x508] sm:$0xff]
    %v1897 = vld [vmem:[%s5 + $0x510] sm:$0xff]
    %v1898 = vld [vmem:[%s5 + $0x518] sm:$0xff]
    %v1899 = vld [vmem:[%s5 + $0x520] sm:$0xff]
    %v1900 = vld [vmem:[%s5 + $0x528] sm:$0xff]
    %v1901 = vld [vmem:[%s5 + $0x530] sm:$0xff]
    %v1902 = vld [vmem:[%s5 + $0x538] sm:$0xff]
    %v1903 = vld [vmem:[%s5 + $0x540] sm:$0xff]
    %v1904 = vld [vmem:[%s5 + $0x548] sm:$0xff]
    %v1905 = vld [vmem:[%s5 + $0x550] sm:$0xff]
    %v1906 = vld [vmem:[%s5 + $0x558] sm:$0xff]
    %v1907 = vld [vmem:[%s5 + $0x560] sm:$0xff]
    %v1908 = vld [vmem:[%s5 + $0x568] sm:$0xff]
    %v1909 = vld [vmem:[%s5 + $0x570] sm:$0xff]
    %v1910 = vld [vmem:[%s5 + $0x578] sm:$0xff]
    %v1911 = vld [vmem:[%s5 + $0x580] sm:$0xff]
    %v1912 = vld [vmem:[%s5 + $0x588] sm:$0xff]
    %v1913 = vld [vmem:[%s5 + $0x590] sm:$0xff]
    %v1914 = vld [vmem:[%s5 + $0x598] sm:$0xff]
    %v1915 = vld [vmem:[%s5 + $0x5a0] sm:$0xff]
    %v1916 = vld [vmem:[%s5 + $0x5a8] sm:$0xff]
    %v1917 = vld [vmem:[%s5 + $0x5b0] sm:$0xff]
    %v1918 = vld [vmem:[%s5 + $0x5b8] sm:$0xff]
    %v1919 = vld [vmem:[%s5 + $0x5c0] sm:$0xff]
    %v1920 = vld [vmem:[%s5 + $0x5c8] sm:$0xff]
    %v1921 = vld [vmem:[%s5 + $0x5d0] sm:$0xff]
    %v1922 = vld [vmem:[%s5 + $0x5d8] sm:$0xff]
    %v1923 = vld [vmem:[%s5 + $0x5e0] sm:$0xff]
    %v1924 = vld [vmem:[%s5 + $0x5e8] sm:$0xff]
    %v1925 = vld [vmem:[%s5 + $0x5f0] sm:$0xff]
    %v1926 = vld [vmem:[%s5 + $0x5f8] sm:$0xff]
    %v1929 = vrot.slane %v1893, 5
    %v1930 = vrot.slane %v1894, 4
    %v1931 = vsel %vm394, %v1930, %v1929
    %1932 = vrot.lane.b32.xlu0 %v1931, 64
    %v1933 = vpop.permute.xlu0 %1932
    %v1934 = vsel %vm240, %v1933, 0
    %1936 = vmatprep.subr.mxu0 %v1896
    %1937 = vmatpush1.msra.mxu0 %v1895
    %1938 = vmatprep.subr.mxu0 %v1900
    %1939 = vmatpush1.msra.mxu0 %v1899
    %1940 = vmatprep.subr.mxu0 %v1904
    %1941 = vmatpush1.msra.mxu0 %v1903
    %1942 = vmatprep.subr.mxu0 %v1908
    %1943 = vmatpush1.msra.mxu0 %v1907
    %1944 = vmatprep.subr.mxu0 %v1912
    %1945 = vmatpush1.msra.mxu0 %v1911
    %1946 = vmatprep.subr.mxu0 %v1916
    %1947 = vmatpush1.msra.mxu0 %v1915
    %1948 = vmatprep.subr.mxu0 %v1920
    %1949 = vmatpush1.msra.mxu0 %v1919
    %1950 = vmatprep.subr.mxu0 %v1924
    %1951 = vmatpush1.msra.mxu0 %v1923
    %1952 = vmatprep.subr.mxu0 0.0
    %1953 = vmatpush1.msra.mxu0 0.0
    %1954 = vmatprep.subr.mxu0 0.0
    %1955 = vmatpush1.msra.mxu0 0.0
    %1956 = vmatprep.subr.mxu0 0.0
    %1957 = vmatpush1.msra.mxu0 0.0
    %1958 = vmatprep.subr.mxu0 0.0
    %1959 = vmatpush1.msra.mxu0 0.0
    %1960 = vmatprep.subr.mxu0 0.0
    %1961 = vmatpush1.msra.mxu0 0.0
    %1962 = vmatprep.subr.mxu0 0.0
    %1963 = vmatpush1.msra.mxu0 0.0
    %1964 = vmatprep.subr.mxu0 0.0
    %1965 = vmatpush1.msra.mxu0 0.0
    %1966 = vmatprep.subr.mxu0 0.0
    %1967 = vmatpush1.msra.mxu0 0.0
    %1968 = vmatprep.subr.mxu0 0.0
    %1969 = vmatpush1.msra.mxu0 0.0
    %1970 = vmatprep.subr.mxu0 0.0
    %1971 = vmatpush1.msra.mxu0 0.0
    %1972 = vmatprep.subr.mxu0 0.0
    %1973 = vmatpush1.msra.mxu0 0.0
    %1974 = vmatprep.subr.mxu0 0.0
    %1975 = vmatpush1.msra.mxu0 0.0
    %1976 = vmatprep.subr.mxu0 0.0
    %1977 = vmatpush1.msra.mxu0 0.0
    %1978 = vmatprep.subr.mxu0 0.0
    %1979 = vmatpush1.msra.mxu0 0.0
    %1980 = vmatprep.subr.mxu0 0.0
    %1981 = vmatpush1.msra.mxu0 0.0
    %1982 = vmatprep.subr.mxu0 0.0
    %1983 = vmatpush1.msra.mxu0 0.0
    %1984 = vmatprep.subr.mxu0 0.0
    %1985 = vmatpush1.msra.mxu0 0.0
    %1986 = vmatprep.subr.mxu0 0.0
    %1987 = vmatpush1.msra.mxu0 0.0
    %1988 = vmatprep.subr.mxu0 0.0
    %1989 = vmatpush1.msra.mxu0 0.0
    %1990 = vmatprep.subr.mxu0 0.0
    %1991 = vmatpush1.msra.mxu0 0.0
    %1992 = vmatprep.subr.mxu0 0.0
    %1993 = vmatpush1.msra.mxu0 0.0
    %1994 = vmatprep.subr.mxu0 0.0
    %1995 = vmatpush1.msra.mxu0 0.0
    %1996 = vmatprep.subr.mxu0 0.0
    %1997 = vmatpush1.msra.mxu0 0.0
    %1998 = vmatprep.subr.mxu0 0.0
    %1999 = vmatpush1.msra.mxu0 0.0
    %2000 = vmatprep.mubr.f32.mxu0 0.0
    %2001 = vmatmul.mubr.f32.gmra.mrb[0].mxu0 %v1934
    %v2002 = vpop.f32.mrb[0].mxu0
    %v2003 = vadd.f32 0.0, %v2002
    %v2004 = vpop.f32.mrb[0].mxu0
    %v2005 = vadd.f32 0.0, %v2004
    %2006 = vdwg.mxu0
    %2007 = vmatprep.subr.mxu0 %v1898
    %2008 = vmatpush1.msra.mxu0 %v1897
    %2009 = vmatprep.subr.mxu0 %v1902
    %2010 = vmatpush1.msra.mxu0 %v1901
    %2011 = vmatprep.subr.mxu0 %v1906
    %2012 = vmatpush1.msra.mxu0 %v1905
    %2013 = vmatprep.subr.mxu0 %v1910
    %2014 = vmatpush1.msra.mxu0 %v1909
    %2015 = vmatprep.subr.mxu0 %v1914
    %2016 = vmatpush1.msra.mxu0 %v1913
    %2017 = vmatprep.subr.mxu0 %v1918
    %2018 = vmatpush1.msra.mxu0 %v1917
    %2019 = vmatprep.subr.mxu0 %v1922
    %2020 = vmatpush1.msra.mxu0 %v1921
    %2021 = vmatprep.subr.mxu0 %v1926
    %2022 = vmatpush1.msra.mxu0 %v1925
    %2023 = vmatprep.subr.mxu0 0.0
    %2024 = vmatpush1.msra.mxu0 0.0
    %2025 = vmatprep.subr.mxu0 0.0
    %2026 = vmatpush1.msra.mxu0 0.0
    %2027 = vmatprep.subr.mxu0 0.0
    %2028 = vmatpush1.msra.mxu0 0.0
    %2029 = vmatprep.subr.mxu0 0.0
    %2030 = vmatpush1.msra.mxu0 0.0
    %2031 = vmatprep.subr.mxu0 0.0
    %2032 = vmatpush1.msra.mxu0 0.0
    %2033 = vmatprep.subr.mxu0 0.0
    %2034 = vmatpush1.msra.mxu0 0.0
    %2035 = vmatprep.subr.mxu0 0.0
    %2036 = vmatpush1.msra.mxu0 0.0
    %2037 = vmatprep.subr.mxu0 0.0
    %2038 = vmatpush1.msra.mxu0 0.0
    %2039 = vmatprep.subr.mxu0 0.0
    %2040 = vmatpush1.msra.mxu0 0.0
    %2041 = vmatprep.subr.mxu0 0.0
    %2042 = vmatpush1.msra.mxu0 0.0
    %2043 = vmatprep.subr.mxu0 0.0
    %2044 = vmatpush1.msra.mxu0 0.0
    %2045 = vmatprep.subr.mxu0 0.0
    %2046 = vmatpush1.msra.mxu0 0.0
    %2047 = vmatprep.subr.mxu0 0.0
    %2048 = vmatpush1.msra.mxu0 0.0
    %2049 = vmatprep.subr.mxu0 0.0
    %2050 = vmatpush1.msra.mxu0 0.0
    %2051 = vmatprep.subr.mxu0 0.0
    %2052 = vmatpush1.msra.mxu0 0.0
    %2053 = vmatprep.subr.mxu0 0.0
    %2054 = vmatpush1.msra.mxu0 0.0
    %2055 = vmatprep.subr.mxu0 0.0
    %2056 = vmatpush1.msra.mxu0 0.0
    %2057 = vmatprep.subr.mxu0 0.0
    %2058 = vmatpush1.msra.mxu0 0.0
    %2059 = vmatprep.subr.mxu0 0.0
    %2060 = vmatpush1.msra.mxu0 0.0
    %2061 = vmatprep.subr.mxu0 0.0
    %2062 = vmatpush1.msra.mxu0 0.0
    %2063 = vmatprep.subr.mxu0 0.0
    %2064 = vmatpush1.msra.mxu0 0.0
    %2065 = vmatprep.subr.mxu0 0.0
    %2066 = vmatpush1.msra.mxu0 0.0
    %2067 = vmatprep.subr.mxu0 0.0
    %2068 = vmatpush1.msra.mxu0 0.0
    %2069 = vmatprep.subr.mxu0 0.0
    %2070 = vmatpush1.msra.mxu0 0.0
    %2071 = vmatprep.mubr.f32.mxu0 0.0
    %2072 = vmatmul.mubr.f32.gmra.mrb[0].mxu0 %v1934
    %v2073 = vpop.f32.mrb[0].mxu0
    %v2074 = vadd.f32 0.0, %v2073
    %v2075 = vpop.f32.mrb[0].mxu0
    %v2076 = vadd.f32 0.0, %v2075
    %2077 = vdwg.mxu0
    %v2078 = vadd.f32 %v1770, %v2003
    %v2079 = vadd.f32 %v1771, %v2005
    %v2080 = vadd.f32 %v1772, %v2074
    %v2081 = vadd.f32 %v1773, %v2076
    %2082 = vmatprep.subr.mxu0 %v191
    %2083 = vmatpush1.msra.mxu0 %v190
    %2084 = vmatprep.subr.mxu0 %v193
    %2085 = vmatpush1.msra.mxu0 %v192
    %2086 = vmatprep.subr.mxu0 %v195
    %2087 = vmatpush1.msra.mxu0 %v194
    %2088 = vmatprep.subr.mxu0 %v197
    %2089 = vmatpush1.msra.mxu0 %v196
    %2090 = vmatprep.subr.mxu0 %v199
    %2091 = vmatpush1.msra.mxu0 %v198
    %2092 = vmatprep.subr.mxu0 %v201
    %2093 = vmatpush1.msra.mxu0 %v200
    %2094 = vmatprep.subr.mxu0 %v203
    %2095 = vmatpush1.msra.mxu0 %v202
    %2096 = vmatprep.subr.mxu0 %v205
    %2097 = vmatpush1.msra.mxu0 %v204
    %2098 = vmatprep.subr.mxu0 0.0
    %2099 = vmatpush1.msra.mxu0 0.0
    %2100 = vmatprep.subr.mxu0 0.0
    %2101 = vmatpush1.msra.mxu0 0.0
    %2102 = vmatprep.subr.mxu0 0.0
    %2103 = vmatpush1.msra.mxu0 0.0
    %2104 = vmatprep.subr.mxu0 0.0
    %2105 = vmatpush1.msra.mxu0 0.0
    %2106 = vmatprep.subr.mxu0 0.0
    %2107 = vmatpush1.msra.mxu0 0.0
    %2108 = vmatprep.subr.mxu0 0.0
    %2109 = vmatpush1.msra.mxu0 0.0
    %2110 = vmatprep.subr.mxu0 0.0
    %2111 = vmatpush1.msra.mxu0 0.0
    %2112 = vmatprep.subr.mxu0 0.0
    %2113 = vmatpush1.msra.mxu0 0.0
    %2114 = vmatprep.subr.mxu0 0.0
    %2115 = vmatpush1.msra.mxu0 0.0
    %2116 = vmatprep.subr.mxu0 0.0
    %2117 = vmatpush1.msra.mxu0 0.0
    %2118 = vmatprep.subr.mxu0 0.0
    %2119 = vmatpush1.msra.mxu0 0.0
    %2120 = vmatprep.subr.mxu0 0.0
    %2121 = vmatpush1.msra.mxu0 0.0
    %2122 = vmatprep.subr.mxu0 0.0
    %2123 = vmatpush1.msra.mxu0 0.0
    %2124 = vmatprep.subr.mxu0 0.0
    %2125 = vmatpush1.msra.mxu0 0.0
    %2126 = vmatprep.subr.mxu0 0.0
    %2127 = vmatpush1.msra.mxu0 0.0
    %2128 = vmatprep.subr.mxu0 0.0
    %2129 = vmatpush1.msra.mxu0 0.0
    %2130 = vmatprep.subr.mxu0 0.0
    %2131 = vmatpush1.msra.mxu0 0.0
    %2132 = vmatprep.subr.mxu0 0.0
    %2133 = vmatpush1.msra.mxu0 0.0
    %2134 = vmatprep.subr.mxu0 0.0
    %2135 = vmatpush1.msra.mxu0 0.0
    %2136 = vmatprep.subr.mxu0 0.0
    %2137 = vmatpush1.msra.mxu0 0.0
    %2138 = vmatprep.subr.mxu0 0.0
    %2139 = vmatpush1.msra.mxu0 0.0
    %2140 = vmatprep.subr.mxu0 0.0
    %2141 = vmatpush1.msra.mxu0 0.0
    %2142 = vmatprep.subr.mxu0 0.0
    %2143 = vmatpush1.msra.mxu0 0.0
    %2144 = vmatprep.subr.mxu0 0.0
    %2145 = vmatpush1.msra.mxu0 0.0
    %2146 = vmatprep.mubr.f32.mxu0 0.0
    %2147 = vmatmul.mubr.f32.gmra.mrb[0].mxu0 %v1934
    %v2148 = vpop.f32.mrb[0].mxu0
    %v2149 = vadd.f32 %v211, %v2148
    %v2150 = vpop.f32.mrb[0].mxu0
    %v2151 = vadd.f32 %v215, %v2150
    %2152 = vdwg.mxu0
    %v2154 = vrot.slane %v2149, 2
    %v2155 = vrot.slane %v2149, 3
    %v2158 = vadd.f32 %v180, %v2154
    %v2159 = vadd.f32 %v186, %v2155
    %v2160 = vxor.u32 %v2158, 2147483648
    %v2161 = vxor.u32 %v2159, 2147483648
    %v2162 = vmul.f32 %v2160, 1.442695
    %v2163 = vpow.pop %v2162
    %v2164 = vmul.f32 %v2161, 1.442695
    %v2165 = vpow.pop %v2164
    %v2166 = vadd.f32 %v2163, 1.0
    %v2167 = vadd.f32 %v2165, 1.0
    %v2168 = vrcp.pop %v2166
    %v2169 = vmul.f32 1.0, %v2168
    %v2170 = vrcp.pop %v2167
    %v2171 = vmul.f32 1.0, %v2170
    %v2173 = vrot.slane %v2151, 2
    %v2174 = vrot.slane %v2151, 3
    %v2177 = vmul.f32 %v2169, %v2173
    %v2178 = vmul.f32 %v2171, %v2174
    %v2179 = vadd.f32 %v182, %v2177
    %v2180 = vadd.f32 %v188, %v2178
    %v2181 = vtanh.pop %v2179
    %v2182 = vtanh.pop %v2180
    %v2183 = vsub.f32 1.0, %v2169
    %v2184 = vsub.f32 1.0, %v2171
    %2187 = vrot.lane.b32.xlu0 %v2181, 64
    %v2188 = vpop.permute.xlu0 %2187
    %2189 = vrot.lane.b32.xlu0 %v2182, 64
    %v2190 = vpop.permute.xlu0 %2189
    %v2193 = vmul.f32 %v2183, %v2188
    %v2194 = vmul.f32 %v2184, %v2190
    %v2195 = vrot.slane %v1893, 7
    %v2196 = vrot.slane %v1894, 7
    %v2199 = vmul.f32 %v2169, %v2195
    %v2200 = vmul.f32 %v2171, %v2196
    %v2201 = vadd.f32 %v2193, %v2199
    %v2202 = vadd.f32 %v2194, %v2200
    %v2203 = vld [vmem:[%s5 + $0x600] sm:$0xff]
    %v2204 = vld [vmem:[%s5 + $0x608] sm:$0xff]
    %v2205 = vld [vmem:[%s5 + $0x610] sm:$0xff]
    %v2206 = vld [vmem:[%s5 + $0x618] sm:$0xff]
    %v2207 = vld [vmem:[%s5 + $0x620] sm:$0xff]
    %v2208 = vld [vmem:[%s5 + $0x628] sm:$0xff]
    %v2209 = vld [vmem:[%s5 + $0x630] sm:$0xff]
    %v2210 = vld [vmem:[%s5 + $0x638] sm:$0xff]
    %v2211 = vld [vmem:[%s5 + $0x640] sm:$0xff]
    %v2212 = vld [vmem:[%s5 + $0x648] sm:$0xff]
    %v2213 = vld [vmem:[%s5 + $0x650] sm:$0xff]
    %v2214 = vld [vmem:[%s5 + $0x658] sm:$0xff]
    %v2215 = vld [vmem:[%s5 + $0x660] sm:$0xff]
    %v2216 = vld [vmem:[%s5 + $0x668] sm:$0xff]
    %v2217 = vld [vmem:[%s5 + $0x670] sm:$0xff]
    %v2218 = vld [vmem:[%s5 + $0x678] sm:$0xff]
    %v2219 = vld [vmem:[%s5 + $0x680] sm:$0xff]
    %v2220 = vld [vmem:[%s5 + $0x688] sm:$0xff]
    %v2221 = vld [vmem:[%s5 + $0x690] sm:$0xff]
    %v2222 = vld [vmem:[%s5 + $0x698] sm:$0xff]
    %v2223 = vld [vmem:[%s5 + $0x6a0] sm:$0xff]
    %v2224 = vld [vmem:[%s5 + $0x6a8] sm:$0xff]
    %v2225 = vld [vmem:[%s5 + $0x6b0] sm:$0xff]
    %v2226 = vld [vmem:[%s5 + $0x6b8] sm:$0xff]
    %v2227 = vld [vmem:[%s5 + $0x6c0] sm:$0xff]
    %v2228 = vld [vmem:[%s5 + $0x6c8] sm:$0xff]
    %v2229 = vld [vmem:[%s5 + $0x6d0] sm:$0xff]
    %v2230 = vld [vmem:[%s5 + $0x6d8] sm:$0xff]
    %v2231 = vld [vmem:[%s5 + $0x6e0] sm:$0xff]
    %v2232 = vld [vmem:[%s5 + $0x6e8] sm:$0xff]
    %v2233 = vld [vmem:[%s5 + $0x6f0] sm:$0xff]
    %v2234 = vld [vmem:[%s5 + $0x6f8] sm:$0xff]
    %v2237 = vrot.slane %v2201, 6
    %v2238 = vrot.slane %v2202, 5
    %v2239 = vsel %vm394, %v2238, %v2237
    %2240 = vrot.lane.b32.xlu0 %v2239, 64
    %v2241 = vpop.permute.xlu0 %2240
    %v2242 = vsel %vm240, %v2241, 0
    %2244 = vmatprep.subr.mxu0 %v2204
    %2245 = vmatpush1.msra.mxu0 %v2203
    %2246 = vmatprep.subr.mxu0 %v2208
    %2247 = vmatpush1.msra.mxu0 %v2207
    %2248 = vmatprep.subr.mxu0 %v2212
    %2249 = vmatpush1.msra.mxu0 %v2211
    %2250 = vmatprep.subr.mxu0 %v2216
    %2251 = vmatpush1.msra.mxu0 %v2215
    %2252 = vmatprep.subr.mxu0 %v2220
    %2253 = vmatpush1.msra.mxu0 %v2219
    %2254 = vmatprep.subr.mxu0 %v2224
    %2255 = vmatpush1.msra.mxu0 %v2223
    %2256 = vmatprep.subr.mxu0 %v2228
    %2257 = vmatpush1.msra.mxu0 %v2227
    %2258 = vmatprep.subr.mxu0 %v2232
    %2259 = vmatpush1.msra.mxu0 %v2231
    %2260 = vmatprep.subr.mxu0 0.0
    %2261 = vmatpush1.msra.mxu0 0.0
    %2262 = vmatprep.subr.mxu0 0.0
    %2263 = vmatpush1.msra.mxu0 0.0
    %2264 = vmatprep.subr.mxu0 0.0
    %2265 = vmatpush1.msra.mxu0 0.0
    %2266 = vmatprep.subr.mxu0 0.0
    %2267 = vmatpush1.msra.mxu0 0.0
    %2268 = vmatprep.subr.mxu0 0.0
    %2269 = vmatpush1.msra.mxu0 0.0
    %2270 = vmatprep.subr.mxu0 0.0
    %2271 = vmatpush1.msra.mxu0 0.0
    %2272 = vmatprep.subr.mxu0 0.0
    %2273 = vmatpush1.msra.mxu0 0.0
    %2274 = vmatprep.subr.mxu0 0.0
    %2275 = vmatpush1.msra.mxu0 0.0
    %2276 = vmatprep.subr.mxu0 0.0
    %2277 = vmatpush1.msra.mxu0 0.0
    %2278 = vmatprep.subr.mxu0 0.0
    %2279 = vmatpush1.msra.mxu0 0.0
    %2280 = vmatprep.subr.mxu0 0.0
    %2281 = vmatpush1.msra.mxu0 0.0
    %2282 = vmatprep.subr.mxu0 0.0
    %2283 = vmatpush1.msra.mxu0 0.0
    %2284 = vmatprep.subr.mxu0 0.0
    %2285 = vmatpush1.msra.mxu0 0.0
    %2286 = vmatprep.subr.mxu0 0.0
    %2287 = vmatpush1.msra.mxu0 0.0
    %2288 = vmatprep.subr.mxu0 0.0
    %2289 = vmatpush1.msra.mxu0 0.0
    %2290 = vmatprep.subr.mxu0 0.0
    %2291 = vmatpush1.msra.mxu0 0.0
    %2292 = vmatprep.subr.mxu0 0.0
    %2293 = vmatpush1.msra.mxu0 0.0
    %2294 = vmatprep.subr.mxu0 0.0
    %2295 = vmatpush1.msra.mxu0 0.0
    %2296 = vmatprep.subr.mxu0 0.0
    %2297 = vmatpush1.msra.mxu0 0.0
    %2298 = vmatprep.subr.mxu0 0.0
    %2299 = vmatpush1.msra.mxu0 0.0
    %2300 = vmatprep.subr.mxu0 0.0
    %2301 = vmatpush1.msra.mxu0 0.0
    %2302 = vmatprep.subr.mxu0 0.0
    %2303 = vmatpush1.msra.mxu0 0.0
    %2304 = vmatprep.subr.mxu0 0.0
    %2305 = vmatpush1.msra.mxu0 0.0
    %2306 = vmatprep.subr.mxu0 0.0
    %2307 = vmatpush1.msra.mxu0 0.0
    %2308 = vmatprep.mubr.f32.mxu0 0.0
    %2309 = vmatmul.mubr.f32.gmra.mrb[0].mxu0 %v2242
    %v2310 = vpop.f32.mrb[0].mxu0
    %v2311 = vadd.f32 0.0, %v2310
    %v2312 = vpop.f32.mrb[0].mxu0
    %v2313 = vadd.f32 0.0, %v2312
    %2314 = vdwg.mxu0
    %2315 = vmatprep.subr.mxu0 %v2206
    %2316 = vmatpush1.msra.mxu0 %v2205
    %2317 = vmatprep.subr.mxu0 %v2210
    %2318 = vmatpush1.msra.mxu0 %v2209
    %2319 = vmatprep.subr.mxu0 %v2214
    %2320 = vmatpush1.msra.mxu0 %v2213
    %2321 = vmatprep.subr.mxu0 %v2218
    %2322 = vmatpush1.msra.mxu0 %v2217
    %2323 = vmatprep.subr.mxu0 %v2222
    %2324 = vmatpush1.msra.mxu0 %v2221
    %2325 = vmatprep.subr.mxu0 %v2226
    %2326 = vmatpush1.msra.mxu0 %v2225
    %2327 = vmatprep.subr.mxu0 %v2230
    %2328 = vmatpush1.msra.mxu0 %v2229
    %2329 = vmatprep.subr.mxu0 %v2234
    %2330 = vmatpush1.msra.mxu0 %v2233
    %2331 = vmatprep.subr.mxu0 0.0
    %2332 = vmatpush1.msra.mxu0 0.0
    %2333 = vmatprep.subr.mxu0 0.0
    %2334 = vmatpush1.msra.mxu0 0.0
    %2335 = vmatprep.subr.mxu0 0.0
    %2336 = vmatpush1.msra.mxu0 0.0
    %2337 = vmatprep.subr.mxu0 0.0
    %2338 = vmatpush1.msra.mxu0 0.0
    %2339 = vmatprep.subr.mxu0 0.0
    %2340 = vmatpush1.msra.mxu0 0.0
    %2341 = vmatprep.subr.mxu0 0.0
    %2342 = vmatpush1.msra.mxu0 0.0
    %2343 = vmatprep.subr.mxu0 0.0
    %2344 = vmatpush1.msra.mxu0 0.0
    %2345 = vmatprep.subr.mxu0 0.0
    %2346 = vmatpush1.msra.mxu0 0.0
    %2347 = vmatprep.subr.mxu0 0.0
    %2348 = vmatpush1.msra.mxu0 0.0
    %2349 = vmatprep.subr.mxu0 0.0
    %2350 = vmatpush1.msra.mxu0 0.0
    %2351 = vmatprep.subr.mxu0 0.0
    %2352 = vmatpush1.msra.mxu0 0.0
    %2353 = vmatprep.subr.mxu0 0.0
    %2354 = vmatpush1.msra.mxu0 0.0
    %2355 = vmatprep.subr.mxu0 0.0
    %2356 = vmatpush1.msra.mxu0 0.0
    %2357 = vmatprep.subr.mxu0 0.0
    %2358 = vmatpush1.msra.mxu0 0.0
    %2359 = vmatprep.subr.mxu0 0.0
    %2360 = vmatpush1.msra.mxu0 0.0
    %2361 = vmatprep.subr.mxu0 0.0
    %2362 = vmatpush1.msra.mxu0 0.0
    %2363 = vmatprep.subr.mxu0 0.0
    %2364 = vmatpush1.msra.mxu0 0.0
    %2365 = vmatprep.subr.mxu0 0.0
    %2366 = vmatpush1.msra.mxu0 0.0
    %2367 = vmatprep.subr.mxu0 0.0
    %2368 = vmatpush1.msra.mxu0 0.0
    %2369 = vmatprep.subr.mxu0 0.0
    %2370 = vmatpush1.msra.mxu0 0.0
    %2371 = vmatprep.subr.mxu0 0.0
    %2372 = vmatpush1.msra.mxu0 0.0
    %2373 = vmatprep.subr.mxu0 0.0
    %2374 = vmatpush1.msra.mxu0 0.0
    %2375 = vmatprep.subr.mxu0 0.0
    %2376 = vmatpush1.msra.mxu0 0.0
    %2377 = vmatprep.subr.mxu0 0.0
    %2378 = vmatpush1.msra.mxu0 0.0
    %2379 = vmatprep.mubr.f32.mxu0 0.0
    %2380 = vmatmul.mubr.f32.gmra.mrb[0].mxu0 %v2242
    %v2381 = vpop.f32.mrb[0].mxu0
    %v2382 = vadd.f32 0.0, %v2381
    %v2383 = vpop.f32.mrb[0].mxu0
    %v2384 = vadd.f32 0.0, %v2383
    %2385 = vdwg.mxu0
    %v2386 = vadd.f32 %v2078, %v2311
    %v2387 = vadd.f32 %v2079, %v2313
    %v2388 = vadd.f32 %v2080, %v2382
    %v2389 = vadd.f32 %v2081, %v2384
    %2390 = vmatprep.subr.mxu0 %v191
    %2391 = vmatpush1.msra.mxu0 %v190
    %2392 = vmatprep.subr.mxu0 %v193
    %2393 = vmatpush1.msra.mxu0 %v192
    %2394 = vmatprep.subr.mxu0 %v195
    %2395 = vmatpush1.msra.mxu0 %v194
    %2396 = vmatprep.subr.mxu0 %v197
    %2397 = vmatpush1.msra.mxu0 %v196
    %2398 = vmatprep.subr.mxu0 %v199
    %2399 = vmatpush1.msra.mxu0 %v198
    %2400 = vmatprep.subr.mxu0 %v201
    %2401 = vmatpush1.msra.mxu0 %v200
    %2402 = vmatprep.subr.mxu0 %v203
    %2403 = vmatpush1.msra.mxu0 %v202
    %2404 = vmatprep.subr.mxu0 %v205
    %2405 = vmatpush1.msra.mxu0 %v204
    %2406 = vmatprep.subr.mxu0 0.0
    %2407 = vmatpush1.msra.mxu0 0.0
    %2408 = vmatprep.subr.mxu0 0.0
    %2409 = vmatpush1.msra.mxu0 0.0
    %2410 = vmatprep.subr.mxu0 0.0
    %2411 = vmatpush1.msra.mxu0 0.0
    %2412 = vmatprep.subr.mxu0 0.0
    %2413 = vmatpush1.msra.mxu0 0.0
    %2414 = vmatprep.subr.mxu0 0.0
    %2415 = vmatpush1.msra.mxu0 0.0
    %2416 = vmatprep.subr.mxu0 0.0
    %2417 = vmatpush1.msra.mxu0 0.0
    %2418 = vmatprep.subr.mxu0 0.0
    %2419 = vmatpush1.msra.mxu0 0.0
    %2420 = vmatprep.subr.mxu0 0.0
    %2421 = vmatpush1.msra.mxu0 0.0
    %2422 = vmatprep.subr.mxu0 0.0
    %2423 = vmatpush1.msra.mxu0 0.0
    %2424 = vmatprep.subr.mxu0 0.0
    %2425 = vmatpush1.msra.mxu0 0.0
    %2426 = vmatprep.subr.mxu0 0.0
    %2427 = vmatpush1.msra.mxu0 0.0
    %2428 = vmatprep.subr.mxu0 0.0
    %2429 = vmatpush1.msra.mxu0 0.0
    %2430 = vmatprep.subr.mxu0 0.0
    %2431 = vmatpush1.msra.mxu0 0.0
    %2432 = vmatprep.subr.mxu0 0.0
    %2433 = vmatpush1.msra.mxu0 0.0
    %2434 = vmatprep.subr.mxu0 0.0
    %2435 = vmatpush1.msra.mxu0 0.0
    %2436 = vmatprep.subr.mxu0 0.0
    %2437 = vmatpush1.msra.mxu0 0.0
    %2438 = vmatprep.subr.mxu0 0.0
    %2439 = vmatpush1.msra.mxu0 0.0
    %2440 = vmatprep.subr.mxu0 0.0
    %2441 = vmatpush1.msra.mxu0 0.0
    %2442 = vmatprep.subr.mxu0 0.0
    %2443 = vmatpush1.msra.mxu0 0.0
    %2444 = vmatprep.subr.mxu0 0.0
    %2445 = vmatpush1.msra.mxu0 0.0
    %2446 = vmatprep.subr.mxu0 0.0
    %2447 = vmatpush1.msra.mxu0 0.0
    %2448 = vmatprep.subr.mxu0 0.0
    %2449 = vmatpush1.msra.mxu0 0.0
    %2450 = vmatprep.subr.mxu0 0.0
    %2451 = vmatpush1.msra.mxu0 0.0
    %2452 = vmatprep.subr.mxu0 0.0
    %2453 = vmatpush1.msra.mxu0 0.0
    %2454 = vmatprep.mubr.f32.mxu0 0.0
    %2455 = vmatmul.mubr.f32.gmra.mrb[0].mxu0 %v2242
    %v2456 = vpop.f32.mrb[0].mxu0
    %v2457 = vadd.f32 %v211, %v2456
    %v2458 = vpop.f32.mrb[0].mxu0
    %v2459 = vadd.f32 %v215, %v2458
    %2460 = vdwg.mxu0
    %v2462 = vrot.slane %v2457, 1
    %v2463 = vrot.slane %v2457, 2
    %v2466 = vadd.f32 %v180, %v2462
    %v2467 = vadd.f32 %v186, %v2463
    %v2468 = vxor.u32 %v2466, 2147483648
    %v2469 = vxor.u32 %v2467, 2147483648
    %v2470 = vmul.f32 %v2468, 1.442695
    %v2471 = vpow.pop %v2470
    %v2472 = vmul.f32 %v2469, 1.442695
    %v2473 = vpow.pop %v2472
    %v2474 = vadd.f32 %v2471, 1.0
    %v2475 = vadd.f32 %v2473, 1.0
    %v2476 = vrcp.pop %v2474
    %v2477 = vmul.f32 1.0, %v2476
    %v2478 = vrcp.pop %v2475
    %v2479 = vmul.f32 1.0, %v2478
    %v2481 = vrot.slane %v2459, 1
    %v2482 = vrot.slane %v2459, 2
    %v2485 = vmul.f32 %v2477, %v2481
    %v2486 = vmul.f32 %v2479, %v2482
    %v2487 = vadd.f32 %v182, %v2485
    %v2488 = vadd.f32 %v188, %v2486
    %v2489 = vtanh.pop %v2487
    %v2490 = vtanh.pop %v2488
    %v2491 = vsub.f32 1.0, %v2477
    %v2492 = vsub.f32 1.0, %v2479
    %2495 = vrot.lane.b32.xlu0 %v2489, 64
    %v2496 = vpop.permute.xlu0 %2495
    %2497 = vrot.lane.b32.xlu0 %v2490, 64
    %v2498 = vpop.permute.xlu0 %2497
    %v2501 = vmul.f32 %v2491, %v2496
    %v2502 = vmul.f32 %v2492, %v2498
    %v2503 = vrot.slane %v2201, 7
    %v2504 = vrot.slane %v2202, 7
    %v2507 = vmul.f32 %v2477, %v2503
    %v2508 = vmul.f32 %v2479, %v2504
    %v2509 = vadd.f32 %v2501, %v2507
    %v2510 = vadd.f32 %v2502, %v2508
    %v2511 = vld [vmem:[%s5 + $0x700] sm:$0xff]
    %v2512 = vld [vmem:[%s5 + $0x708] sm:$0xff]
    %v2513 = vld [vmem:[%s5 + $0x710] sm:$0xff]
    %v2514 = vld [vmem:[%s5 + $0x718] sm:$0xff]
    %v2515 = vld [vmem:[%s5 + $0x720] sm:$0xff]
    %v2516 = vld [vmem:[%s5 + $0x728] sm:$0xff]
    %v2517 = vld [vmem:[%s5 + $0x730] sm:$0xff]
    %v2518 = vld [vmem:[%s5 + $0x738] sm:$0xff]
    %v2519 = vld [vmem:[%s5 + $0x740] sm:$0xff]
    %v2520 = vld [vmem:[%s5 + $0x748] sm:$0xff]
    %v2521 = vld [vmem:[%s5 + $0x750] sm:$0xff]
    %v2522 = vld [vmem:[%s5 + $0x758] sm:$0xff]
    %v2523 = vld [vmem:[%s5 + $0x760] sm:$0xff]
    %v2524 = vld [vmem:[%s5 + $0x768] sm:$0xff]
    %v2525 = vld [vmem:[%s5 + $0x770] sm:$0xff]
    %v2526 = vld [vmem:[%s5 + $0x778] sm:$0xff]
    %v2527 = vld [vmem:[%s5 + $0x780] sm:$0xff]
    %v2528 = vld [vmem:[%s5 + $0x788] sm:$0xff]
    %v2529 = vld [vmem:[%s5 + $0x790] sm:$0xff]
    %v2530 = vld [vmem:[%s5 + $0x798] sm:$0xff]
    %v2531 = vld [vmem:[%s5 + $0x7a0] sm:$0xff]
    %v2532 = vld [vmem:[%s5 + $0x7a8] sm:$0xff]
    %v2533 = vld [vmem:[%s5 + $0x7b0] sm:$0xff]
    %v2534 = vld [vmem:[%s5 + $0x7b8] sm:$0xff]
    %v2535 = vld [vmem:[%s5 + $0x7c0] sm:$0xff]
    %v2536 = vld [vmem:[%s5 + $0x7c8] sm:$0xff]
    %v2537 = vld [vmem:[%s5 + $0x7d0] sm:$0xff]
    %v2538 = vld [vmem:[%s5 + $0x7d8] sm:$0xff]
    %v2539 = vld [vmem:[%s5 + $0x7e0] sm:$0xff]
    %v2540 = vld [vmem:[%s5 + $0x7e8] sm:$0xff]
    %v2541 = vld [vmem:[%s5 + $0x7f0] sm:$0xff]
    %v2542 = vld [vmem:[%s5 + $0x7f8] sm:$0xff]
    %v2545 = vrot.slane %v2509, 7
    %v2546 = vrot.slane %v2510, 6
    %v2547 = vsel %vm394, %v2546, %v2545
    %2548 = vrot.lane.b32.xlu0 %v2547, 64
    %v2549 = vpop.permute.xlu0 %2548
    %v2550 = vsel %vm240, %v2549, 0
    %2552 = vmatprep.subr.mxu0 %v2512
    %2553 = vmatpush1.msra.mxu0 %v2511
    %2554 = vmatprep.subr.mxu0 %v2516
    %2555 = vmatpush1.msra.mxu0 %v2515
    %2556 = vmatprep.subr.mxu0 %v2520
    %2557 = vmatpush1.msra.mxu0 %v2519
    %2558 = vmatprep.subr.mxu0 %v2524
    %2559 = vmatpush1.msra.mxu0 %v2523
    %2560 = vmatprep.subr.mxu0 %v2528
    %2561 = vmatpush1.msra.mxu0 %v2527
    %2562 = vmatprep.subr.mxu0 %v2532
    %2563 = vmatpush1.msra.mxu0 %v2531
    %2564 = vmatprep.subr.mxu0 %v2536
    %2565 = vmatpush1.msra.mxu0 %v2535
    %2566 = vmatprep.subr.mxu0 %v2540
    %2567 = vmatpush1.msra.mxu0 %v2539
    %2568 = vmatprep.subr.mxu0 0.0
    %2569 = vmatpush1.msra.mxu0 0.0
    %2570 = vmatprep.subr.mxu0 0.0
    %2571 = vmatpush1.msra.mxu0 0.0
    %2572 = vmatprep.subr.mxu0 0.0
    %2573 = vmatpush1.msra.mxu0 0.0
    %2574 = vmatprep.subr.mxu0 0.0
    %2575 = vmatpush1.msra.mxu0 0.0
    %2576 = vmatprep.subr.mxu0 0.0
    %2577 = vmatpush1.msra.mxu0 0.0
    %2578 = vmatprep.subr.mxu0 0.0
    %2579 = vmatpush1.msra.mxu0 0.0
    %2580 = vmatprep.subr.mxu0 0.0
    %2581 = vmatpush1.msra.mxu0 0.0
    %2582 = vmatprep.subr.mxu0 0.0
    %2583 = vmatpush1.msra.mxu0 0.0
    %2584 = vmatprep.subr.mxu0 0.0
    %2585 = vmatpush1.msra.mxu0 0.0
    %2586 = vmatprep.subr.mxu0 0.0
    %2587 = vmatpush1.msra.mxu0 0.0
    %2588 = vmatprep.subr.mxu0 0.0
    %2589 = vmatpush1.msra.mxu0 0.0
    %2590 = vmatprep.subr.mxu0 0.0
    %2591 = vmatpush1.msra.mxu0 0.0
    %2592 = vmatprep.subr.mxu0 0.0
    %2593 = vmatpush1.msra.mxu0 0.0
    %2594 = vmatprep.subr.mxu0 0.0
    %2595 = vmatpush1.msra.mxu0 0.0
    %2596 = vmatprep.subr.mxu0 0.0
    %2597 = vmatpush1.msra.mxu0 0.0
    %2598 = vmatprep.subr.mxu0 0.0
    %2599 = vmatpush1.msra.mxu0 0.0
    %2600 = vmatprep.subr.mxu0 0.0
    %2601 = vmatpush1.msra.mxu0 0.0
    %2602 = vmatprep.subr.mxu0 0.0
    %2603 = vmatpush1.msra.mxu0 0.0
    %2604 = vmatprep.subr.mxu0 0.0
    %2605 = vmatpush1.msra.mxu0 0.0
    %2606 = vmatprep.subr.mxu0 0.0
    %2607 = vmatpush1.msra.mxu0 0.0
    %2608 = vmatprep.subr.mxu0 0.0
    %2609 = vmatpush1.msra.mxu0 0.0
    %2610 = vmatprep.subr.mxu0 0.0
    %2611 = vmatpush1.msra.mxu0 0.0
    %2612 = vmatprep.subr.mxu0 0.0
    %2613 = vmatpush1.msra.mxu0 0.0
    %2614 = vmatprep.subr.mxu0 0.0
    %2615 = vmatpush1.msra.mxu0 0.0
    %2616 = vmatprep.mubr.f32.mxu0 0.0
    %2617 = vmatmul.mubr.f32.gmra.mrb[0].mxu0 %v2550
    %v2618 = vpop.f32.mrb[0].mxu0
    %v2619 = vadd.f32 0.0, %v2618
    %v2620 = vpop.f32.mrb[0].mxu0
    %v2621 = vadd.f32 0.0, %v2620
    %2622 = vdwg.mxu0
    %2623 = vmatprep.subr.mxu0 %v2514
    %2624 = vmatpush1.msra.mxu0 %v2513
    %2625 = vmatprep.subr.mxu0 %v2518
    %2626 = vmatpush1.msra.mxu0 %v2517
    %2627 = vmatprep.subr.mxu0 %v2522
    %2628 = vmatpush1.msra.mxu0 %v2521
    %2629 = vmatprep.subr.mxu0 %v2526
    %2630 = vmatpush1.msra.mxu0 %v2525
    %2631 = vmatprep.subr.mxu0 %v2530
    %2632 = vmatpush1.msra.mxu0 %v2529
    %2633 = vmatprep.subr.mxu0 %v2534
    %2634 = vmatpush1.msra.mxu0 %v2533
    %2635 = vmatprep.subr.mxu0 %v2538
    %2636 = vmatpush1.msra.mxu0 %v2537
    %2637 = vmatprep.subr.mxu0 %v2542
    %2638 = vmatpush1.msra.mxu0 %v2541
    %2639 = vmatprep.subr.mxu0 0.0
    %2640 = vmatpush1.msra.mxu0 0.0
    %2641 = vmatprep.subr.mxu0 0.0
    %2642 = vmatpush1.msra.mxu0 0.0
    %2643 = vmatprep.subr.mxu0 0.0
    %2644 = vmatpush1.msra.mxu0 0.0
    %2645 = vmatprep.subr.mxu0 0.0
    %2646 = vmatpush1.msra.mxu0 0.0
    %2647 = vmatprep.subr.mxu0 0.0
    %2648 = vmatpush1.msra.mxu0 0.0
    %2649 = vmatprep.subr.mxu0 0.0
    %2650 = vmatpush1.msra.mxu0 0.0
    %2651 = vmatprep.subr.mxu0 0.0
    %2652 = vmatpush1.msra.mxu0 0.0
    %2653 = vmatprep.subr.mxu0 0.0
    %2654 = vmatpush1.msra.mxu0 0.0
    %2655 = vmatprep.subr.mxu0 0.0
    %2656 = vmatpush1.msra.mxu0 0.0
    %2657 = vmatprep.subr.mxu0 0.0
    %2658 = vmatpush1.msra.mxu0 0.0
    %2659 = vmatprep.subr.mxu0 0.0
    %2660 = vmatpush1.msra.mxu0 0.0
    %2661 = vmatprep.subr.mxu0 0.0
    %2662 = vmatpush1.msra.mxu0 0.0
    %2663 = vmatprep.subr.mxu0 0.0
    %2664 = vmatpush1.msra.mxu0 0.0
    %2665 = vmatprep.subr.mxu0 0.0
    %2666 = vmatpush1.msra.mxu0 0.0
    %2667 = vmatprep.subr.mxu0 0.0
    %2668 = vmatpush1.msra.mxu0 0.0
    %2669 = vmatprep.subr.mxu0 0.0
    %2670 = vmatpush1.msra.mxu0 0.0
    %2671 = vmatprep.subr.mxu0 0.0
    %2672 = vmatpush1.msra.mxu0 0.0
    %2673 = vmatprep.subr.mxu0 0.0
    %2674 = vmatpush1.msra.mxu0 0.0
    %2675 = vmatprep.subr.mxu0 0.0
    %2676 = vmatpush1.msra.mxu0 0.0
    %2677 = vmatprep.subr.mxu0 0.0
    %2678 = vmatpush1.msra.mxu0 0.0
    %2679 = vmatprep.subr.mxu0 0.0
    %2680 = vmatpush1.msra.mxu0 0.0
    %2681 = vmatprep.subr.mxu0 0.0
    %2682 = vmatpush1.msra.mxu0 0.0
    %2683 = vmatprep.subr.mxu0 0.0
    %2684 = vmatpush1.msra.mxu0 0.0
    %2685 = vmatprep.subr.mxu0 0.0
    %2686 = vmatpush1.msra.mxu0 0.0
    %2687 = vmatprep.mubr.f32.mxu0 0.0
    %2688 = vmatmul.mubr.f32.gmra.mrb[0].mxu0 %v2550
    %v2689 = vpop.f32.mrb[0].mxu0
    %v2690 = vadd.f32 0.0, %v2689
    %v2691 = vpop.f32.mrb[0].mxu0
    %v2692 = vadd.f32 0.0, %v2691
    %2693 = vdwg.mxu0
    %v2694 = vadd.f32 %v2386, %v2619
    %v2695 = vadd.f32 %v2387, %v2621
    %v2696 = vadd.f32 %v2388, %v2690
    %v2697 = vadd.f32 %v2389, %v2692
    %v2698 = vmax.f32 %v2694, 0.0
    %v2699 = vmax.f32 %v2695, 0.0
    %v2700 = vmax.f32 %v2696, 0.0
    %v2701 = vmax.f32 %v2697, 0.0
    %v2702 = vld [vmem:[%s7] sm:$0xff]
    %v2703 = vld [vmem:[%s7 + $0x8] sm:$0xff]
    %v2704 = vld [vmem:[%s7 + $0x10] sm:$0xff]
    %v2705 = vld [vmem:[%s7 + $0x18] sm:$0xff]
    %v2706 = vld [vmem:[%s7 + $0x20] sm:$0xff]
    %v2707 = vld [vmem:[%s7 + $0x28] sm:$0xff]
    %v2708 = vld [vmem:[%s7 + $0x30] sm:$0xff]
    %v2709 = vld [vmem:[%s7 + $0x38] sm:$0xff]
    %v2710 = vld [vmem:[%s7 + $0x40] sm:$0xff]
    %v2711 = vld [vmem:[%s7 + $0x48] sm:$0xff]
    %v2712 = vld [vmem:[%s7 + $0x50] sm:$0xff]
    %v2713 = vld [vmem:[%s7 + $0x58] sm:$0xff]
    %v2714 = vld [vmem:[%s7 + $0x60] sm:$0xff]
    %v2715 = vld [vmem:[%s7 + $0x68] sm:$0xff]
    %v2716 = vld [vmem:[%s7 + $0x70] sm:$0xff]
    %v2717 = vld [vmem:[%s7 + $0x78] sm:$0xff]
    %v2718 = vld [vmem:[%s7 + $0x80] sm:$0xff]
    %v2719 = vld [vmem:[%s7 + $0x88] sm:$0xff]
    %v2720 = vld [vmem:[%s7 + $0x90] sm:$0xff]
    %v2721 = vld [vmem:[%s7 + $0x98] sm:$0xff]
    %v2722 = vld [vmem:[%s7 + $0xa0] sm:$0xff]
    %v2723 = vld [vmem:[%s7 + $0xa8] sm:$0xff]
    %v2724 = vld [vmem:[%s7 + $0xb0] sm:$0xff]
    %v2725 = vld [vmem:[%s7 + $0xb8] sm:$0xff]
    %v2726 = vld [vmem:[%s7 + $0xc0] sm:$0xff]
    %v2727 = vld [vmem:[%s7 + $0xc8] sm:$0xff]
    %v2728 = vld [vmem:[%s7 + $0xd0] sm:$0xff]
    %v2729 = vld [vmem:[%s7 + $0xd8] sm:$0xff]
    %v2730 = vld [vmem:[%s7 + $0xe0] sm:$0xff]
    %v2731 = vld [vmem:[%s7 + $0xe8] sm:$0xff]
    %v2732 = vld [vmem:[%s7 + $0xf0] sm:$0xff]
    %v2733 = vld [vmem:[%s7 + $0xf8] sm:$0xff]
    %v2734 = vld [vmem:[%s7 + $0x100] sm:$0xff]
    %v2735 = vld [vmem:[%s7 + $0x108] sm:$0xff]
    %v2736 = vld [vmem:[%s7 + $0x110] sm:$0xff]
    %v2737 = vld [vmem:[%s7 + $0x118] sm:$0xff]
    %v2738 = vld [vmem:[%s7 + $0x120] sm:$0xff]
    %v2739 = vld [vmem:[%s7 + $0x128] sm:$0xff]
    %v2740 = vld [vmem:[%s7 + $0x130] sm:$0xff]
    %v2741 = vld [vmem:[%s7 + $0x138] sm:$0xff]
    %v2742 = vld [vmem:[%s7 + $0x140] sm:$0xff]
    %v2743 = vld [vmem:[%s7 + $0x148] sm:$0xff]
    %v2744 = vld [vmem:[%s7 + $0x150] sm:$0xff]
    %v2745 = vld [vmem:[%s7 + $0x158] sm:$0xff]
    %v2746 = vld [vmem:[%s7 + $0x160] sm:$0xff]
    %v2747 = vld [vmem:[%s7 + $0x168] sm:$0xff]
    %v2748 = vld [vmem:[%s7 + $0x170] sm:$0xff]
    %v2749 = vld [vmem:[%s7 + $0x178] sm:$0xff]
    %v2750 = vld [vmem:[%s7 + $0x180] sm:$0xff]
    %v2751 = vld [vmem:[%s7 + $0x188] sm:$0xff]
    %v2752 = vld [vmem:[%s7 + $0x190] sm:$0xff]
    %v2753 = vld [vmem:[%s7 + $0x198] sm:$0xff]
    %v2754 = vld [vmem:[%s7 + $0x1a0] sm:$0xff]
    %v2755 = vld [vmem:[%s7 + $0x1a8] sm:$0xff]
    %v2756 = vld [vmem:[%s7 + $0x1b0] sm:$0xff]
    %v2757 = vld [vmem:[%s7 + $0x1b8] sm:$0xff]
    %v2758 = vld [vmem:[%s7 + $0x1c0] sm:$0xff]
    %v2759 = vld [vmem:[%s7 + $0x1c8] sm:$0xff]
    %v2760 = vld [vmem:[%s7 + $0x1d0] sm:$0xff]
    %v2761 = vld [vmem:[%s7 + $0x1d8] sm:$0xff]
    %v2762 = vld [vmem:[%s7 + $0x1e0] sm:$0xff]
    %v2763 = vld [vmem:[%s7 + $0x1e8] sm:$0xff]
    %v2764 = vld [vmem:[%s7 + $0x1f0] sm:$0xff]
    %v2765 = vld [vmem:[%s7 + $0x1f8] sm:$0xff]
    %v2766 = vld [vmem:[%s7 + $0x200] sm:$0xff]
    %v2767 = vld [vmem:[%s7 + $0x208] sm:$0xff]
    %v2768 = vld [vmem:[%s7 + $0x210] sm:$0xff]
    %v2769 = vld [vmem:[%s7 + $0x218] sm:$0xff]
    %v2770 = vld [vmem:[%s7 + $0x220] sm:$0xff]
    %v2771 = vld [vmem:[%s7 + $0x228] sm:$0xff]
    %v2772 = vld [vmem:[%s7 + $0x230] sm:$0xff]
    %v2773 = vld [vmem:[%s7 + $0x238] sm:$0xff]
    %v2774 = vld [vmem:[%s7 + $0x240] sm:$0xff]
    %v2775 = vld [vmem:[%s7 + $0x248] sm:$0xff]
    %v2776 = vld [vmem:[%s7 + $0x250] sm:$0xff]
    %v2777 = vld [vmem:[%s7 + $0x258] sm:$0xff]
    %v2778 = vld [vmem:[%s7 + $0x260] sm:$0xff]
    %v2779 = vld [vmem:[%s7 + $0x268] sm:$0xff]
    %v2780 = vld [vmem:[%s7 + $0x270] sm:$0xff]
    %v2781 = vld [vmem:[%s7 + $0x278] sm:$0xff]
    %v2782 = vld [vmem:[%s7 + $0x280] sm:$0xff]
    %v2783 = vld [vmem:[%s7 + $0x288] sm:$0xff]
    %v2784 = vld [vmem:[%s7 + $0x290] sm:$0xff]
    %v2785 = vld [vmem:[%s7 + $0x298] sm:$0xff]
    %v2786 = vld [vmem:[%s7 + $0x2a0] sm:$0xff]
    %v2787 = vld [vmem:[%s7 + $0x2a8] sm:$0xff]
    %v2788 = vld [vmem:[%s7 + $0x2b0] sm:$0xff]
    %v2789 = vld [vmem:[%s7 + $0x2b8] sm:$0xff]
    %v2790 = vld [vmem:[%s7 + $0x2c0] sm:$0xff]
    %v2791 = vld [vmem:[%s7 + $0x2c8] sm:$0xff]
    %v2792 = vld [vmem:[%s7 + $0x2d0] sm:$0xff]
    %v2793 = vld [vmem:[%s7 + $0x2d8] sm:$0xff]
    %v2794 = vld [vmem:[%s7 + $0x2e0] sm:$0xff]
    %v2795 = vld [vmem:[%s7 + $0x2e8] sm:$0xff]
    %v2796 = vld [vmem:[%s7 + $0x2f0] sm:$0xff]
    %v2797 = vld [vmem:[%s7 + $0x2f8] sm:$0xff]
    %v2798 = vld [vmem:[%s7 + $0x300] sm:$0xff]
    %v2799 = vld [vmem:[%s7 + $0x308] sm:$0xff]
    %v2800 = vld [vmem:[%s7 + $0x310] sm:$0xff]
    %v2801 = vld [vmem:[%s7 + $0x318] sm:$0xff]
    %v2802 = vld [vmem:[%s7 + $0x320] sm:$0xff]
    %v2803 = vld [vmem:[%s7 + $0x328] sm:$0xff]
    %v2804 = vld [vmem:[%s7 + $0x330] sm:$0xff]
    %v2805 = vld [vmem:[%s7 + $0x338] sm:$0xff]
    %v2806 = vld [vmem:[%s7 + $0x340] sm:$0xff]
    %v2807 = vld [vmem:[%s7 + $0x348] sm:$0xff]
    %v2808 = vld [vmem:[%s7 + $0x350] sm:$0xff]
    %v2809 = vld [vmem:[%s7 + $0x358] sm:$0xff]
    %v2810 = vld [vmem:[%s7 + $0x360] sm:$0xff]
    %v2811 = vld [vmem:[%s7 + $0x368] sm:$0xff]
    %v2812 = vld [vmem:[%s7 + $0x370] sm:$0xff]
    %v2813 = vld [vmem:[%s7 + $0x378] sm:$0xff]
    %v2814 = vld [vmem:[%s7 + $0x380] sm:$0xff]
    %v2815 = vld [vmem:[%s7 + $0x388] sm:$0xff]
    %v2816 = vld [vmem:[%s7 + $0x390] sm:$0xff]
    %v2817 = vld [vmem:[%s7 + $0x398] sm:$0xff]
    %v2818 = vld [vmem:[%s7 + $0x3a0] sm:$0xff]
    %v2819 = vld [vmem:[%s7 + $0x3a8] sm:$0xff]
    %v2820 = vld [vmem:[%s7 + $0x3b0] sm:$0xff]
    %v2821 = vld [vmem:[%s7 + $0x3b8] sm:$0xff]
    %v2822 = vld [vmem:[%s7 + $0x3c0] sm:$0xff]
    %v2823 = vld [vmem:[%s7 + $0x3c8] sm:$0xff]
    %v2824 = vld [vmem:[%s7 + $0x3d0] sm:$0xff]
    %v2825 = vld [vmem:[%s7 + $0x3d8] sm:$0xff]
    %v2826 = vld [vmem:[%s7 + $0x3e0] sm:$0xff]
    %v2827 = vld [vmem:[%s7 + $0x3e8] sm:$0xff]
    %v2828 = vld [vmem:[%s7 + $0x3f0] sm:$0xff]
    %v2829 = vld [vmem:[%s7 + $0x3f8] sm:$0xff]
    %v2830 = vld [vmem:[%s8] sm:$0x3]
    %v2832 = vlaneseq
    %v2833 = vshrl.u32 %v2832, 7
    %v2834 = vsub.s32 0, %v2833
    %v2835 = vrot.slane %v2830, %v2834
    %v2836 = vlaneseq
    %v2837 = vshrl.u32 %v2836, 7
    %v2838 = vsub.s32 1, %v2837
    %v2839 = vrot.slane %v2830, %v2838
    %2842 = vmatprep.subr.mxu0 %v2703
    %2843 = vmatpush1.msra.mxu0 %v2702
    %2844 = vmatprep.subr.mxu0 %v2705
    %2845 = vmatpush1.msra.mxu0 %v2704
    %2846 = vmatprep.subr.mxu0 %v2707
    %2847 = vmatpush1.msra.mxu0 %v2706
    %2848 = vmatprep.subr.mxu0 %v2709
    %2849 = vmatpush1.msra.mxu0 %v2708
    %2850 = vmatprep.subr.mxu0 %v2711
    %2851 = vmatpush1.msra.mxu0 %v2710
    %2852 = vmatprep.subr.mxu0 %v2713
    %2853 = vmatpush1.msra.mxu0 %v2712
    %2854 = vmatprep.subr.mxu0 %v2715
    %2855 = vmatpush1.msra.mxu0 %v2714
    %2856 = vmatprep.subr.mxu0 %v2717
    %2857 = vmatpush1.msra.mxu0 %v2716
    %2858 = vmatprep.subr.mxu0 %v2719
    %2859 = vmatpush1.msra.mxu0 %v2718
    %2860 = vmatprep.subr.mxu0 %v2721
    %2861 = vmatpush1.msra.mxu0 %v2720
    %2862 = vmatprep.subr.mxu0 %v2723
    %2863 = vmatpush1.msra.mxu0 %v2722
    %2864 = vmatprep.subr.mxu0 %v2725
    %2865 = vmatpush1.msra.mxu0 %v2724
    %2866 = vmatprep.subr.mxu0 %v2727
    %2867 = vmatpush1.msra.mxu0 %v2726
    %2868 = vmatprep.subr.mxu0 %v2729
    %2869 = vmatpush1.msra.mxu0 %v2728
    %2870 = vmatprep.subr.mxu0 %v2731
    %2871 = vmatpush1.msra.mxu0 %v2730
    %2872 = vmatprep.subr.mxu0 %v2733
    %2873 = vmatpush1.msra.mxu0 %v2732
    %2874 = vmatprep.subr.mxu0 %v2735
    %2875 = vmatpush1.msra.mxu0 %v2734
    %2876 = vmatprep.subr.mxu0 %v2737
    %2877 = vmatpush1.msra.mxu0 %v2736
    %2878 = vmatprep.subr.mxu0 %v2739
    %2879 = vmatpush1.msra.mxu0 %v2738
    %2880 = vmatprep.subr.mxu0 %v2741
    %2881 = vmatpush1.msra.mxu0 %v2740
    %2882 = vmatprep.subr.mxu0 %v2743
    %2883 = vmatpush1.msra.mxu0 %v2742
    %2884 = vmatprep.subr.mxu0 %v2745
    %2885 = vmatpush1.msra.mxu0 %v2744
    %2886 = vmatprep.subr.mxu0 %v2747
    %2887 = vmatpush1.msra.mxu0 %v2746
    %2888 = vmatprep.subr.mxu0 %v2749
    %2889 = vmatpush1.msra.mxu0 %v2748
    %2890 = vmatprep.subr.mxu0 %v2751
    %2891 = vmatpush1.msra.mxu0 %v2750
    %2892 = vmatprep.subr.mxu0 %v2753
    %2893 = vmatpush1.msra.mxu0 %v2752
    %2894 = vmatprep.subr.mxu0 %v2755
    %2895 = vmatpush1.msra.mxu0 %v2754
    %2896 = vmatprep.subr.mxu0 %v2757
    %2897 = vmatpush1.msra.mxu0 %v2756
    %2898 = vmatprep.subr.mxu0 %v2759
    %2899 = vmatpush1.msra.mxu0 %v2758
    %2900 = vmatprep.subr.mxu0 %v2761
    %2901 = vmatpush1.msra.mxu0 %v2760
    %2902 = vmatprep.subr.mxu0 %v2763
    %2903 = vmatpush1.msra.mxu0 %v2762
    %2904 = vmatprep.subr.mxu0 %v2765
    %2905 = vmatpush1.msra.mxu0 %v2764
    %2906 = vmatprep.mubr.f32.mxu0 %v2699
    %2907 = vmatmul.mubr.f32.gmra.mrb[0].mxu0 %v2698
    %v2908 = vpop.f32.mrb[0].mxu0
    %v2909 = vadd.f32 %v2835, %v2908
    %v2910 = vpop.f32.mrb[0].mxu0
    %v2911 = vadd.f32 %v2839, %v2910
    %2912 = vdwg.mxu0
    %2913 = vmatprep.subr.mxu0 %v2767
    %2914 = vmatpush1.msra.mxu0 %v2766
    %2915 = vmatprep.subr.mxu0 %v2769
    %2916 = vmatpush1.msra.mxu0 %v2768
    %2917 = vmatprep.subr.mxu0 %v2771
    %2918 = vmatpush1.msra.mxu0 %v2770
    %2919 = vmatprep.subr.mxu0 %v2773
    %2920 = vmatpush1.msra.mxu0 %v2772
    %2921 = vmatprep.subr.mxu0 %v2775
    %2922 = vmatpush1.msra.mxu0 %v2774
    %2923 = vmatprep.subr.mxu0 %v2777
    %2924 = vmatpush1.msra.mxu0 %v2776
    %2925 = vmatprep.subr.mxu0 %v2779
    %2926 = vmatpush1.msra.mxu0 %v2778
    %2927 = vmatprep.subr.mxu0 %v2781
    %2928 = vmatpush1.msra.mxu0 %v2780
    %2929 = vmatprep.subr.mxu0 %v2783
    %2930 = vmatpush1.msra.mxu0 %v2782
    %2931 = vmatprep.subr.mxu0 %v2785
    %2932 = vmatpush1.msra.mxu0 %v2784
    %2933 = vmatprep.subr.mxu0 %v2787
    %2934 = vmatpush1.msra.mxu0 %v2786
    %2935 = vmatprep.subr.mxu0 %v2789
    %2936 = vmatpush1.msra.mxu0 %v2788
    %2937 = vmatprep.subr.mxu0 %v2791
    %2938 = vmatpush1.msra.mxu0 %v2790
    %2939 = vmatprep.subr.mxu0 %v2793
    %2940 = vmatpush1.msra.mxu0 %v2792
    %2941 = vmatprep.subr.mxu0 %v2795
    %2942 = vmatpush1.msra.mxu0 %v2794
    %2943 = vmatprep.subr.mxu0 %v2797
    %2944 = vmatpush1.msra.mxu0 %v2796
    %2945 = vmatprep.subr.mxu0 %v2799
    %2946 = vmatpush1.msra.mxu0 %v2798
    %2947 = vmatprep.subr.mxu0 %v2801
    %2948 = vmatpush1.msra.mxu0 %v2800
    %2949 = vmatprep.subr.mxu0 %v2803
    %2950 = vmatpush1.msra.mxu0 %v2802
    %2951 = vmatprep.subr.mxu0 %v2805
    %2952 = vmatpush1.msra.mxu0 %v2804
    %2953 = vmatprep.subr.mxu0 %v2807
    %2954 = vmatpush1.msra.mxu0 %v2806
    %2955 = vmatprep.subr.mxu0 %v2809
    %2956 = vmatpush1.msra.mxu0 %v2808
    %2957 = vmatprep.subr.mxu0 %v2811
    %2958 = vmatpush1.msra.mxu0 %v2810
    %2959 = vmatprep.subr.mxu0 %v2813
    %2960 = vmatpush1.msra.mxu0 %v2812
    %2961 = vmatprep.subr.mxu0 %v2815
    %2962 = vmatpush1.msra.mxu0 %v2814
    %2963 = vmatprep.subr.mxu0 %v2817
    %2964 = vmatpush1.msra.mxu0 %v2816
    %2965 = vmatprep.subr.mxu0 %v2819
    %2966 = vmatpush1.msra.mxu0 %v2818
    %2967 = vmatprep.subr.mxu0 %v2821
    %2968 = vmatpush1.msra.mxu0 %v2820
    %2969 = vmatprep.subr.mxu0 %v2823
    %2970 = vmatpush1.msra.mxu0 %v2822
    %2971 = vmatprep.subr.mxu0 %v2825
    %2972 = vmatpush1.msra.mxu0 %v2824
    %2973 = vmatprep.subr.mxu0 %v2827
    %2974 = vmatpush1.msra.mxu0 %v2826
    %2975 = vmatprep.subr.mxu0 %v2829
    %2976 = vmatpush1.msra.mxu0 %v2828
    %2977 = vmatprep.mubr.f32.mxu0 %v2701
    %2978 = vmatmul.mubr.f32.gmra.mrb[0].mxu0 %v2700
    %v2979 = vpop.f32.mrb[0].mxu0
    %v2980 = vadd.f32 %v2909, %v2979
    %v2981 = vpop.f32.mrb[0].mxu0
    %v2982 = vadd.f32 %v2911, %v2981
    %2983 = vdwg.mxu0
    %v2986 = vcombine.low %v2980, %v2982
    %v2988 = vunpack.c.l.s4 1983009808
    %v2989 = vunpack.c.0.s8 %v2988
    %v2990 = vlaneseq
    %v2991 = vshrl.u32 %v2990, 7
    %v2992 = vsub.s32 %v2989, %v2991
    %v2993 = vrot.slane %v2986, %v2992
    %vm2995 = vcmask 1041408
    %vm2996 = vcmask 257026
    %vm2997 = vmor %vm2996, %vm2995
    %2998 = vst.msk [vmem:[#allocation2] sm:$0xf] %vm2997, %v2993
    // Predicated region
    $region38: #{tpu_custom_call.1} parent=1 // pred_check
      _
    $region39: #{tpu_custom_call.1} parent=1 // pred_check_branch
      %3000 = sbr.rel (0) target = $region41
    $region40: #{tpu_custom_call.1} parent=1 // pred_region
      %s3002 = ssub.s32 64, 64
      %3003 = vsyncadd [#allocation3], %s3002
      %s3005 = sshll.u32 [#allocation2], 4
      %s3006 = int_to_ptr.vmem [resolvable:$true] %s3005
      %3008 = dma.vmem_to_hbm [thread:$0]  %s3006, 64, %s9, [#allocation3]
    $region41: #{tpu_custom_call.1} parent=1 // pred_fallthru
      _
    // Predicated region
    $region42: #{tpu_custom_call.1} parent=1 // pred_check
      _
    $region43: #{tpu_custom_call.1} parent=1 // pred_check_branch
      %3010 = sbr.rel (0) target = $region45
    $region44: #{tpu_custom_call.1} parent=1 // pred_region
      %3011 = dma.done [#allocation3], 64
    $region45: #{tpu_custom_call.1} parent=1 // pred_fallthru
      _
    %3012 = vsyncpa [#allocation3], 1

</llo_original>
